<compile_context>
chip_gen: v6e
topology: v6e:2x2x1
jax: 0.10.0
libtpu: 0.0.40
codegen_flags: <defaults>
</compile_context>

<pallas_src>
import jax
import jax.numpy as jnp
from jax.experimental import pallas as pl
from jax.experimental.pallas import tpu as pltpu

HIDDEN = 32        # hidden_size
VOCAB = 64         # output_size
MAX_LENGTH = 10    # max_length

PAD = 128                      # one lane tile
# --- weight slab lane layout (every logical segment starts at a 128-lane boundary) ---
SEG_EMB = 0 * PAD              # 2 segments: [emb->attn | emb->combine]
SEG_HID = 2 * PAD              # 4 segments: [hid->attn | hid->GRU_r | hid->GRU_z | hid->GRU_n]
SEG_IH = 6 * PAD               # 3 segments: [x->GRU_r | x->GRU_z | x->GRU_n]
SEG_ENC = 9 * PAD              # 1 segment : enc->combine  (W_combine[H:2H])
SEG_OUT = 10 * PAD             # 1 segment : hid->vocab    (W_out)
W_LANES = 11 * PAD
B_LANES = 4 * PAD              # bias slab width (<= 4 segments per bias row)
# --- packed output lane layout ---
OUT_LANES = 3 * PAD
LOGP_OFF = 0 * PAD
HID_OFF = 1 * PAD
ATTN_OFF = 2 * PAD


def attn_decoder_kernel(
    tok_ref,                         # (T,)   int32, SMEM (scalar prefetch)
    h0_ref,                          # (1, H)
    emb_ref,                         # (V, H) embedding table (resident)
    enc_ref,                         # (L, H) encoder outputs (resident)
    w_ref,                           # (H, 11*128) packed weight slab (resident)
    b_ref,                           # (4, 4*128)  packed bias slab (resident)
    out_ref,                         # (T, 3*128)  packed outputs [logp | hidden | attn]
    e_scratch,                       # (T, H) VMEM scratch for the gathered embeddings
):
    f32 = jnp.float32
    H, V, L = HIDDEN, VOCAB, MAX_LENGTH
    T = tok_ref.shape[0]

    # ---------------- hoisted, once per call (outside the recurrence) ----------------
    # Gather all T embedding rows (dropout p=0.1 == identity in eval mode).
    for t in range(T):
        e_scratch[t:t + 1, :] = emb_ref[pl.ds(tok_ref[t], 1), :]
    E = e_scratch[...]                                                          # (T, H)

    # Token-only contributions: one M=T matmul instead of 2T serialized M=1 matvecs.
    #   lanes [0:L)        : embedded @ W_attn[:H]   + b_attn
    #   lanes [128:128+H)  : embedded @ W_combine[:H] + b_combine
    emb_pre = (jnp.dot(E, w_ref[:, SEG_EMB:SEG_EMB + 2 * PAD],
                       preferred_element_type=f32)
               + b_ref[0:1, 0:2 * PAD])                                         # (T, 256)

    # Pre-associate the attn_applied branch:  (attn_w @ enc) @ Wc_h == attn_w @ (enc @ Wc_h).
    enc_comb = jnp.dot(enc_ref[...], w_ref[:, SEG_ENC:SEG_ENC + H],
                       preferred_element_type=f32)                              # (L, H)

    b_hid = b_ref[1:2, 0:4 * PAD]    # [0 | b_hh_r | b_hh_z | b_hh_n]
    b_ih = b_ref[2:3, 0:3 * PAD]     # [b_ih_r | b_ih_z | b_ih_n]
    b_out = b_ref[3:4, 0:V]

    # ---------------- fully-unrolled recurrence: hidden carried in registers ----------------
    hid = h0_ref[...]                                                           # (1, H)
    for t in range(T):
        pre = emb_pre[t:t + 1, :]                                               # (1, 256)

        # Fused hid-side dot: [hid->attn | gh_r | gh_z | gh_n], each 128-lane aligned.
        hh = (jnp.dot(hid, w_ref[:, SEG_HID:SEG_HID + 4 * PAD],
                      preferred_element_type=f32) + b_hid)                      # (1, 512)

        # Attention softmax (exact division — feeds the recurrence).
        a_logits = pre[:, 0:L] + hh[:, 0:L]                                     # (1, L)
        m = jnp.max(a_logits, axis=-1, keepdims=True)
        ex = jnp.exp(a_logits - m)
        attn_w = ex / jnp.sum(ex, axis=-1, keepdims=True)                       # (1, L)

        # attn_combine + relu (attn_applied branch pre-folded into enc_comb).
        x = jnp.maximum(
            pre[:, PAD:PAD + H]
            + jnp.dot(attn_w, enc_comb, preferred_element_type=f32), 0.0)       # (1, H)

        # GRU cell (PyTorch gate order r, z, n); all gate slices 128-lane aligned.
        gi = (jnp.dot(x, w_ref[:, SEG_IH:SEG_IH + 3 * PAD],
                      preferred_element_type=f32) + b_ih)                       # (1, 384)
        r = jax.nn.sigmoid(gi[:, 0:H] + hh[:, PAD:PAD + H])
        z = jax.nn.sigmoid(gi[:, PAD:PAD + H] + hh[:, 2 * PAD:2 * PAD + H])
        n = jnp.tanh(gi[:, 2 * PAD:2 * PAD + H] + r * hh[:, 3 * PAD:3 * PAD + H])
        h_new = (1.0 - z) * n + z * hid                                         # (1, H)

        # Output projection + log_softmax (off the recurrent critical path).
        logits = (jnp.dot(h_new, w_ref[:, SEG_OUT:SEG_OUT + V],
                          preferred_element_type=f32) + b_out)                  # (1, V)
        m2 = jnp.max(logits, axis=-1, keepdims=True)
        lse = jnp.log(jnp.sum(jnp.exp(logits - m2), axis=-1, keepdims=True)) + m2

        # One packed output row per step; every store starts at a 128-lane boundary.
        out_ref[t:t + 1, LOGP_OFF:LOGP_OFF + V] = logits - lse
        out_ref[t:t + 1, HID_OFF:HID_OFF + H] = h_new
        out_ref[t:t + 1, ATTN_OFF:ATTN_OFF + L] = attn_w

        hid = h_new


def _fused_decode_call(tokens, h0, encoder_outputs, packed):
    """All T decoder steps in ONE pallas_call with a single grid point."""
    T = tokens.shape[0]
    H, V, L = HIDDEN, VOCAB, MAX_LENGTH
    const = lambda i, tok: (0, 0)    # every block resident in VMEM: DMA'd exactly once

    grid_spec = pltpu.PrefetchScalarGridSpec(
        num_scalar_prefetch=1,
        grid=(1,),
        in_specs=[
            pl.BlockSpec((1, H), const),             # h0
            pl.BlockSpec((V, H), const),             # embedding table
            pl.BlockSpec((L, H), const),             # encoder outputs
            pl.BlockSpec((H, W_LANES), const),       # packed weight slab
            pl.BlockSpec((4, B_LANES), const),       # packed bias slab
        ],
        out_specs=pl.BlockSpec((T, OUT_LANES), const),
        scratch_shapes=[pltpu.VMEM((T, H), jnp.float32)],
    )

    return pl.pallas_call(
        attn_decoder_kernel,
        grid_spec=grid_spec,
        out_shape=jax.ShapeDtypeStruct((T, OUT_LANES), jnp.float32),
        compiler_params=pltpu.CompilerParams(
            dimension_semantics=("arbitrary",)),
    )(tokens, h0, packed["embedding"], encoder_outputs,
      packed["w_slab"], packed["b_slab"])


def _split_outputs(out):
    logp = out[:, LOGP_OFF:LOGP_OFF + VOCAB]
    hid = out[:, HID_OFF:HID_OFF + HIDDEN]
    attn = out[:, ATTN_OFF:ATTN_OFF + MAX_LENGTH]
    return logp, hid, attn


@jax.jit
def attn_decoder_decode(tokens, hidden, encoder_outputs, packed):
    """Teacher-forced T-step decode in one kernel launch.
    tokens: (T,) int ; hidden: (1,1,H) ; encoder_outputs: (L,H)."""
    tokens = jnp.clip(tokens.astype(jnp.int32), 0, VOCAB - 1)   # guard VMEM gather
    out = _fused_decode_call(tokens, hidden[0], encoder_outputs, packed)
    return _split_outputs(out)


@jax.jit
def attn_decoder_forward(token, hidden, encoder_outputs, packed):
    """Single-step forward matching the PyTorch module signature (T=1)."""
    tokens = jnp.clip(token.reshape((1,)).astype(jnp.int32), 0, VOCAB - 1)
    out = _fused_decode_call(tokens, hidden[0], encoder_outputs, packed)
    logp, hid, attn = _split_outputs(out)
    return logp, hid[:, None, :], attn          # (1,V), (1,1,H), (1,L)


def make_params(key, hidden=HIDDEN, vocab=VOCAB, max_length=MAX_LENGTH):
    """Deterministic synthetic parameters (nn.Linear weights stored pre-transposed)."""
    ks = jax.random.split(key, 11)
    s = 0.1
    p = {}
    p["embedding"] = jax.random.normal(ks[0], (vocab, hidden), jnp.float32) * s
    p["attn_w"] = jax.random.normal(ks[1], (2 * hidden, max_length), jnp.float32) * s
    p["attn_b"] = jax.random.normal(ks[2], (1, max_length), jnp.float32) * s
    p["comb_w"] = jax.random.normal(ks[3], (2 * hidden, hidden), jnp.float32) * s
    p["comb_b"] = jax.random.normal(ks[4], (1, hidden), jnp.float32) * s
    p["w_ih"] = jax.random.normal(ks[5], (hidden, 3 * hidden), jnp.float32) * s
    p["b_ih"] = jax.random.normal(ks[6], (1, 3 * hidden), jnp.float32) * s
    p["w_hh"] = jax.random.normal(ks[7], (hidden, 3 * hidden), jnp.float32) * s
    p["b_hh"] = jax.random.normal(ks[8], (1, 3 * hidden), jnp.float32) * s
    p["out_w"] = jax.random.normal(ks[9], (hidden, vocab), jnp.float32) * s
    p["out_b"] = jax.random.normal(ks[10], (1, vocab), jnp.float32) * s
    return p


def pack_params(p):
    """One-time packing OUTSIDE the hot path: all weights into one (H, 11*128) lane-aligned
    slab (fused shared-LHS segments), all biases into one (4, 4*128) slab."""
    H = HIDDEN
    assert MAX_LENGTH <= PAD and HIDDEN <= PAD and VOCAB <= PAD

    def seg(w):  # pad an (H, n<=128) block out to a full 128-lane segment
        return jnp.pad(w, ((0, 0), (0, PAD - w.shape[1])))

    w_slab = jnp.concatenate([
        seg(p["attn_w"][:H]),            # SEG_EMB + 0  : emb -> attn
        seg(p["comb_w"][:H]),            # SEG_EMB + 128: emb -> combine
        seg(p["attn_w"][H:]),            # SEG_HID + 0  : hid -> attn
        seg(p["w_hh"][:, 0:H]),          # SEG_HID + 128: hid -> GRU r
        seg(p["w_hh"][:, H:2 * H]),      # SEG_HID + 256: hid -> GRU z
        seg(p["w_hh"][:, 2 * H:3 * H]),  # SEG_HID + 384: hid -> GRU n
        seg(p["w_ih"][:, 0:H]),          # SEG_IH  + 0  : x   -> GRU r
        seg(p["w_ih"][:, H:2 * H]),      # SEG_IH  + 128: x   -> GRU z
        seg(p["w_ih"][:, 2 * H:3 * H]),  # SEG_IH  + 256: x   -> GRU n
        seg(p["comb_w"][H:]),            # SEG_ENC      : enc -> combine
        seg(p["out_w"]),                 # SEG_OUT      : hid -> vocab
    ], axis=1).astype(jnp.float32)                                   # (H, 11*128)

    def brow(parts):
        row = jnp.zeros((1, B_LANES), jnp.float32)
        for off, v in parts:
            row = row.at[:, off:off + v.shape[1]].set(v)
        return row

    b_slab = jnp.concatenate([
        brow([(0, p["attn_b"]), (PAD, p["comb_b"])]),
        brow([(PAD, p["b_hh"][:, 0:H]), (2 * PAD, p["b_hh"][:, H:2 * H]),
              (3 * PAD, p["b_hh"][:, 2 * H:3 * H])]),
        brow([(0, p["b_ih"][:, 0:H]), (PAD, p["b_ih"][:, H:2 * H]),
              (2 * PAD, p["b_ih"][:, 2 * H:3 * H])]),
        brow([(0, p["out_b"])]),
    ], axis=0)                                                        # (4, 4*128)

    return {"embedding": p["embedding"].astype(jnp.float32),
            "w_slab": w_slab, "b_slab": b_slab}


# ----------------------------- pure-JAX reference --------------------------------
def reference_step(token, hidden, encoder_outputs, params):
    H = HIDDEN
    embedded = params["embedding"][token][None, :]
    hid = hidden[0]
    cat1 = jnp.concatenate([embedded, hid], axis=1)
    attn_w = jax.nn.softmax(cat1 @ params["attn_w"] + params["attn_b"], axis=1)
    attn_applied = attn_w @ encoder_outputs
    cat2 = jnp.concatenate([embedded, attn_applied], axis=1)
    x = jax.nn.relu(cat2 @ params["comb_w"] + params["comb_b"])
    gi = x @ params["w_ih"] + params["b_ih"]
    gh = hid @ params["w_hh"] + params["b_hh"]
    r = jax.nn.sigmoid(gi[:, :H] + gh[:, :H])
    z = jax.nn.sigmoid(gi[:, H:2 * H] + gh[:, H:2 * H])
    n = jnp.tanh(gi[:, 2 * H:] + r * gh[:, 2 * H:])
    h_new = (1 - z) * n + z * hid
    logp = jax.nn.log_softmax(h_new @ params["out_w"] + params["out_b"], axis=1)
    return logp, h_new[None, :, :], attn_w


def reference_decode(tokens, hidden, encoder_outputs, params):
    logps, hids, attns = [], [], []
    hid = hidden
    for t in range(tokens.shape[0]):
        logp, hid, attn = reference_step(int(tokens[t]), hid, encoder_outputs, params)
        logps.append(logp)
        hids.append(hid[0])
        attns.append(attn)
    return (jnp.concatenate(logps, 0), jnp.concatenate(hids, 0),
            jnp.concatenate(attns, 0))


if __name__ == "__main__":
    key = jax.random.PRNGKey(0)
    kp, kh, ke, kt = jax.random.split(key, 4)

    params = make_params(kp)
    packed = pack_params(params)       # one-time packing, not in the per-step hot path

    T = 8
    tokens = jax.random.randint(kt, (T,), 0, VOCAB, dtype=jnp.int32)
    hidden0 = jax.random.normal(kh, (1, 1, HIDDEN), jnp.float32)                 # (1,1,H)
    encoder_outputs = jax.random.normal(ke, (MAX_LENGTH, HIDDEN), jnp.float32)   # (L,H)

    # fused multi-step decode (one pallas_call, one grid point, T steps unrolled in-kernel)
    logp_all, hid_all, attn_all = attn_decoder_decode(tokens, hidden0, encoder_outputs, packed)
    jax.block_until_ready((logp_all, hid_all, attn_all))

    # single-step call matching the PyTorch module signature
    token = jnp.array([[int(tokens[0])]], dtype=jnp.int32)                       # (1,1)
    logp1, hid1, attn1 = attn_decoder_forward(token, hidden0, encoder_outputs, packed)
    jax.block_until_ready((logp1, hid1, attn1))

    # correctness vs pure-JAX reference
    r_logp, r_hid, r_attn = reference_decode(tokens, hidden0, encoder_outputs, params)
    assert logp_all.shape == (T, VOCAB) and hid_all.shape == (T, HIDDEN)
    assert attn_all.shape == (T, MAX_LENGTH)
    assert jnp.allclose(logp_all, r_logp, atol=5e-3)
    assert jnp.allclose(hid_all, r_hid, atol=5e-3)
    assert jnp.allclose(attn_all, r_attn, atol=5e-3)

    assert logp1.shape == (1, VOCAB) and hid1.shape == (1, 1, HIDDEN)
    assert attn1.shape == (1, MAX_LENGTH)
    assert jnp.allclose(logp1, r_logp[0:1], atol=5e-3)
    assert jnp.allclose(hid1[0], r_hid[0:1], atol=5e-3)
    assert jnp.allclose(attn1, r_attn[0:1], atol=5e-3)

    print("KERNEL_OK")
</pallas_src>

<mosaic_0001>
module attributes {stable_mosaic.version = 11 : i64} {
  func.func @attn_decoder_kernel(%arg0: i32, %arg1: memref<8xi32, #tpu.memory_space<smem>>, %arg2: memref<1x32xf32, #tpu.memory_space<vmem>>, %arg3: memref<64x32xf32, #tpu.memory_space<vmem>>, %arg4: memref<10x32xf32, #tpu.memory_space<vmem>>, %arg5: memref<32x1408xf32, #tpu.memory_space<vmem>>, %arg6: memref<4x512xf32, #tpu.memory_space<vmem>>, %arg7: memref<8x384xf32, #tpu.memory_space<vmem>>, %arg8: memref<8x32xf32, #tpu.memory_space<vmem>>) attributes {dimension_semantics = [#tpu.dimension_semantics<arbitrary>], iteration_bounds = array<i64: 1>, scalar_prefetch = 1 : i64, scratch_operands = 1 : i64, tpu.core_type = #tpu.core_type<tc>, window_params = [{pipeline_mode = #tpu.pipeline_mode<synchronous>, transform_indices = @transform_0, window_bounds = array<i64: 1, 32>}, {pipeline_mode = #tpu.pipeline_mode<synchronous>, transform_indices = @transform_1, window_bounds = array<i64: 64, 32>}, {pipeline_mode = #tpu.pipeline_mode<synchronous>, transform_indices = @transform_2, window_bounds = array<i64: 10, 32>}, {pipeline_mode = #tpu.pipeline_mode<synchronous>, transform_indices = @transform_3, window_bounds = array<i64: 32, 1408>}, {pipeline_mode = #tpu.pipeline_mode<synchronous>, transform_indices = @transform_4, window_bounds = array<i64: 4, 512>}, {pipeline_mode = #tpu.pipeline_mode<synchronous>, transform_indices = @transform_5, window_bounds = array<i64: 8, 384>}]} {
    %c0 = arith.constant 0 : index
    %0 = memref.load %arg1[%c0] : memref<8xi32, #tpu.memory_space<smem>>
    %1 = arith.index_cast %0 : i32 to index
    %c0_0 = arith.constant 0 : index
    %2 = vector.load %arg3[%1, %c0_0] : memref<64x32xf32, #tpu.memory_space<vmem>>, vector<1x32xf32>
    %c0_1 = arith.constant 0 : index
    %c0_2 = arith.constant 0 : index
    %3 = vector.load %arg8[%c0_1, %c0_2] : memref<8x32xf32, #tpu.memory_space<vmem>>, vector<1x32xf32>
    tpu.vector_store %arg8[%c0_1, %c0_2], %2 {strides = array<i32>} : memref<8x32xf32, #tpu.memory_space<vmem>>, vector<1x32xf32>,
    %c1 = arith.constant 1 : index
    %4 = memref.load %arg1[%c1] : memref<8xi32, #tpu.memory_space<smem>>
    %5 = arith.index_cast %4 : i32 to index
    %c0_3 = arith.constant 0 : index
    %6 = vector.load %arg3[%5, %c0_3] : memref<64x32xf32, #tpu.memory_space<vmem>>, vector<1x32xf32>
    %c1_4 = arith.constant 1 : index
    %c0_5 = arith.constant 0 : index
    %7 = vector.load %arg8[%c1_4, %c0_5] : memref<8x32xf32, #tpu.memory_space<vmem>>, vector<1x32xf32>
    tpu.vector_store %arg8[%c1_4, %c0_5], %6 {strides = array<i32>} : memref<8x32xf32, #tpu.memory_space<vmem>>, vector<1x32xf32>,
    %c2 = arith.constant 2 : index
    %8 = memref.load %arg1[%c2] : memref<8xi32, #tpu.memory_space<smem>>
    %9 = arith.index_cast %8 : i32 to index
    %c0_6 = arith.constant 0 : index
    %10 = vector.load %arg3[%9, %c0_6] : memref<64x32xf32, #tpu.memory_space<vmem>>, vector<1x32xf32>
    %c2_7 = arith.constant 2 : index
    %c0_8 = arith.constant 0 : index
    %11 = vector.load %arg8[%c2_7, %c0_8] : memref<8x32xf32, #tpu.memory_space<vmem>>, vector<1x32xf32>
    tpu.vector_store %arg8[%c2_7, %c0_8], %10 {strides = array<i32>} : memref<8x32xf32, #tpu.memory_space<vmem>>, vector<1x32xf32>,
    %c3 = arith.constant 3 : index
    %12 = memref.load %arg1[%c3] : memref<8xi32, #tpu.memory_space<smem>>
    %13 = arith.index_cast %12 : i32 to index
    %c0_9 = arith.constant 0 : index
    %14 = vector.load %arg3[%13, %c0_9] : memref<64x32xf32, #tpu.memory_space<vmem>>, vector<1x32xf32>
    %c3_10 = arith.constant 3 : index
    %c0_11 = arith.constant 0 : index
    %15 = vector.load %arg8[%c3_10, %c0_11] : memref<8x32xf32, #tpu.memory_space<vmem>>, vector<1x32xf32>
    tpu.vector_store %arg8[%c3_10, %c0_11], %14 {strides = array<i32>} : memref<8x32xf32, #tpu.memory_space<vmem>>, vector<1x32xf32>,
    %c4 = arith.constant 4 : index
    %16 = memref.load %arg1[%c4] : memref<8xi32, #tpu.memory_space<smem>>
    %17 = arith.index_cast %16 : i32 to index
    %c0_12 = arith.constant 0 : index
    %18 = vector.load %arg3[%17, %c0_12] : memref<64x32xf32, #tpu.memory_space<vmem>>, vector<1x32xf32>
    %c4_13 = arith.constant 4 : index
    %c0_14 = arith.constant 0 : index
    %19 = vector.load %arg8[%c4_13, %c0_14] : memref<8x32xf32, #tpu.memory_space<vmem>>, vector<1x32xf32>
    tpu.vector_store %arg8[%c4_13, %c0_14], %18 {strides = array<i32>} : memref<8x32xf32, #tpu.memory_space<vmem>>, vector<1x32xf32>,
    %c5 = arith.constant 5 : index
    %20 = memref.load %arg1[%c5] : memref<8xi32, #tpu.memory_space<smem>>
    %21 = arith.index_cast %20 : i32 to index
    %c0_15 = arith.constant 0 : index
    %22 = vector.load %arg3[%21, %c0_15] : memref<64x32xf32, #tpu.memory_space<vmem>>, vector<1x32xf32>
    %c5_16 = arith.constant 5 : index
    %c0_17 = arith.constant 0 : index
    %23 = vector.load %arg8[%c5_16, %c0_17] : memref<8x32xf32, #tpu.memory_space<vmem>>, vector<1x32xf32>
    tpu.vector_store %arg8[%c5_16, %c0_17], %22 {strides = array<i32>} : memref<8x32xf32, #tpu.memory_space<vmem>>, vector<1x32xf32>,
    %c6 = arith.constant 6 : index
    %24 = memref.load %arg1[%c6] : memref<8xi32, #tpu.memory_space<smem>>
    %25 = arith.index_cast %24 : i32 to index
    %c0_18 = arith.constant 0 : index
    %26 = vector.load %arg3[%25, %c0_18] : memref<64x32xf32, #tpu.memory_space<vmem>>, vector<1x32xf32>
    %c6_19 = arith.constant 6 : index
    %c0_20 = arith.constant 0 : index
    %27 = vector.load %arg8[%c6_19, %c0_20] : memref<8x32xf32, #tpu.memory_space<vmem>>, vector<1x32xf32>
    tpu.vector_store %arg8[%c6_19, %c0_20], %26 {strides = array<i32>} : memref<8x32xf32, #tpu.memory_space<vmem>>, vector<1x32xf32>,
    %c7 = arith.constant 7 : index
    %28 = memref.load %arg1[%c7] : memref<8xi32, #tpu.memory_space<smem>>
    %29 = arith.index_cast %28 : i32 to index
    %c0_21 = arith.constant 0 : index
    %30 = vector.load %arg3[%29, %c0_21] : memref<64x32xf32, #tpu.memory_space<vmem>>, vector<1x32xf32>
    %c7_22 = arith.constant 7 : index
    %c0_23 = arith.constant 0 : index
    %31 = vector.load %arg8[%c7_22, %c0_23] : memref<8x32xf32, #tpu.memory_space<vmem>>, vector<1x32xf32>
    tpu.vector_store %arg8[%c7_22, %c0_23], %30 {strides = array<i32>} : memref<8x32xf32, #tpu.memory_space<vmem>>, vector<1x32xf32>,
    %c0_24 = arith.constant 0 : index
    %c0_25 = arith.constant 0 : index
    %32 = vector.load %arg8[%c0_24, %c0_25] : memref<8x32xf32, #tpu.memory_space<vmem>>, vector<8x32xf32>
    %c0_26 = arith.constant 0 : index
    %c0_27 = arith.constant 0 : index
    %33 = vector.load %arg5[%c0_26, %c0_27] : memref<32x1408xf32, #tpu.memory_space<vmem>>, vector<32x256xf32>
    %cst = arith.constant dense<0.000000e+00> : vector<8x256xf32>
    %34 = tpu.matmul %32, %33, %cst {dimension_numbers = #tpu.dot_dimension_numbers<[1], [0], [0], [1], [0, 0, 1, 1], [], []>} : vector<8x32xf32>, vector<32x256xf32>, vector<8x256xf32> -> vector<8x256xf32>
    %c0_28 = arith.constant 0 : index
    %c0_29 = arith.constant 0 : index
    %35 = vector.load %arg6[%c0_28, %c0_29] : memref<4x512xf32, #tpu.memory_space<vmem>>, vector<1x256xf32>
    %36 = vector.broadcast %35 : vector<1x256xf32> to vector<8x256xf32>
    %37 = arith.addf %34, %36 : vector<8x256xf32>
    %c0_30 = arith.constant 0 : index
    %c0_31 = arith.constant 0 : index
    %38 = vector.load %arg4[%c0_30, %c0_31] : memref<10x32xf32, #tpu.memory_space<vmem>>, vector<10x32xf32>
    %c0_32 = arith.constant 0 : index
    %c1152 = arith.constant 1152 : index
    %39 = vector.load %arg5[%c0_32, %c1152] : memref<32x1408xf32, #tpu.memory_space<vmem>>, vector<32x32xf32>
    %cst_33 = arith.constant dense<0.000000e+00> : vector<10x32xf32>
    %40 = tpu.matmul %38, %39, %cst_33 {dimension_numbers = #tpu.dot_dimension_numbers<[1], [0], [0], [1], [0, 0, 1, 1], [], []>} : vector<10x32xf32>, vector<32x32xf32>, vector<10x32xf32> -> vector<10x32xf32>
    %c1_34 = arith.constant 1 : index
    %c0_35 = arith.constant 0 : index
    %41 = vector.load %arg6[%c1_34, %c0_35] : memref<4x512xf32, #tpu.memory_space<vmem>>, vector<1x512xf32>
    %c2_36 = arith.constant 2 : index
    %c0_37 = arith.constant 0 : index
    %42 = vector.load %arg6[%c2_36, %c0_37] : memref<4x512xf32, #tpu.memory_space<vmem>>, vector<1x384xf32>
    %c3_38 = arith.constant 3 : index
    %c0_39 = arith.constant 0 : index
    %43 = vector.load %arg6[%c3_38, %c0_39] : memref<4x512xf32, #tpu.memory_space<vmem>>, vector<1x64xf32>
    %c0_40 = arith.constant 0 : index
    %c0_41 = arith.constant 0 : index
    %44 = vector.load %arg2[%c0_40, %c0_41] : memref<1x32xf32, #tpu.memory_space<vmem>>, vector<1x32xf32>
    %45 = vector.extract_strided_slice %37 {offsets = [0, 0], sizes = [1, 256], strides = [1, 1]} : vector<8x256xf32> to vector<1x256xf32>
    %c0_42 = arith.constant 0 : index
    %c256 = arith.constant 256 : index
    %46 = vector.load %arg5[%c0_42, %c256] : memref<32x1408xf32, #tpu.memory_space<vmem>>, vector<32x512xf32>
    %cst_43 = arith.constant dense<0.000000e+00> : vector<1x512xf32>
    %47 = tpu.matmul %44, %46, %cst_43 {dimension_numbers = #tpu.dot_dimension_numbers<[1], [0], [0], [1], [0, 0, 1, 1], [], []>} : vector<1x32xf32>, vector<32x512xf32>, vector<1x512xf32> -> vector<1x512xf32>
    %48 = arith.addf %47, %41 : vector<1x512xf32>
    %49 = vector.extract_strided_slice %45 {offsets = [0, 0], sizes = [1, 10], strides = [1, 1]} : vector<1x256xf32> to vector<1x10xf32>
    %50 = vector.extract_strided_slice %48 {offsets = [0, 0], sizes = [1, 10], strides = [1, 1]} : vector<1x512xf32> to vector<1x10xf32>
    %51 = arith.addf %49, %50 : vector<1x10xf32>
    %cst_44 = arith.constant dense<0xFF800000> : vector<1xf32>
    %52 = vector.multi_reduction <maximumf>, %51, %cst_44 [1] : vector<1x10xf32> to vector<1xf32>
    %53 = vector.shape_cast %52 : vector<1xf32> to vector<1x1xf32>
    %54 = vector.broadcast %53 : vector<1x1xf32> to vector<1x10xf32>
    %55 = arith.subf %51, %54 : vector<1x10xf32>
    %56 = math.exp %55 : vector<1x10xf32>
    %cst_45 = arith.constant dense<0.000000e+00> : vector<1xf32>
    %57 = vector.multi_reduction <add>, %56, %cst_45 [1] : vector<1x10xf32> to vector<1xf32>
    %58 = vector.shape_cast %57 : vector<1xf32> to vector<1x1xf32>
    %59 = vector.broadcast %58 : vector<1x1xf32> to vector<1x10xf32>
    %60 = arith.divf %56, %59 : vector<1x10xf32>
    %61 = vector.extract_strided_slice %45 {offsets = [0, 128], sizes = [1, 32], strides = [1, 1]} : vector<1x256xf32> to vector<1x32xf32>
    %cst_46 = arith.constant dense<0.000000e+00> : vector<1x32xf32>
    %62 = tpu.matmul %60, %40, %cst_46 {dimension_numbers = #tpu.dot_dimension_numbers<[1], [0], [0], [1], [0, 0, 1, 1], [], []>} : vector<1x10xf32>, vector<10x32xf32>, vector<1x32xf32> -> vector<1x32xf32>
    %63 = arith.addf %61, %62 : vector<1x32xf32>
    %cst_47 = arith.constant 0.000000e+00 : f32
    %64 = vector.broadcast %cst_47 : f32 to vector<1x32xf32>
    %65 = arith.maximumf %63, %64 : vector<1x32xf32>
    %c0_48 = arith.constant 0 : index
    %c768 = arith.constant 768 : index
    %66 = vector.load %arg5[%c0_48, %c768] : memref<32x1408xf32, #tpu.memory_space<vmem>>, vector<32x384xf32>
    %cst_49 = arith.constant dense<0.000000e+00> : vector<1x384xf32>
    %67 = tpu.matmul %65, %66, %cst_49 {dimension_numbers = #tpu.dot_dimension_numbers<[1], [0], [0], [1], [0, 0, 1, 1], [], []>} : vector<1x32xf32>, vector<32x384xf32>, vector<1x384xf32> -> vector<1x384xf32>
    %68 = arith.addf %67, %42 : vector<1x384xf32>
    %69 = vector.extract_strided_slice %68 {offsets = [0, 0], sizes = [1, 32], strides = [1, 1]} : vector<1x384xf32> to vector<1x32xf32>
    %70 = vector.extract_strided_slice %48 {offsets = [0, 128], sizes = [1, 32], strides = [1, 1]} : vector<1x512xf32> to vector<1x32xf32>
    %71 = arith.addf %69, %70 : vector<1x32xf32>
    %72 = arith.negf %71 : vector<1x32xf32>
    %73 = math.exp %72 : vector<1x32xf32>
    %cst_50 = arith.constant 1.000000e+00 : f32
    %74 = vector.broadcast %cst_50 : f32 to vector<1x32xf32>
    %75 = arith.addf %74, %73 : vector<1x32xf32>
    %76 = arith.divf %74, %75 : vector<1x32xf32>
    %77 = vector.extract_strided_slice %68 {offsets = [0, 128], sizes = [1, 32], strides = [1, 1]} : vector<1x384xf32> to vector<1x32xf32>
    %78 = vector.extract_strided_slice %48 {offsets = [0, 256], sizes = [1, 32], strides = [1, 1]} : vector<1x512xf32> to vector<1x32xf32>
    %79 = arith.addf %77, %78 : vector<1x32xf32>
    %80 = arith.negf %79 : vector<1x32xf32>
    %81 = math.exp %80 : vector<1x32xf32>
    %cst_51 = arith.constant 1.000000e+00 : f32
    %82 = vector.broadcast %cst_51 : f32 to vector<1x32xf32>
    %83 = arith.addf %82, %81 : vector<1x32xf32>
    %84 = arith.divf %82, %83 : vector<1x32xf32>
    %85 = vector.extract_strided_slice %68 {offsets = [0, 256], sizes = [1, 32], strides = [1, 1]} : vector<1x384xf32> to vector<1x32xf32>
    %86 = vector.extract_strided_slice %48 {offsets = [0, 384], sizes = [1, 32], strides = [1, 1]} : vector<1x512xf32> to vector<1x32xf32>
    %87 = arith.mulf %76, %86 : vector<1x32xf32>
    %88 = arith.addf %85, %87 : vector<1x32xf32>
    %89 = math.tanh %88 : vector<1x32xf32>
    %cst_52 = arith.constant 1.000000e+00 : f32
    %90 = vector.broadcast %cst_52 : f32 to vector<1x32xf32>
    %91 = arith.subf %90, %84 : vector<1x32xf32>
    %92 = arith.mulf %91, %89 : vector<1x32xf32>
    %93 = arith.mulf %84, %44 : vector<1x32xf32>
    %94 = arith.addf %92, %93 : vector<1x32xf32>
    %c0_53 = arith.constant 0 : index
    %c1280 = arith.constant 1280 : index
    %95 = vector.load %arg5[%c0_53, %c1280] : memref<32x1408xf32, #tpu.memory_space<vmem>>, vector<32x64xf32>
    %cst_54 = arith.constant dense<0.000000e+00> : vector<1x64xf32>
    %96 = tpu.matmul %94, %95, %cst_54 {dimension_numbers = #tpu.dot_dimension_numbers<[1], [0], [0], [1], [0, 0, 1, 1], [], []>} : vector<1x32xf32>, vector<32x64xf32>, vector<1x64xf32> -> vector<1x64xf32>
    %97 = arith.addf %96, %43 : vector<1x64xf32>
    %cst_55 = arith.constant dense<0xFF800000> : vector<1xf32>
    %98 = vector.multi_reduction <maximumf>, %97, %cst_55 [1] : vector<1x64xf32> to vector<1xf32>
    %99 = vector.shape_cast %98 : vector<1xf32> to vector<1x1xf32>
    %100 = vector.broadcast %99 : vector<1x1xf32> to vector<1x64xf32>
    %101 = arith.subf %97, %100 : vector<1x64xf32>
    %102 = math.exp %101 : vector<1x64xf32>
    %cst_56 = arith.constant dense<0.000000e+00> : vector<1xf32>
    %103 = vector.multi_reduction <add>, %102, %cst_56 [1] : vector<1x64xf32> to vector<1xf32>
    %104 = vector.shape_cast %103 : vector<1xf32> to vector<1x1xf32>
    %105 = math.log %104 : vector<1x1xf32>
    %106 = arith.addf %105, %99 : vector<1x1xf32>
    %107 = vector.broadcast %106 : vector<1x1xf32> to vector<1x64xf32>
    %108 = arith.subf %97, %107 : vector<1x64xf32>
    %c0_57 = arith.constant 0 : index
    %c0_58 = arith.constant 0 : index
    %109 = vector.load %arg7[%c0_57, %c0_58] : memref<8x384xf32, #tpu.memory_space<vmem>>, vector<1x64xf32>
    tpu.vector_store %arg7[%c0_57, %c0_58], %108 {strides = array<i32>} : memref<8x384xf32, #tpu.memory_space<vmem>>, vector<1x64xf32>,
    %c0_59 = arith.constant 0 : index
    %c128 = arith.constant 128 : index
    %110 = vector.load %arg7[%c0_59, %c128] : memref<8x384xf32, #tpu.memory_space<vmem>>, vector<1x32xf32>
    tpu.vector_store %arg7[%c0_59, %c128], %94 {strides = array<i32>} : memref<8x384xf32, #tpu.memory_space<vmem>>, vector<1x32xf32>,
    %c0_60 = arith.constant 0 : index
    %c256_61 = arith.constant 256 : index
    %111 = vector.load %arg7[%c0_60, %c256_61] : memref<8x384xf32, #tpu.memory_space<vmem>>, vector<1x10xf32>
    tpu.vector_store %arg7[%c0_60, %c256_61], %60 {strides = array<i32>} : memref<8x384xf32, #tpu.memory_space<vmem>>, vector<1x10xf32>,
    %112 = vector.extract_strided_slice %37 {offsets = [1, 0], sizes = [1, 256], strides = [1, 1]} : vector<8x256xf32> to vector<1x256xf32>
    %c0_62 = arith.constant 0 : index
    %c256_63 = arith.constant 256 : index
    %113 = vector.load %arg5[%c0_62, %c256_63] : memref<32x1408xf32, #tpu.memory_space<vmem>>, vector<32x512xf32>
    %cst_64 = arith.constant dense<0.000000e+00> : vector<1x512xf32>
    %114 = tpu.matmul %94, %113, %cst_64 {dimension_numbers = #tpu.dot_dimension_numbers<[1], [0], [0], [1], [0, 0, 1, 1], [], []>} : vector<1x32xf32>, vector<32x512xf32>, vector<1x512xf32> -> vector<1x512xf32>
    %115 = arith.addf %114, %41 : vector<1x512xf32>
    %116 = vector.extract_strided_slice %112 {offsets = [0, 0], sizes = [1, 10], strides = [1, 1]} : vector<1x256xf32> to vector<1x10xf32>
    %117 = vector.extract_strided_slice %115 {offsets = [0, 0], sizes = [1, 10], strides = [1, 1]} : vector<1x512xf32> to vector<1x10xf32>
    %118 = arith.addf %116, %117 : vector<1x10xf32>
    %cst_65 = arith.constant dense<0xFF800000> : vector<1xf32>
    %119 = vector.multi_reduction <maximumf>, %118, %cst_65 [1] : vector<1x10xf32> to vector<1xf32>
    %120 = vector.shape_cast %119 : vector<1xf32> to vector<1x1xf32>
    %121 = vector.broadcast %120 : vector<1x1xf32> to vector<1x10xf32>
    %122 = arith.subf %118, %121 : vector<1x10xf32>
    %123 = math.exp %122 : vector<1x10xf32>
    %cst_66 = arith.constant dense<0.000000e+00> : vector<1xf32>
    %124 = vector.multi_reduction <add>, %123, %cst_66 [1] : vector<1x10xf32> to vector<1xf32>
    %125 = vector.shape_cast %124 : vector<1xf32> to vector<1x1xf32>
    %126 = vector.broadcast %125 : vector<1x1xf32> to vector<1x10xf32>
    %127 = arith.divf %123, %126 : vector<1x10xf32>
    %128 = vector.extract_strided_slice %112 {offsets = [0, 128], sizes = [1, 32], strides = [1, 1]} : vector<1x256xf32> to vector<1x32xf32>
    %cst_67 = arith.constant dense<0.000000e+00> : vector<1x32xf32>
    %129 = tpu.matmul %127, %40, %cst_67 {dimension_numbers = #tpu.dot_dimension_numbers<[1], [0], [0], [1], [0, 0, 1, 1], [], []>} : vector<1x10xf32>, vector<10x32xf32>, vector<1x32xf32> -> vector<1x32xf32>
    %130 = arith.addf %128, %129 : vector<1x32xf32>
    %cst_68 = arith.constant 0.000000e+00 : f32
    %131 = vector.broadcast %cst_68 : f32 to vector<1x32xf32>
    %132 = arith.maximumf %130, %131 : vector<1x32xf32>
    %c0_69 = arith.constant 0 : index
    %c768_70 = arith.constant 768 : index
    %133 = vector.load %arg5[%c0_69, %c768_70] : memref<32x1408xf32, #tpu.memory_space<vmem>>, vector<32x384xf32>
    %cst_71 = arith.constant dense<0.000000e+00> : vector<1x384xf32>
    %134 = tpu.matmul %132, %133, %cst_71 {dimension_numbers = #tpu.dot_dimension_numbers<[1], [0], [0], [1], [0, 0, 1, 1], [], []>} : vector<1x32xf32>, vector<32x384xf32>, vector<1x384xf32> -> vector<1x384xf32>
    %135 = arith.addf %134, %42 : vector<1x384xf32>
    %136 = vector.extract_strided_slice %135 {offsets = [0, 0], sizes = [1, 32], strides = [1, 1]} : vector<1x384xf32> to vector<1x32xf32>
    %137 = vector.extract_strided_slice %115 {offsets = [0, 128], sizes = [1, 32], strides = [1, 1]} : vector<1x512xf32> to vector<1x32xf32>
    %138 = arith.addf %136, %137 : vector<1x32xf32>
    %139 = arith.negf %138 : vector<1x32xf32>
    %140 = math.exp %139 : vector<1x32xf32>
    %cst_72 = arith.constant 1.000000e+00 : f32
    %141 = vector.broadcast %cst_72 : f32 to vector<1x32xf32>
    %142 = arith.addf %141, %140 : vector<1x32xf32>
    %143 = arith.divf %141, %142 : vector<1x32xf32>
    %144 = vector.extract_strided_slice %135 {offsets = [0, 128], sizes = [1, 32], strides = [1, 1]} : vector<1x384xf32> to vector<1x32xf32>
    %145 = vector.extract_strided_slice %115 {offsets = [0, 256], sizes = [1, 32], strides = [1, 1]} : vector<1x512xf32> to vector<1x32xf32>
    %146 = arith.addf %144, %145 : vector<1x32xf32>
    %147 = arith.negf %146 : vector<1x32xf32>
    %148 = math.exp %147 : vector<1x32xf32>
    %cst_73 = arith.constant 1.000000e+00 : f32
    %149 = vector.broadcast %cst_73 : f32 to vector<1x32xf32>
    %150 = arith.addf %149, %148 : vector<1x32xf32>
    %151 = arith.divf %149, %150 : vector<1x32xf32>
    %152 = vector.extract_strided_slice %135 {offsets = [0, 256], sizes = [1, 32], strides = [1, 1]} : vector<1x384xf32> to vector<1x32xf32>
    %153 = vector.extract_strided_slice %115 {offsets = [0, 384], sizes = [1, 32], strides = [1, 1]} : vector<1x512xf32> to vector<1x32xf32>
    %154 = arith.mulf %143, %153 : vector<1x32xf32>
    %155 = arith.addf %152, %154 : vector<1x32xf32>
    %156 = math.tanh %155 : vector<1x32xf32>
    %cst_74 = arith.constant 1.000000e+00 : f32
    %157 = vector.broadcast %cst_74 : f32 to vector<1x32xf32>
    %158 = arith.subf %157, %151 : vector<1x32xf32>
    %159 = arith.mulf %158, %156 : vector<1x32xf32>
    %160 = arith.mulf %151, %94 : vector<1x32xf32>
    %161 = arith.addf %159, %160 : vector<1x32xf32>
    %c0_75 = arith.constant 0 : index
    %c1280_76 = arith.constant 1280 : index
    %162 = vector.load %arg5[%c0_75, %c1280_76] : memref<32x1408xf32, #tpu.memory_space<vmem>>, vector<32x64xf32>
    %cst_77 = arith.constant dense<0.000000e+00> : vector<1x64xf32>
    %163 = tpu.matmul %161, %162, %cst_77 {dimension_numbers = #tpu.dot_dimension_numbers<[1], [0], [0], [1], [0, 0, 1, 1], [], []>} : vector<1x32xf32>, vector<32x64xf32>, vector<1x64xf32> -> vector<1x64xf32>
    %164 = arith.addf %163, %43 : vector<1x64xf32>
    %cst_78 = arith.constant dense<0xFF800000> : vector<1xf32>
    %165 = vector.multi_reduction <maximumf>, %164, %cst_78 [1] : vector<1x64xf32> to vector<1xf32>
    %166 = vector.shape_cast %165 : vector<1xf32> to vector<1x1xf32>
    %167 = vector.broadcast %166 : vector<1x1xf32> to vector<1x64xf32>
    %168 = arith.subf %164, %167 : vector<1x64xf32>
    %169 = math.exp %168 : vector<1x64xf32>
    %cst_79 = arith.constant dense<0.000000e+00> : vector<1xf32>
    %170 = vector.multi_reduction <add>, %169, %cst_79 [1] : vector<1x64xf32> to vector<1xf32>
    %171 = vector.shape_cast %170 : vector<1xf32> to vector<1x1xf32>
    %172 = math.log %171 : vector<1x1xf32>
    %173 = arith.addf %172, %166 : vector<1x1xf32>
    %174 = vector.broadcast %173 : vector<1x1xf32> to vector<1x64xf32>
    %175 = arith.subf %164, %174 : vector<1x64xf32>
    %c1_80 = arith.constant 1 : index
    %c0_81 = arith.constant 0 : index
    %176 = vector.load %arg7[%c1_80, %c0_81] : memref<8x384xf32, #tpu.memory_space<vmem>>, vector<1x64xf32>
    tpu.vector_store %arg7[%c1_80, %c0_81], %175 {strides = array<i32>} : memref<8x384xf32, #tpu.memory_space<vmem>>, vector<1x64xf32>,
    %c1_82 = arith.constant 1 : index
    %c128_83 = arith.constant 128 : index
    %177 = vector.load %arg7[%c1_82, %c128_83] : memref<8x384xf32, #tpu.memory_space<vmem>>, vector<1x32xf32>
    tpu.vector_store %arg7[%c1_82, %c128_83], %161 {strides = array<i32>} : memref<8x384xf32, #tpu.memory_space<vmem>>, vector<1x32xf32>,
    %c1_84 = arith.constant 1 : index
    %c256_85 = arith.constant 256 : index
    %178 = vector.load %arg7[%c1_84, %c256_85] : memref<8x384xf32, #tpu.memory_space<vmem>>, vector<1x10xf32>
    tpu.vector_store %arg7[%c1_84, %c256_85], %127 {strides = array<i32>} : memref<8x384xf32, #tpu.memory_space<vmem>>, vector<1x10xf32>,
    %179 = vector.extract_strided_slice %37 {offsets = [2, 0], sizes = [1, 256], strides = [1, 1]} : vector<8x256xf32> to vector<1x256xf32>
    %c0_86 = arith.constant 0 : index
    %c256_87 = arith.constant 256 : index
    %180 = vector.load %arg5[%c0_86, %c256_87] : memref<32x1408xf32, #tpu.memory_space<vmem>>, vector<32x512xf32>
    %cst_88 = arith.constant dense<0.000000e+00> : vector<1x512xf32>
    %181 = tpu.matmul %161, %180, %cst_88 {dimension_numbers = #tpu.dot_dimension_numbers<[1], [0], [0], [1], [0, 0, 1, 1], [], []>} : vector<1x32xf32>, vector<32x512xf32>, vector<1x512xf32> -> vector<1x512xf32>
    %182 = arith.addf %181, %41 : vector<1x512xf32>
    %183 = vector.extract_strided_slice %179 {offsets = [0, 0], sizes = [1, 10], strides = [1, 1]} : vector<1x256xf32> to vector<1x10xf32>
    %184 = vector.extract_strided_slice %182 {offsets = [0, 0], sizes = [1, 10], strides = [1, 1]} : vector<1x512xf32> to vector<1x10xf32>
    %185 = arith.addf %183, %184 : vector<1x10xf32>
    %cst_89 = arith.constant dense<0xFF800000> : vector<1xf32>
    %186 = vector.multi_reduction <maximumf>, %185, %cst_89 [1] : vector<1x10xf32> to vector<1xf32>
    %187 = vector.shape_cast %186 : vector<1xf32> to vector<1x1xf32>
    %188 = vector.broadcast %187 : vector<1x1xf32> to vector<1x10xf32>
    %189 = arith.subf %185, %188 : vector<1x10xf32>
    %190 = math.exp %189 : vector<1x10xf32>
    %cst_90 = arith.constant dense<0.000000e+00> : vector<1xf32>
    %191 = vector.multi_reduction <add>, %190, %cst_90 [1] : vector<1x10xf32> to vector<1xf32>
    %192 = vector.shape_cast %191 : vector<1xf32> to vector<1x1xf32>
    %193 = vector.broadcast %192 : vector<1x1xf32> to vector<1x10xf32>
    %194 = arith.divf %190, %193 : vector<1x10xf32>
    %195 = vector.extract_strided_slice %179 {offsets = [0, 128], sizes = [1, 32], strides = [1, 1]} : vector<1x256xf32> to vector<1x32xf32>
    %cst_91 = arith.constant dense<0.000000e+00> : vector<1x32xf32>
    %196 = tpu.matmul %194, %40, %cst_91 {dimension_numbers = #tpu.dot_dimension_numbers<[1], [0], [0], [1], [0, 0, 1, 1], [], []>} : vector<1x10xf32>, vector<10x32xf32>, vector<1x32xf32> -> vector<1x32xf32>
    %197 = arith.addf %195, %196 : vector<1x32xf32>
    %cst_92 = arith.constant 0.000000e+00 : f32
    %198 = vector.broadcast %cst_92 : f32 to vector<1x32xf32>
    %199 = arith.maximumf %197, %198 : vector<1x32xf32>
    %c0_93 = arith.constant 0 : index
    %c768_94 = arith.constant 768 : index
    %200 = vector.load %arg5[%c0_93, %c768_94] : memref<32x1408xf32, #tpu.memory_space<vmem>>, vector<32x384xf32>
    %cst_95 = arith.constant dense<0.000000e+00> : vector<1x384xf32>
    %201 = tpu.matmul %199, %200, %cst_95 {dimension_numbers = #tpu.dot_dimension_numbers<[1], [0], [0], [1], [0, 0, 1, 1], [], []>} : vector<1x32xf32>, vector<32x384xf32>, vector<1x384xf32> -> vector<1x384xf32>
    %202 = arith.addf %201, %42 : vector<1x384xf32>
    %203 = vector.extract_strided_slice %202 {offsets = [0, 0], sizes = [1, 32], strides = [1, 1]} : vector<1x384xf32> to vector<1x32xf32>
    %204 = vector.extract_strided_slice %182 {offsets = [0, 128], sizes = [1, 32], strides = [1, 1]} : vector<1x512xf32> to vector<1x32xf32>
    %205 = arith.addf %203, %204 : vector<1x32xf32>
    %206 = arith.negf %205 : vector<1x32xf32>
    %207 = math.exp %206 : vector<1x32xf32>
    %cst_96 = arith.constant 1.000000e+00 : f32
    %208 = vector.broadcast %cst_96 : f32 to vector<1x32xf32>
    %209 = arith.addf %208, %207 : vector<1x32xf32>
    %210 = arith.divf %208, %209 : vector<1x32xf32>
    %211 = vector.extract_strided_slice %202 {offsets = [0, 128], sizes = [1, 32], strides = [1, 1]} : vector<1x384xf32> to vector<1x32xf32>
    %212 = vector.extract_strided_slice %182 {offsets = [0, 256], sizes = [1, 32], strides = [1, 1]} : vector<1x512xf32> to vector<1x32xf32>
    %213 = arith.addf %211, %212 : vector<1x32xf32>
    %214 = arith.negf %213 : vector<1x32xf32>
    %215 = math.exp %214 : vector<1x32xf32>
    %cst_97 = arith.constant 1.000000e+00 : f32
    %216 = vector.broadcast %cst_97 : f32 to vector<1x32xf32>
    %217 = arith.addf %216, %215 : vector<1x32xf32>
    %218 = arith.divf %216, %217 : vector<1x32xf32>
    %219 = vector.extract_strided_slice %202 {offsets = [0, 256], sizes = [1, 32], strides = [1, 1]} : vector<1x384xf32> to vector<1x32xf32>
    %220 = vector.extract_strided_slice %182 {offsets = [0, 384], sizes = [1, 32], strides = [1, 1]} : vector<1x512xf32> to vector<1x32xf32>
    %221 = arith.mulf %210, %220 : vector<1x32xf32>
    %222 = arith.addf %219, %221 : vector<1x32xf32>
    %223 = math.tanh %222 : vector<1x32xf32>
    %cst_98 = arith.constant 1.000000e+00 : f32
    %224 = vector.broadcast %cst_98 : f32 to vector<1x32xf32>
    %225 = arith.subf %224, %218 : vector<1x32xf32>
    %226 = arith.mulf %225, %223 : vector<1x32xf32>
    %227 = arith.mulf %218, %161 : vector<1x32xf32>
    %228 = arith.addf %226, %227 : vector<1x32xf32>
    %c0_99 = arith.constant 0 : index
    %c1280_100 = arith.constant 1280 : index
    %229 = vector.load %arg5[%c0_99, %c1280_100] : memref<32x1408xf32, #tpu.memory_space<vmem>>, vector<32x64xf32>
    %cst_101 = arith.constant dense<0.000000e+00> : vector<1x64xf32>
    %230 = tpu.matmul %228, %229, %cst_101 {dimension_numbers = #tpu.dot_dimension_numbers<[1], [0], [0], [1], [0, 0, 1, 1], [], []>} : vector<1x32xf32>, vector<32x64xf32>, vector<1x64xf32> -> vector<1x64xf32>
    %231 = arith.addf %230, %43 : vector<1x64xf32>
    %cst_102 = arith.constant dense<0xFF800000> : vector<1xf32>
    %232 = vector.multi_reduction <maximumf>, %231, %cst_102 [1] : vector<1x64xf32> to vector<1xf32>
    %233 = vector.shape_cast %232 : vector<1xf32> to vector<1x1xf32>
    %234 = vector.broadcast %233 : vector<1x1xf32> to vector<1x64xf32>
    %235 = arith.subf %231, %234 : vector<1x64xf32>
    %236 = math.exp %235 : vector<1x64xf32>
    %cst_103 = arith.constant dense<0.000000e+00> : vector<1xf32>
    %237 = vector.multi_reduction <add>, %236, %cst_103 [1] : vector<1x64xf32> to vector<1xf32>
    %238 = vector.shape_cast %237 : vector<1xf32> to vector<1x1xf32>
    %239 = math.log %238 : vector<1x1xf32>
    %240 = arith.addf %239, %233 : vector<1x1xf32>
    %241 = vector.broadcast %240 : vector<1x1xf32> to vector<1x64xf32>
    %242 = arith.subf %231, %241 : vector<1x64xf32>
    %c2_104 = arith.constant 2 : index
    %c0_105 = arith.constant 0 : index
    %243 = vector.load %arg7[%c2_104, %c0_105] : memref<8x384xf32, #tpu.memory_space<vmem>>, vector<1x64xf32>
    tpu.vector_store %arg7[%c2_104, %c0_105], %242 {strides = array<i32>} : memref<8x384xf32, #tpu.memory_space<vmem>>, vector<1x64xf32>,
    %c2_106 = arith.constant 2 : index
    %c128_107 = arith.constant 128 : index
    %244 = vector.load %arg7[%c2_106, %c128_107] : memref<8x384xf32, #tpu.memory_space<vmem>>, vector<1x32xf32>
    tpu.vector_store %arg7[%c2_106, %c128_107], %228 {strides = array<i32>} : memref<8x384xf32, #tpu.memory_space<vmem>>, vector<1x32xf32>,
    %c2_108 = arith.constant 2 : index
    %c256_109 = arith.constant 256 : index
    %245 = vector.load %arg7[%c2_108, %c256_109] : memref<8x384xf32, #tpu.memory_space<vmem>>, vector<1x10xf32>
    tpu.vector_store %arg7[%c2_108, %c256_109], %194 {strides = array<i32>} : memref<8x384xf32, #tpu.memory_space<vmem>>, vector<1x10xf32>,
    %246 = vector.extract_strided_slice %37 {offsets = [3, 0], sizes = [1, 256], strides = [1, 1]} : vector<8x256xf32> to vector<1x256xf32>
    %c0_110 = arith.constant 0 : index
    %c256_111 = arith.constant 256 : index
    %247 = vector.load %arg5[%c0_110, %c256_111] : memref<32x1408xf32, #tpu.memory_space<vmem>>, vector<32x512xf32>
    %cst_112 = arith.constant dense<0.000000e+00> : vector<1x512xf32>
    %248 = tpu.matmul %228, %247, %cst_112 {dimension_numbers = #tpu.dot_dimension_numbers<[1], [0], [0], [1], [0, 0, 1, 1], [], []>} : vector<1x32xf32>, vector<32x512xf32>, vector<1x512xf32> -> vector<1x512xf32>
    %249 = arith.addf %248, %41 : vector<1x512xf32>
    %250 = vector.extract_strided_slice %246 {offsets = [0, 0], sizes = [1, 10], strides = [1, 1]} : vector<1x256xf32> to vector<1x10xf32>
    %251 = vector.extract_strided_slice %249 {offsets = [0, 0], sizes = [1, 10], strides = [1, 1]} : vector<1x512xf32> to vector<1x10xf32>
    %252 = arith.addf %250, %251 : vector<1x10xf32>
    %cst_113 = arith.constant dense<0xFF800000> : vector<1xf32>
    %253 = vector.multi_reduction <maximumf>, %252, %cst_113 [1] : vector<1x10xf32> to vector<1xf32>
    %254 = vector.shape_cast %253 : vector<1xf32> to vector<1x1xf32>
    %255 = vector.broadcast %254 : vector<1x1xf32> to vector<1x10xf32>
    %256 = arith.subf %252, %255 : vector<1x10xf32>
    %257 = math.exp %256 : vector<1x10xf32>
    %cst_114 = arith.constant dense<0.000000e+00> : vector<1xf32>
    %258 = vector.multi_reduction <add>, %257, %cst_114 [1] : vector<1x10xf32> to vector<1xf32>
    %259 = vector.shape_cast %258 : vector<1xf32> to vector<1x1xf32>
    %260 = vector.broadcast %259 : vector<1x1xf32> to vector<1x10xf32>
    %261 = arith.divf %257, %260 : vector<1x10xf32>
    %262 = vector.extract_strided_slice %246 {offsets = [0, 128], sizes = [1, 32], strides = [1, 1]} : vector<1x256xf32> to vector<1x32xf32>
    %cst_115 = arith.constant dense<0.000000e+00> : vector<1x32xf32>
    %263 = tpu.matmul %261, %40, %cst_115 {dimension_numbers = #tpu.dot_dimension_numbers<[1], [0], [0], [1], [0, 0, 1, 1], [], []>} : vector<1x10xf32>, vector<10x32xf32>, vector<1x32xf32> -> vector<1x32xf32>
    %264 = arith.addf %262, %263 : vector<1x32xf32>
    %cst_116 = arith.constant 0.000000e+00 : f32
    %265 = vector.broadcast %cst_116 : f32 to vector<1x32xf32>
    %266 = arith.maximumf %264, %265 : vector<1x32xf32>
    %c0_117 = arith.constant 0 : index
    %c768_118 = arith.constant 768 : index
    %267 = vector.load %arg5[%c0_117, %c768_118] : memref<32x1408xf32, #tpu.memory_space<vmem>>, vector<32x384xf32>
    %cst_119 = arith.constant dense<0.000000e+00> : vector<1x384xf32>
    %268 = tpu.matmul %266, %267, %cst_119 {dimension_numbers = #tpu.dot_dimension_numbers<[1], [0], [0], [1], [0, 0, 1, 1], [], []>} : vector<1x32xf32>, vector<32x384xf32>, vector<1x384xf32> -> vector<1x384xf32>
    %269 = arith.addf %268, %42 : vector<1x384xf32>
    %270 = vector.extract_strided_slice %269 {offsets = [0, 0], sizes = [1, 32], strides = [1, 1]} : vector<1x384xf32> to vector<1x32xf32>
    %271 = vector.extract_strided_slice %249 {offsets = [0, 128], sizes = [1, 32], strides = [1, 1]} : vector<1x512xf32> to vector<1x32xf32>
    %272 = arith.addf %270, %271 : vector<1x32xf32>
    %273 = arith.negf %272 : vector<1x32xf32>
    %274 = math.exp %273 : vector<1x32xf32>
    %cst_120 = arith.constant 1.000000e+00 : f32
    %275 = vector.broadcast %cst_120 : f32 to vector<1x32xf32>
    %276 = arith.addf %275, %274 : vector<1x32xf32>
    %277 = arith.divf %275, %276 : vector<1x32xf32>
    %278 = vector.extract_strided_slice %269 {offsets = [0, 128], sizes = [1, 32], strides = [1, 1]} : vector<1x384xf32> to vector<1x32xf32>
    %279 = vector.extract_strided_slice %249 {offsets = [0, 256], sizes = [1, 32], strides = [1, 1]} : vector<1x512xf32> to vector<1x32xf32>
    %280 = arith.addf %278, %279 : vector<1x32xf32>
    %281 = arith.negf %280 : vector<1x32xf32>
    %282 = math.exp %281 : vector<1x32xf32>
    %cst_121 = arith.constant 1.000000e+00 : f32
    %283 = vector.broadcast %cst_121 : f32 to vector<1x32xf32>
    %284 = arith.addf %283, %282 : vector<1x32xf32>
    %285 = arith.divf %283, %284 : vector<1x32xf32>
    %286 = vector.extract_strided_slice %269 {offsets = [0, 256], sizes = [1, 32], strides = [1, 1]} : vector<1x384xf32> to vector<1x32xf32>
    %287 = vector.extract_strided_slice %249 {offsets = [0, 384], sizes = [1, 32], strides = [1, 1]} : vector<1x512xf32> to vector<1x32xf32>
    %288 = arith.mulf %277, %287 : vector<1x32xf32>
    %289 = arith.addf %286, %288 : vector<1x32xf32>
    %290 = math.tanh %289 : vector<1x32xf32>
    %cst_122 = arith.constant 1.000000e+00 : f32
    %291 = vector.broadcast %cst_122 : f32 to vector<1x32xf32>
    %292 = arith.subf %291, %285 : vector<1x32xf32>
    %293 = arith.mulf %292, %290 : vector<1x32xf32>
    %294 = arith.mulf %285, %228 : vector<1x32xf32>
    %295 = arith.addf %293, %294 : vector<1x32xf32>
    %c0_123 = arith.constant 0 : index
    %c1280_124 = arith.constant 1280 : index
    %296 = vector.load %arg5[%c0_123, %c1280_124] : memref<32x1408xf32, #tpu.memory_space<vmem>>, vector<32x64xf32>
    %cst_125 = arith.constant dense<0.000000e+00> : vector<1x64xf32>
    %297 = tpu.matmul %295, %296, %cst_125 {dimension_numbers = #tpu.dot_dimension_numbers<[1], [0], [0], [1], [0, 0, 1, 1], [], []>} : vector<1x32xf32>, vector<32x64xf32>, vector<1x64xf32> -> vector<1x64xf32>
    %298 = arith.addf %297, %43 : vector<1x64xf32>
    %cst_126 = arith.constant dense<0xFF800000> : vector<1xf32>
    %299 = vector.multi_reduction <maximumf>, %298, %cst_126 [1] : vector<1x64xf32> to vector<1xf32>
    %300 = vector.shape_cast %299 : vector<1xf32> to vector<1x1xf32>
    %301 = vector.broadcast %300 : vector<1x1xf32> to vector<1x64xf32>
    %302 = arith.subf %298, %301 : vector<1x64xf32>
    %303 = math.exp %302 : vector<1x64xf32>
    %cst_127 = arith.constant dense<0.000000e+00> : vector<1xf32>
    %304 = vector.multi_reduction <add>, %303, %cst_127 [1] : vector<1x64xf32> to vector<1xf32>
    %305 = vector.shape_cast %304 : vector<1xf32> to vector<1x1xf32>
    %306 = math.log %305 : vector<1x1xf32>
    %307 = arith.addf %306, %300 : vector<1x1xf32>
    %308 = vector.broadcast %307 : vector<1x1xf32> to vector<1x64xf32>
    %309 = arith.subf %298, %308 : vector<1x64xf32>
    %c3_128 = arith.constant 3 : index
    %c0_129 = arith.constant 0 : index
    %310 = vector.load %arg7[%c3_128, %c0_129] : memref<8x384xf32, #tpu.memory_space<vmem>>, vector<1x64xf32>
    tpu.vector_store %arg7[%c3_128, %c0_129], %309 {strides = array<i32>} : memref<8x384xf32, #tpu.memory_space<vmem>>, vector<1x64xf32>,
    %c3_130 = arith.constant 3 : index
    %c128_131 = arith.constant 128 : index
    %311 = vector.load %arg7[%c3_130, %c128_131] : memref<8x384xf32, #tpu.memory_space<vmem>>, vector<1x32xf32>
    tpu.vector_store %arg7[%c3_130, %c128_131], %295 {strides = array<i32>} : memref<8x384xf32, #tpu.memory_space<vmem>>, vector<1x32xf32>,
    %c3_132 = arith.constant 3 : index
    %c256_133 = arith.constant 256 : index
    %312 = vector.load %arg7[%c3_132, %c256_133] : memref<8x384xf32, #tpu.memory_space<vmem>>, vector<1x10xf32>
    tpu.vector_store %arg7[%c3_132, %c256_133], %261 {strides = array<i32>} : memref<8x384xf32, #tpu.memory_space<vmem>>, vector<1x10xf32>,
    %313 = vector.extract_strided_slice %37 {offsets = [4, 0], sizes = [1, 256], strides = [1, 1]} : vector<8x256xf32> to vector<1x256xf32>
    %c0_134 = arith.constant 0 : index
    %c256_135 = arith.constant 256 : index
    %314 = vector.load %arg5[%c0_134, %c256_135] : memref<32x1408xf32, #tpu.memory_space<vmem>>, vector<32x512xf32>
    %cst_136 = arith.constant dense<0.000000e+00> : vector<1x512xf32>
    %315 = tpu.matmul %295, %314, %cst_136 {dimension_numbers = #tpu.dot_dimension_numbers<[1], [0], [0], [1], [0, 0, 1, 1], [], []>} : vector<1x32xf32>, vector<32x512xf32>, vector<1x512xf32> -> vector<1x512xf32>
    %316 = arith.addf %315, %41 : vector<1x512xf32>
    %317 = vector.extract_strided_slice %313 {offsets = [0, 0], sizes = [1, 10], strides = [1, 1]} : vector<1x256xf32> to vector<1x10xf32>
    %318 = vector.extract_strided_slice %316 {offsets = [0, 0], sizes = [1, 10], strides = [1, 1]} : vector<1x512xf32> to vector<1x10xf32>
    %319 = arith.addf %317, %318 : vector<1x10xf32>
    %cst_137 = arith.constant dense<0xFF800000> : vector<1xf32>
    %320 = vector.multi_reduction <maximumf>, %319, %cst_137 [1] : vector<1x10xf32> to vector<1xf32>
    %321 = vector.shape_cast %320 : vector<1xf32> to vector<1x1xf32>
    %322 = vector.broadcast %321 : vector<1x1xf32> to vector<1x10xf32>
    %323 = arith.subf %319, %322 : vector<1x10xf32>
    %324 = math.exp %323 : vector<1x10xf32>
    %cst_138 = arith.constant dense<0.000000e+00> : vector<1xf32>
    %325 = vector.multi_reduction <add>, %324, %cst_138 [1] : vector<1x10xf32> to vector<1xf32>
    %326 = vector.shape_cast %325 : vector<1xf32> to vector<1x1xf32>
    %327 = vector.broadcast %326 : vector<1x1xf32> to vector<1x10xf32>
    %328 = arith.divf %324, %327 : vector<1x10xf32>
    %329 = vector.extract_strided_slice %313 {offsets = [0, 128], sizes = [1, 32], strides = [1, 1]} : vector<1x256xf32> to vector<1x32xf32>
    %cst_139 = arith.constant dense<0.000000e+00> : vector<1x32xf32>
    %330 = tpu.matmul %328, %40, %cst_139 {dimension_numbers = #tpu.dot_dimension_numbers<[1], [0], [0], [1], [0, 0, 1, 1], [], []>} : vector<1x10xf32>, vector<10x32xf32>, vector<1x32xf32> -> vector<1x32xf32>
    %331 = arith.addf %329, %330 : vector<1x32xf32>
    %cst_140 = arith.constant 0.000000e+00 : f32
    %332 = vector.broadcast %cst_140 : f32 to vector<1x32xf32>
    %333 = arith.maximumf %331, %332 : vector<1x32xf32>
    %c0_141 = arith.constant 0 : index
    %c768_142 = arith.constant 768 : index
    %334 = vector.load %arg5[%c0_141, %c768_142] : memref<32x1408xf32, #tpu.memory_space<vmem>>, vector<32x384xf32>
    %cst_143 = arith.constant dense<0.000000e+00> : vector<1x384xf32>
    %335 = tpu.matmul %333, %334, %cst_143 {dimension_numbers = #tpu.dot_dimension_numbers<[1], [0], [0], [1], [0, 0, 1, 1], [], []>} : vector<1x32xf32>, vector<32x384xf32>, vector<1x384xf32> -> vector<1x384xf32>
    %336 = arith.addf %335, %42 : vector<1x384xf32>
    %337 = vector.extract_strided_slice %336 {offsets = [0, 0], sizes = [1, 32], strides = [1, 1]} : vector<1x384xf32> to vector<1x32xf32>
    %338 = vector.extract_strided_slice %316 {offsets = [0, 128], sizes = [1, 32], strides = [1, 1]} : vector<1x512xf32> to vector<1x32xf32>
    %339 = arith.addf %337, %338 : vector<1x32xf32>
    %340 = arith.negf %339 : vector<1x32xf32>
    %341 = math.exp %340 : vector<1x32xf32>
    %cst_144 = arith.constant 1.000000e+00 : f32
    %342 = vector.broadcast %cst_144 : f32 to vector<1x32xf32>
    %343 = arith.addf %342, %341 : vector<1x32xf32>
    %344 = arith.divf %342, %343 : vector<1x32xf32>
    %345 = vector.extract_strided_slice %336 {offsets = [0, 128], sizes = [1, 32], strides = [1, 1]} : vector<1x384xf32> to vector<1x32xf32>
    %346 = vector.extract_strided_slice %316 {offsets = [0, 256], sizes = [1, 32], strides = [1, 1]} : vector<1x512xf32> to vector<1x32xf32>
    %347 = arith.addf %345, %346 : vector<1x32xf32>
    %348 = arith.negf %347 : vector<1x32xf32>
    %349 = math.exp %348 : vector<1x32xf32>
    %cst_145 = arith.constant 1.000000e+00 : f32
    %350 = vector.broadcast %cst_145 : f32 to vector<1x32xf32>
    %351 = arith.addf %350, %349 : vector<1x32xf32>
    %352 = arith.divf %350, %351 : vector<1x32xf32>
    %353 = vector.extract_strided_slice %336 {offsets = [0, 256], sizes = [1, 32], strides = [1, 1]} : vector<1x384xf32> to vector<1x32xf32>
    %354 = vector.extract_strided_slice %316 {offsets = [0, 384], sizes = [1, 32], strides = [1, 1]} : vector<1x512xf32> to vector<1x32xf32>
    %355 = arith.mulf %344, %354 : vector<1x32xf32>
    %356 = arith.addf %353, %355 : vector<1x32xf32>
    %357 = math.tanh %356 : vector<1x32xf32>
    %cst_146 = arith.constant 1.000000e+00 : f32
    %358 = vector.broadcast %cst_146 : f32 to vector<1x32xf32>
    %359 = arith.subf %358, %352 : vector<1x32xf32>
    %360 = arith.mulf %359, %357 : vector<1x32xf32>
    %361 = arith.mulf %352, %295 : vector<1x32xf32>
    %362 = arith.addf %360, %361 : vector<1x32xf32>
    %c0_147 = arith.constant 0 : index
    %c1280_148 = arith.constant 1280 : index
    %363 = vector.load %arg5[%c0_147, %c1280_148] : memref<32x1408xf32, #tpu.memory_space<vmem>>, vector<32x64xf32>
    %cst_149 = arith.constant dense<0.000000e+00> : vector<1x64xf32>
    %364 = tpu.matmul %362, %363, %cst_149 {dimension_numbers = #tpu.dot_dimension_numbers<[1], [0], [0], [1], [0, 0, 1, 1], [], []>} : vector<1x32xf32>, vector<32x64xf32>, vector<1x64xf32> -> vector<1x64xf32>
    %365 = arith.addf %364, %43 : vector<1x64xf32>
    %cst_150 = arith.constant dense<0xFF800000> : vector<1xf32>
    %366 = vector.multi_reduction <maximumf>, %365, %cst_150 [1] : vector<1x64xf32> to vector<1xf32>
    %367 = vector.shape_cast %366 : vector<1xf32> to vector<1x1xf32>
    %368 = vector.broadcast %367 : vector<1x1xf32> to vector<1x64xf32>
    %369 = arith.subf %365, %368 : vector<1x64xf32>
    %370 = math.exp %369 : vector<1x64xf32>
    %cst_151 = arith.constant dense<0.000000e+00> : vector<1xf32>
    %371 = vector.multi_reduction <add>, %370, %cst_151 [1] : vector<1x64xf32> to vector<1xf32>
    %372 = vector.shape_cast %371 : vector<1xf32> to vector<1x1xf32>
    %373 = math.log %372 : vector<1x1xf32>
    %374 = arith.addf %373, %367 : vector<1x1xf32>
    %375 = vector.broadcast %374 : vector<1x1xf32> to vector<1x64xf32>
    %376 = arith.subf %365, %375 : vector<1x64xf32>
    %c4_152 = arith.constant 4 : index
    %c0_153 = arith.constant 0 : index
    %377 = vector.load %arg7[%c4_152, %c0_153] : memref<8x384xf32, #tpu.memory_space<vmem>>, vector<1x64xf32>
    tpu.vector_store %arg7[%c4_152, %c0_153], %376 {strides = array<i32>} : memref<8x384xf32, #tpu.memory_space<vmem>>, vector<1x64xf32>,
    %c4_154 = arith.constant 4 : index
    %c128_155 = arith.constant 128 : index
    %378 = vector.load %arg7[%c4_154, %c128_155] : memref<8x384xf32, #tpu.memory_space<vmem>>, vector<1x32xf32>
    tpu.vector_store %arg7[%c4_154, %c128_155], %362 {strides = array<i32>} : memref<8x384xf32, #tpu.memory_space<vmem>>, vector<1x32xf32>,
    %c4_156 = arith.constant 4 : index
    %c256_157 = arith.constant 256 : index
    %379 = vector.load %arg7[%c4_156, %c256_157] : memref<8x384xf32, #tpu.memory_space<vmem>>, vector<1x10xf32>
    tpu.vector_store %arg7[%c4_156, %c256_157], %328 {strides = array<i32>} : memref<8x384xf32, #tpu.memory_space<vmem>>, vector<1x10xf32>,
    %380 = vector.extract_strided_slice %37 {offsets = [5, 0], sizes = [1, 256], strides = [1, 1]} : vector<8x256xf32> to vector<1x256xf32>
    %c0_158 = arith.constant 0 : index
    %c256_159 = arith.constant 256 : index
    %381 = vector.load %arg5[%c0_158, %c256_159] : memref<32x1408xf32, #tpu.memory_space<vmem>>, vector<32x512xf32>
    %cst_160 = arith.constant dense<0.000000e+00> : vector<1x512xf32>
    %382 = tpu.matmul %362, %381, %cst_160 {dimension_numbers = #tpu.dot_dimension_numbers<[1], [0], [0], [1], [0, 0, 1, 1], [], []>} : vector<1x32xf32>, vector<32x512xf32>, vector<1x512xf32> -> vector<1x512xf32>
    %383 = arith.addf %382, %41 : vector<1x512xf32>
    %384 = vector.extract_strided_slice %380 {offsets = [0, 0], sizes = [1, 10], strides = [1, 1]} : vector<1x256xf32> to vector<1x10xf32>
    %385 = vector.extract_strided_slice %383 {offsets = [0, 0], sizes = [1, 10], strides = [1, 1]} : vector<1x512xf32> to vector<1x10xf32>
    %386 = arith.addf %384, %385 : vector<1x10xf32>
    %cst_161 = arith.constant dense<0xFF800000> : vector<1xf32>
    %387 = vector.multi_reduction <maximumf>, %386, %cst_161 [1] : vector<1x10xf32> to vector<1xf32>
    %388 = vector.shape_cast %387 : vector<1xf32> to vector<1x1xf32>
    %389 = vector.broadcast %388 : vector<1x1xf32> to vector<1x10xf32>
    %390 = arith.subf %386, %389 : vector<1x10xf32>
    %391 = math.exp %390 : vector<1x10xf32>
    %cst_162 = arith.constant dense<0.000000e+00> : vector<1xf32>
    %392 = vector.multi_reduction <add>, %391, %cst_162 [1] : vector<1x10xf32> to vector<1xf32>
    %393 = vector.shape_cast %392 : vector<1xf32> to vector<1x1xf32>
    %394 = vector.broadcast %393 : vector<1x1xf32> to vector<1x10xf32>
    %395 = arith.divf %391, %394 : vector<1x10xf32>
    %396 = vector.extract_strided_slice %380 {offsets = [0, 128], sizes = [1, 32], strides = [1, 1]} : vector<1x256xf32> to vector<1x32xf32>
    %cst_163 = arith.constant dense<0.000000e+00> : vector<1x32xf32>
    %397 = tpu.matmul %395, %40, %cst_163 {dimension_numbers = #tpu.dot_dimension_numbers<[1], [0], [0], [1], [0, 0, 1, 1], [], []>} : vector<1x10xf32>, vector<10x32xf32>, vector<1x32xf32> -> vector<1x32xf32>
    %398 = arith.addf %396, %397 : vector<1x32xf32>
    %cst_164 = arith.constant 0.000000e+00 : f32
    %399 = vector.broadcast %cst_164 : f32 to vector<1x32xf32>
    %400 = arith.maximumf %398, %399 : vector<1x32xf32>
    %c0_165 = arith.constant 0 : index
    %c768_166 = arith.constant 768 : index
    %401 = vector.load %arg5[%c0_165, %c768_166] : memref<32x1408xf32, #tpu.memory_space<vmem>>, vector<32x384xf32>
    %cst_167 = arith.constant dense<0.000000e+00> : vector<1x384xf32>
    %402 = tpu.matmul %400, %401, %cst_167 {dimension_numbers = #tpu.dot_dimension_numbers<[1], [0], [0], [1], [0, 0, 1, 1], [], []>} : vector<1x32xf32>, vector<32x384xf32>, vector<1x384xf32> -> vector<1x384xf32>
    %403 = arith.addf %402, %42 : vector<1x384xf32>
    %404 = vector.extract_strided_slice %403 {offsets = [0, 0], sizes = [1, 32], strides = [1, 1]} : vector<1x384xf32> to vector<1x32xf32>
    %405 = vector.extract_strided_slice %383 {offsets = [0, 128], sizes = [1, 32], strides = [1, 1]} : vector<1x512xf32> to vector<1x32xf32>
    %406 = arith.addf %404, %405 : vector<1x32xf32>
    %407 = arith.negf %406 : vector<1x32xf32>
    %408 = math.exp %407 : vector<1x32xf32>
    %cst_168 = arith.constant 1.000000e+00 : f32
    %409 = vector.broadcast %cst_168 : f32 to vector<1x32xf32>
    %410 = arith.addf %409, %408 : vector<1x32xf32>
    %411 = arith.divf %409, %410 : vector<1x32xf32>
    %412 = vector.extract_strided_slice %403 {offsets = [0, 128], sizes = [1, 32], strides = [1, 1]} : vector<1x384xf32> to vector<1x32xf32>
    %413 = vector.extract_strided_slice %383 {offsets = [0, 256], sizes = [1, 32], strides = [1, 1]} : vector<1x512xf32> to vector<1x32xf32>
    %414 = arith.addf %412, %413 : vector<1x32xf32>
    %415 = arith.negf %414 : vector<1x32xf32>
    %416 = math.exp %415 : vector<1x32xf32>
    %cst_169 = arith.constant 1.000000e+00 : f32
    %417 = vector.broadcast %cst_169 : f32 to vector<1x32xf32>
    %418 = arith.addf %417, %416 : vector<1x32xf32>
    %419 = arith.divf %417, %418 : vector<1x32xf32>
    %420 = vector.extract_strided_slice %403 {offsets = [0, 256], sizes = [1, 32], strides = [1, 1]} : vector<1x384xf32> to vector<1x32xf32>
    %421 = vector.extract_strided_slice %383 {offsets = [0, 384], sizes = [1, 32], strides = [1, 1]} : vector<1x512xf32> to vector<1x32xf32>
    %422 = arith.mulf %411, %421 : vector<1x32xf32>
    %423 = arith.addf %420, %422 : vector<1x32xf32>
    %424 = math.tanh %423 : vector<1x32xf32>
    %cst_170 = arith.constant 1.000000e+00 : f32
    %425 = vector.broadcast %cst_170 : f32 to vector<1x32xf32>
    %426 = arith.subf %425, %419 : vector<1x32xf32>
    %427 = arith.mulf %426, %424 : vector<1x32xf32>
    %428 = arith.mulf %419, %362 : vector<1x32xf32>
    %429 = arith.addf %427, %428 : vector<1x32xf32>
    %c0_171 = arith.constant 0 : index
    %c1280_172 = arith.constant 1280 : index
    %430 = vector.load %arg5[%c0_171, %c1280_172] : memref<32x1408xf32, #tpu.memory_space<vmem>>, vector<32x64xf32>
    %cst_173 = arith.constant dense<0.000000e+00> : vector<1x64xf32>
    %431 = tpu.matmul %429, %430, %cst_173 {dimension_numbers = #tpu.dot_dimension_numbers<[1], [0], [0], [1], [0, 0, 1, 1], [], []>} : vector<1x32xf32>, vector<32x64xf32>, vector<1x64xf32> -> vector<1x64xf32>
    %432 = arith.addf %431, %43 : vector<1x64xf32>
    %cst_174 = arith.constant dense<0xFF800000> : vector<1xf32>
    %433 = vector.multi_reduction <maximumf>, %432, %cst_174 [1] : vector<1x64xf32> to vector<1xf32>
    %434 = vector.shape_cast %433 : vector<1xf32> to vector<1x1xf32>
    %435 = vector.broadcast %434 : vector<1x1xf32> to vector<1x64xf32>
    %436 = arith.subf %432, %435 : vector<1x64xf32>
    %437 = math.exp %436 : vector<1x64xf32>
    %cst_175 = arith.constant dense<0.000000e+00> : vector<1xf32>
    %438 = vector.multi_reduction <add>, %437, %cst_175 [1] : vector<1x64xf32> to vector<1xf32>
    %439 = vector.shape_cast %438 : vector<1xf32> to vector<1x1xf32>
    %440 = math.log %439 : vector<1x1xf32>
    %441 = arith.addf %440, %434 : vector<1x1xf32>
    %442 = vector.broadcast %441 : vector<1x1xf32> to vector<1x64xf32>
    %443 = arith.subf %432, %442 : vector<1x64xf32>
    %c5_176 = arith.constant 5 : index
    %c0_177 = arith.constant 0 : index
    %444 = vector.load %arg7[%c5_176, %c0_177] : memref<8x384xf32, #tpu.memory_space<vmem>>, vector<1x64xf32>
    tpu.vector_store %arg7[%c5_176, %c0_177], %443 {strides = array<i32>} : memref<8x384xf32, #tpu.memory_space<vmem>>, vector<1x64xf32>,
    %c5_178 = arith.constant 5 : index
    %c128_179 = arith.constant 128 : index
    %445 = vector.load %arg7[%c5_178, %c128_179] : memref<8x384xf32, #tpu.memory_space<vmem>>, vector<1x32xf32>
    tpu.vector_store %arg7[%c5_178, %c128_179], %429 {strides = array<i32>} : memref<8x384xf32, #tpu.memory_space<vmem>>, vector<1x32xf32>,
    %c5_180 = arith.constant 5 : index
    %c256_181 = arith.constant 256 : index
    %446 = vector.load %arg7[%c5_180, %c256_181] : memref<8x384xf32, #tpu.memory_space<vmem>>, vector<1x10xf32>
    tpu.vector_store %arg7[%c5_180, %c256_181], %395 {strides = array<i32>} : memref<8x384xf32, #tpu.memory_space<vmem>>, vector<1x10xf32>,
    %447 = vector.extract_strided_slice %37 {offsets = [6, 0], sizes = [1, 256], strides = [1, 1]} : vector<8x256xf32> to vector<1x256xf32>
    %c0_182 = arith.constant 0 : index
    %c256_183 = arith.constant 256 : index
    %448 = vector.load %arg5[%c0_182, %c256_183] : memref<32x1408xf32, #tpu.memory_space<vmem>>, vector<32x512xf32>
    %cst_184 = arith.constant dense<0.000000e+00> : vector<1x512xf32>
    %449 = tpu.matmul %429, %448, %cst_184 {dimension_numbers = #tpu.dot_dimension_numbers<[1], [0], [0], [1], [0, 0, 1, 1], [], []>} : vector<1x32xf32>, vector<32x512xf32>, vector<1x512xf32> -> vector<1x512xf32>
    %450 = arith.addf %449, %41 : vector<1x512xf32>
    %451 = vector.extract_strided_slice %447 {offsets = [0, 0], sizes = [1, 10], strides = [1, 1]} : vector<1x256xf32> to vector<1x10xf32>
    %452 = vector.extract_strided_slice %450 {offsets = [0, 0], sizes = [1, 10], strides = [1, 1]} : vector<1x512xf32> to vector<1x10xf32>
    %453 = arith.addf %451, %452 : vector<1x10xf32>
    %cst_185 = arith.constant dense<0xFF800000> : vector<1xf32>
    %454 = vector.multi_reduction <maximumf>, %453, %cst_185 [1] : vector<1x10xf32> to vector<1xf32>
    %455 = vector.shape_cast %454 : vector<1xf32> to vector<1x1xf32>
    %456 = vector.broadcast %455 : vector<1x1xf32> to vector<1x10xf32>
    %457 = arith.subf %453, %456 : vector<1x10xf32>
    %458 = math.exp %457 : vector<1x10xf32>
    %cst_186 = arith.constant dense<0.000000e+00> : vector<1xf32>
    %459 = vector.multi_reduction <add>, %458, %cst_186 [1] : vector<1x10xf32> to vector<1xf32>
    %460 = vector.shape_cast %459 : vector<1xf32> to vector<1x1xf32>
    %461 = vector.broadcast %460 : vector<1x1xf32> to vector<1x10xf32>
    %462 = arith.divf %458, %461 : vector<1x10xf32>
    %463 = vector.extract_strided_slice %447 {offsets = [0, 128], sizes = [1, 32], strides = [1, 1]} : vector<1x256xf32> to vector<1x32xf32>
    %cst_187 = arith.constant dense<0.000000e+00> : vector<1x32xf32>
    %464 = tpu.matmul %462, %40, %cst_187 {dimension_numbers = #tpu.dot_dimension_numbers<[1], [0], [0], [1], [0, 0, 1, 1], [], []>} : vector<1x10xf32>, vector<10x32xf32>, vector<1x32xf32> -> vector<1x32xf32>
    %465 = arith.addf %463, %464 : vector<1x32xf32>
    %cst_188 = arith.constant 0.000000e+00 : f32
    %466 = vector.broadcast %cst_188 : f32 to vector<1x32xf32>
    %467 = arith.maximumf %465, %466 : vector<1x32xf32>
    %c0_189 = arith.constant 0 : index
    %c768_190 = arith.constant 768 : index
    %468 = vector.load %arg5[%c0_189, %c768_190] : memref<32x1408xf32, #tpu.memory_space<vmem>>, vector<32x384xf32>
    %cst_191 = arith.constant dense<0.000000e+00> : vector<1x384xf32>
    %469 = tpu.matmul %467, %468, %cst_191 {dimension_numbers = #tpu.dot_dimension_numbers<[1], [0], [0], [1], [0, 0, 1, 1], [], []>} : vector<1x32xf32>, vector<32x384xf32>, vector<1x384xf32> -> vector<1x384xf32>
    %470 = arith.addf %469, %42 : vector<1x384xf32>
    %471 = vector.extract_strided_slice %470 {offsets = [0, 0], sizes = [1, 32], strides = [1, 1]} : vector<1x384xf32> to vector<1x32xf32>
    %472 = vector.extract_strided_slice %450 {offsets = [0, 128], sizes = [1, 32], strides = [1, 1]} : vector<1x512xf32> to vector<1x32xf32>
    %473 = arith.addf %471, %472 : vector<1x32xf32>
    %474 = arith.negf %473 : vector<1x32xf32>
    %475 = math.exp %474 : vector<1x32xf32>
    %cst_192 = arith.constant 1.000000e+00 : f32
    %476 = vector.broadcast %cst_192 : f32 to vector<1x32xf32>
    %477 = arith.addf %476, %475 : vector<1x32xf32>
    %478 = arith.divf %476, %477 : vector<1x32xf32>
    %479 = vector.extract_strided_slice %470 {offsets = [0, 128], sizes = [1, 32], strides = [1, 1]} : vector<1x384xf32> to vector<1x32xf32>
    %480 = vector.extract_strided_slice %450 {offsets = [0, 256], sizes = [1, 32], strides = [1, 1]} : vector<1x512xf32> to vector<1x32xf32>
    %481 = arith.addf %479, %480 : vector<1x32xf32>
    %482 = arith.negf %481 : vector<1x32xf32>
    %483 = math.exp %482 : vector<1x32xf32>
    %cst_193 = arith.constant 1.000000e+00 : f32
    %484 = vector.broadcast %cst_193 : f32 to vector<1x32xf32>
    %485 = arith.addf %484, %483 : vector<1x32xf32>
    %486 = arith.divf %484, %485 : vector<1x32xf32>
    %487 = vector.extract_strided_slice %470 {offsets = [0, 256], sizes = [1, 32], strides = [1, 1]} : vector<1x384xf32> to vector<1x32xf32>
    %488 = vector.extract_strided_slice %450 {offsets = [0, 384], sizes = [1, 32], strides = [1, 1]} : vector<1x512xf32> to vector<1x32xf32>
    %489 = arith.mulf %478, %488 : vector<1x32xf32>
    %490 = arith.addf %487, %489 : vector<1x32xf32>
    %491 = math.tanh %490 : vector<1x32xf32>
    %cst_194 = arith.constant 1.000000e+00 : f32
    %492 = vector.broadcast %cst_194 : f32 to vector<1x32xf32>
    %493 = arith.subf %492, %486 : vector<1x32xf32>
    %494 = arith.mulf %493, %491 : vector<1x32xf32>
    %495 = arith.mulf %486, %429 : vector<1x32xf32>
    %496 = arith.addf %494, %495 : vector<1x32xf32>
    %c0_195 = arith.constant 0 : index
    %c1280_196 = arith.constant 1280 : index
    %497 = vector.load %arg5[%c0_195, %c1280_196] : memref<32x1408xf32, #tpu.memory_space<vmem>>, vector<32x64xf32>
    %cst_197 = arith.constant dense<0.000000e+00> : vector<1x64xf32>
    %498 = tpu.matmul %496, %497, %cst_197 {dimension_numbers = #tpu.dot_dimension_numbers<[1], [0], [0], [1], [0, 0, 1, 1], [], []>} : vector<1x32xf32>, vector<32x64xf32>, vector<1x64xf32> -> vector<1x64xf32>
    %499 = arith.addf %498, %43 : vector<1x64xf32>
    %cst_198 = arith.constant dense<0xFF800000> : vector<1xf32>
    %500 = vector.multi_reduction <maximumf>, %499, %cst_198 [1] : vector<1x64xf32> to vector<1xf32>
    %501 = vector.shape_cast %500 : vector<1xf32> to vector<1x1xf32>
    %502 = vector.broadcast %501 : vector<1x1xf32> to vector<1x64xf32>
    %503 = arith.subf %499, %502 : vector<1x64xf32>
    %504 = math.exp %503 : vector<1x64xf32>
    %cst_199 = arith.constant dense<0.000000e+00> : vector<1xf32>
    %505 = vector.multi_reduction <add>, %504, %cst_199 [1] : vector<1x64xf32> to vector<1xf32>
    %506 = vector.shape_cast %505 : vector<1xf32> to vector<1x1xf32>
    %507 = math.log %506 : vector<1x1xf32>
    %508 = arith.addf %507, %501 : vector<1x1xf32>
    %509 = vector.broadcast %508 : vector<1x1xf32> to vector<1x64xf32>
    %510 = arith.subf %499, %509 : vector<1x64xf32>
    %c6_200 = arith.constant 6 : index
    %c0_201 = arith.constant 0 : index
    %511 = vector.load %arg7[%c6_200, %c0_201] : memref<8x384xf32, #tpu.memory_space<vmem>>, vector<1x64xf32>
    tpu.vector_store %arg7[%c6_200, %c0_201], %510 {strides = array<i32>} : memref<8x384xf32, #tpu.memory_space<vmem>>, vector<1x64xf32>,
    %c6_202 = arith.constant 6 : index
    %c128_203 = arith.constant 128 : index
    %512 = vector.load %arg7[%c6_202, %c128_203] : memref<8x384xf32, #tpu.memory_space<vmem>>, vector<1x32xf32>
    tpu.vector_store %arg7[%c6_202, %c128_203], %496 {strides = array<i32>} : memref<8x384xf32, #tpu.memory_space<vmem>>, vector<1x32xf32>,
    %c6_204 = arith.constant 6 : index
    %c256_205 = arith.constant 256 : index
    %513 = vector.load %arg7[%c6_204, %c256_205] : memref<8x384xf32, #tpu.memory_space<vmem>>, vector<1x10xf32>
    tpu.vector_store %arg7[%c6_204, %c256_205], %462 {strides = array<i32>} : memref<8x384xf32, #tpu.memory_space<vmem>>, vector<1x10xf32>,
    %514 = vector.extract_strided_slice %37 {offsets = [7, 0], sizes = [1, 256], strides = [1, 1]} : vector<8x256xf32> to vector<1x256xf32>
    %c0_206 = arith.constant 0 : index
    %c256_207 = arith.constant 256 : index
    %515 = vector.load %arg5[%c0_206, %c256_207] : memref<32x1408xf32, #tpu.memory_space<vmem>>, vector<32x512xf32>
    %cst_208 = arith.constant dense<0.000000e+00> : vector<1x512xf32>
    %516 = tpu.matmul %496, %515, %cst_208 {dimension_numbers = #tpu.dot_dimension_numbers<[1], [0], [0], [1], [0, 0, 1, 1], [], []>} : vector<1x32xf32>, vector<32x512xf32>, vector<1x512xf32> -> vector<1x512xf32>
    %517 = arith.addf %516, %41 : vector<1x512xf32>
    %518 = vector.extract_strided_slice %514 {offsets = [0, 0], sizes = [1, 10], strides = [1, 1]} : vector<1x256xf32> to vector<1x10xf32>
    %519 = vector.extract_strided_slice %517 {offsets = [0, 0], sizes = [1, 10], strides = [1, 1]} : vector<1x512xf32> to vector<1x10xf32>
    %520 = arith.addf %518, %519 : vector<1x10xf32>
    %cst_209 = arith.constant dense<0xFF800000> : vector<1xf32>
    %521 = vector.multi_reduction <maximumf>, %520, %cst_209 [1] : vector<1x10xf32> to vector<1xf32>
    %522 = vector.shape_cast %521 : vector<1xf32> to vector<1x1xf32>
    %523 = vector.broadcast %522 : vector<1x1xf32> to vector<1x10xf32>
    %524 = arith.subf %520, %523 : vector<1x10xf32>
    %525 = math.exp %524 : vector<1x10xf32>
    %cst_210 = arith.constant dense<0.000000e+00> : vector<1xf32>
    %526 = vector.multi_reduction <add>, %525, %cst_210 [1] : vector<1x10xf32> to vector<1xf32>
    %527 = vector.shape_cast %526 : vector<1xf32> to vector<1x1xf32>
    %528 = vector.broadcast %527 : vector<1x1xf32> to vector<1x10xf32>
    %529 = arith.divf %525, %528 : vector<1x10xf32>
    %530 = vector.extract_strided_slice %514 {offsets = [0, 128], sizes = [1, 32], strides = [1, 1]} : vector<1x256xf32> to vector<1x32xf32>
    %cst_211 = arith.constant dense<0.000000e+00> : vector<1x32xf32>
    %531 = tpu.matmul %529, %40, %cst_211 {dimension_numbers = #tpu.dot_dimension_numbers<[1], [0], [0], [1], [0, 0, 1, 1], [], []>} : vector<1x10xf32>, vector<10x32xf32>, vector<1x32xf32> -> vector<1x32xf32>
    %532 = arith.addf %530, %531 : vector<1x32xf32>
    %cst_212 = arith.constant 0.000000e+00 : f32
    %533 = vector.broadcast %cst_212 : f32 to vector<1x32xf32>
    %534 = arith.maximumf %532, %533 : vector<1x32xf32>
    %c0_213 = arith.constant 0 : index
    %c768_214 = arith.constant 768 : index
    %535 = vector.load %arg5[%c0_213, %c768_214] : memref<32x1408xf32, #tpu.memory_space<vmem>>, vector<32x384xf32>
    %cst_215 = arith.constant dense<0.000000e+00> : vector<1x384xf32>
    %536 = tpu.matmul %534, %535, %cst_215 {dimension_numbers = #tpu.dot_dimension_numbers<[1], [0], [0], [1], [0, 0, 1, 1], [], []>} : vector<1x32xf32>, vector<32x384xf32>, vector<1x384xf32> -> vector<1x384xf32>
    %537 = arith.addf %536, %42 : vector<1x384xf32>
    %538 = vector.extract_strided_slice %537 {offsets = [0, 0], sizes = [1, 32], strides = [1, 1]} : vector<1x384xf32> to vector<1x32xf32>
    %539 = vector.extract_strided_slice %517 {offsets = [0, 128], sizes = [1, 32], strides = [1, 1]} : vector<1x512xf32> to vector<1x32xf32>
    %540 = arith.addf %538, %539 : vector<1x32xf32>
    %541 = arith.negf %540 : vector<1x32xf32>
    %542 = math.exp %541 : vector<1x32xf32>
    %cst_216 = arith.constant 1.000000e+00 : f32
    %543 = vector.broadcast %cst_216 : f32 to vector<1x32xf32>
    %544 = arith.addf %543, %542 : vector<1x32xf32>
    %545 = arith.divf %543, %544 : vector<1x32xf32>
    %546 = vector.extract_strided_slice %537 {offsets = [0, 128], sizes = [1, 32], strides = [1, 1]} : vector<1x384xf32> to vector<1x32xf32>
    %547 = vector.extract_strided_slice %517 {offsets = [0, 256], sizes = [1, 32], strides = [1, 1]} : vector<1x512xf32> to vector<1x32xf32>
    %548 = arith.addf %546, %547 : vector<1x32xf32>
    %549 = arith.negf %548 : vector<1x32xf32>
    %550 = math.exp %549 : vector<1x32xf32>
    %cst_217 = arith.constant 1.000000e+00 : f32
    %551 = vector.broadcast %cst_217 : f32 to vector<1x32xf32>
    %552 = arith.addf %551, %550 : vector<1x32xf32>
    %553 = arith.divf %551, %552 : vector<1x32xf32>
    %554 = vector.extract_strided_slice %537 {offsets = [0, 256], sizes = [1, 32], strides = [1, 1]} : vector<1x384xf32> to vector<1x32xf32>
    %555 = vector.extract_strided_slice %517 {offsets = [0, 384], sizes = [1, 32], strides = [1, 1]} : vector<1x512xf32> to vector<1x32xf32>
    %556 = arith.mulf %545, %555 : vector<1x32xf32>
    %557 = arith.addf %554, %556 : vector<1x32xf32>
    %558 = math.tanh %557 : vector<1x32xf32>
    %cst_218 = arith.constant 1.000000e+00 : f32
    %559 = vector.broadcast %cst_218 : f32 to vector<1x32xf32>
    %560 = arith.subf %559, %553 : vector<1x32xf32>
    %561 = arith.mulf %560, %558 : vector<1x32xf32>
    %562 = arith.mulf %553, %496 : vector<1x32xf32>
    %563 = arith.addf %561, %562 : vector<1x32xf32>
    %c0_219 = arith.constant 0 : index
    %c1280_220 = arith.constant 1280 : index
    %564 = vector.load %arg5[%c0_219, %c1280_220] : memref<32x1408xf32, #tpu.memory_space<vmem>>, vector<32x64xf32>
    %cst_221 = arith.constant dense<0.000000e+00> : vector<1x64xf32>
    %565 = tpu.matmul %563, %564, %cst_221 {dimension_numbers = #tpu.dot_dimension_numbers<[1], [0], [0], [1], [0, 0, 1, 1], [], []>} : vector<1x32xf32>, vector<32x64xf32>, vector<1x64xf32> -> vector<1x64xf32>
    %566 = arith.addf %565, %43 : vector<1x64xf32>
    %cst_222 = arith.constant dense<0xFF800000> : vector<1xf32>
    %567 = vector.multi_reduction <maximumf>, %566, %cst_222 [1] : vector<1x64xf32> to vector<1xf32>
    %568 = vector.shape_cast %567 : vector<1xf32> to vector<1x1xf32>
    %569 = vector.broadcast %568 : vector<1x1xf32> to vector<1x64xf32>
    %570 = arith.subf %566, %569 : vector<1x64xf32>
    %571 = math.exp %570 : vector<1x64xf32>
    %cst_223 = arith.constant dense<0.000000e+00> : vector<1xf32>
    %572 = vector.multi_reduction <add>, %571, %cst_223 [1] : vector<1x64xf32> to vector<1xf32>
    %573 = vector.shape_cast %572 : vector<1xf32> to vector<1x1xf32>
    %574 = math.log %573 : vector<1x1xf32>
    %575 = arith.addf %574, %568 : vector<1x1xf32>
    %576 = vector.broadcast %575 : vector<1x1xf32> to vector<1x64xf32>
    %577 = arith.subf %566, %576 : vector<1x64xf32>
    %c7_224 = arith.constant 7 : index
    %c0_225 = arith.constant 0 : index
    %578 = vector.load %arg7[%c7_224, %c0_225] : memref<8x384xf32, #tpu.memory_space<vmem>>, vector<1x64xf32>
    tpu.vector_store %arg7[%c7_224, %c0_225], %577 {strides = array<i32>} : memref<8x384xf32, #tpu.memory_space<vmem>>, vector<1x64xf32>,
    %c7_226 = arith.constant 7 : index
    %c128_227 = arith.constant 128 : index
    %579 = vector.load %arg7[%c7_226, %c128_227] : memref<8x384xf32, #tpu.memory_space<vmem>>, vector<1x32xf32>
    tpu.vector_store %arg7[%c7_226, %c128_227], %563 {strides = array<i32>} : memref<8x384xf32, #tpu.memory_space<vmem>>, vector<1x32xf32>,
    %c7_228 = arith.constant 7 : index
    %c256_229 = arith.constant 256 : index
    %580 = vector.load %arg7[%c7_228, %c256_229] : memref<8x384xf32, #tpu.memory_space<vmem>>, vector<1x10xf32>
    tpu.vector_store %arg7[%c7_228, %c256_229], %529 {strides = array<i32>} : memref<8x384xf32, #tpu.memory_space<vmem>>, vector<1x10xf32>,
    return
  }
  func.func @transform_0(%arg0: i32, %arg1: memref<8xi32, #tpu.memory_space<smem>>) -> (i32, i32) {
    %c0_i32 = arith.constant 0 : i32
    %c0_i32_0 = arith.constant 0 : i32
    %c0_i32_1 = arith.constant 0 : i32
    return %c0_i32, %c0_i32_0 : i32, i32
  }
  func.func @transform_1(%arg0: i32, %arg1: memref<8xi32, #tpu.memory_space<smem>>) -> (i32, i32) {
    %c0_i32 = arith.constant 0 : i32
    %c0_i32_0 = arith.constant 0 : i32
    %c0_i32_1 = arith.constant 0 : i32
    return %c0_i32, %c0_i32_0 : i32, i32
  }
  func.func @transform_2(%arg0: i32, %arg1: memref<8xi32, #tpu.memory_space<smem>>) -> (i32, i32) {
    %c0_i32 = arith.constant 0 : i32
    %c0_i32_0 = arith.constant 0 : i32
    %c0_i32_1 = arith.constant 0 : i32
    return %c0_i32, %c0_i32_0 : i32, i32
  }
  func.func @transform_3(%arg0: i32, %arg1: memref<8xi32, #tpu.memory_space<smem>>) -> (i32, i32) {
    %c0_i32 = arith.constant 0 : i32
    %c0_i32_0 = arith.constant 0 : i32
    %c0_i32_1 = arith.constant 0 : i32
    return %c0_i32, %c0_i32_0 : i32, i32
  }
  func.func @transform_4(%arg0: i32, %arg1: memref<8xi32, #tpu.memory_space<smem>>) -> (i32, i32) {
    %c0_i32 = arith.constant 0 : i32
    %c0_i32_0 = arith.constant 0 : i32
    %c0_i32_1 = arith.constant 0 : i32
    return %c0_i32, %c0_i32_0 : i32, i32
  }
  func.func @transform_5(%arg0: i32, %arg1: memref<8xi32, #tpu.memory_space<smem>>) -> (i32, i32) {
    %c0_i32 = arith.constant 0 : i32
    %c0_i32_0 = arith.constant 0 : i32
    %c0_i32_1 = arith.constant 0 : i32
    return %c0_i32, %c0_i32_0 : i32, i32
  }
}

</mosaic_0001>

<llo_original>
// kernel: attn_decoder_decode.1
$region0: #{attn_decoder_decode.1}
  #allocation0 [shape = 'u32[]', space=smem, size = 0x4, offset = 0x4, fixed_abs, tag = 'smem constant byte address 0x4 - core index']
  #allocation1 [shape = 'u32[144,128]{1,0:T(1,128)}', space=vmem, size = 0x12000, scoped, tag = 'internal scratch']
  #allocation2 [shape = 'f32[8,32]{1,0:T(8,128)}', space=vmem, size = 0x1000, scoped, tag = 'scratch operand']
  #allocation3 [shape = 's32[1]{0}', space=sflag, size = 0x4, scoped, tag = 'scoped memory for attn_decoder_decode.1']
  #allocation4 [shape = 'u8[512]{0}', space=smem, size = 0x200, scoped, tag = 'prefetched SMEM operand 0']
  %s0 = inlined_call_operand.vmem [shape: s32[8], index: 0, kind: input, shape index: {}]
  %s1 = inlined_call_operand.vmem [shape: f32[1,32], index: 1, kind: input, shape index: {}]
  %s2 = inlined_call_operand.vmem [shape: f32[64,32], index: 2, kind: input, shape index: {}]
  %s3 = inlined_call_operand.vmem [shape: f32[10,32], index: 3, kind: input, shape index: {}]
  %s4 = inlined_call_operand.hbm [shape: f32[32,1408], index: 4, kind: input, shape index: {}]
  %s5 = inlined_call_operand.vmem [shape: f32[4,512], index: 5, kind: input, shape index: {}]
  %s6 = inlined_call_operand.vmem [shape: f32[8,384], index: 6, kind: output, shape index: {}]
  %s7 = sld [smem:[#allocation0]]
  $region34: #{attn_decoder_decode.1} parent=0
    _
  %s9 = ssub.s32 1, %s7
  %s10 = scalar_select 0, %s9, %s7
  %s11 = sshll.u32 %s0, 4
  %s12 = int_to_ptr.vmem [resolvable:$true] %s11
  %14 = dma.vmem_to_smem %s12, 16, [#allocation4], [#allocation3]
  %15 = dma.done [#allocation3], 16
  %16 = sfence
  $region1: #{attn_decoder_decode.1} parent=0
    #allocation5 [shape = 'u8[180224]{0}', space=vmem, size = 0x2c000, scoped, tag = 'input window, operand 4, single buffered']
    #allocation6 [shape = 's32[1]{0}', space=sflag, size = 0x4, scoped, tag = 'scoped memory for attn_decoder_decode.1']
    %17 = vsyncpa [#allocation6], 0
    // Predicated region
    $region2: #{attn_decoder_decode.1} parent=1 // pred_check
      _
    $region3: #{attn_decoder_decode.1} parent=1 // pred_check_branch
      %19 = sbr.rel (0) target = $region5
    $region4: #{attn_decoder_decode.1} parent=1 // pred_region
      _
    $region5: #{attn_decoder_decode.1} parent=1 // pred_fallthru
      _
    // Predicated region
    $region6: #{attn_decoder_decode.1} parent=1 // pred_check
      _
    $region7: #{attn_decoder_decode.1} parent=1 // pred_check_branch
      %21 = sbr.rel (0) target = $region9
    $region8: #{attn_decoder_decode.1} parent=1 // pred_region
      _
    $region9: #{attn_decoder_decode.1} parent=1 // pred_fallthru
      _
    // Predicated region
    $region10: #{attn_decoder_decode.1} parent=1 // pred_check
      _
    $region11: #{attn_decoder_decode.1} parent=1 // pred_check_branch
      %23 = sbr.rel (0) target = $region13
    $region12: #{attn_decoder_decode.1} parent=1 // pred_region
      _
    $region13: #{attn_decoder_decode.1} parent=1 // pred_fallthru
      _
    // Predicated region
    $region14: #{attn_decoder_decode.1} parent=1 // pred_check
      _
    $region15: #{attn_decoder_decode.1} parent=1 // pred_check_branch
      %25 = sbr.rel (0) target = $region17
    $region16: #{attn_decoder_decode.1} parent=1 // pred_region
      %s27 = ssub.s32 5632, 5632
      %28 = vsyncadd [#allocation6], %s27
      %s29 = sshll.u32 [#allocation5], 4
      %s30 = int_to_ptr.vmem [resolvable:$true] %s29
      %35 = dma.hbm_to_vmem [thread:$0]  %s4, 5632, %s30, [#allocation6], 1408, 1408, 88
    $region17: #{attn_decoder_decode.1} parent=1 // pred_fallthru
      _
    // Predicated region
    $region18: #{attn_decoder_decode.1} parent=1 // pred_check
      _
    $region19: #{attn_decoder_decode.1} parent=1 // pred_check_branch
      %37 = sbr.rel (0) target = $region21
    $region20: #{attn_decoder_decode.1} parent=1 // pred_region
      _
    $region21: #{attn_decoder_decode.1} parent=1 // pred_fallthru
      _
    // Predicated region
    $region22: #{attn_decoder_decode.1} parent=1 // pred_check
      _
    $region23: #{attn_decoder_decode.1} parent=1 // pred_check_branch
      %39 = sbr.rel (0) target = $region25
    $region24: #{attn_decoder_decode.1} parent=1 // pred_region
      %40 = dma.done [#allocation6], 5632
    $region25: #{attn_decoder_decode.1} parent=1 // pred_fallthru
      _
    %s41 = sld [smem:[#allocation4]]
    %s42 = scalar_lea.vmem %s2, %s41
    %v43 = vld [vmem:[%s42] sm:$0x1]
    %vm44 = vcmask 253952
    %45 = vst.msk [vmem:[#allocation2] sm:$0x1] %vm44, %v43
    %s46 = sld [smem:[#allocation4 + $0x1]]
    %s47 = scalar_lea.vmem %s2, %s46
    %v48 = vld [vmem:[%s47] sm:$0x1]
    %49 = vst.msk [vmem:[#allocation2 + $0x1] sm:$0x1] %vm44, %v48
    %s50 = sld [smem:[#allocation4 + $0x2]]
    %s51 = scalar_lea.vmem %s2, %s50
    %v52 = vld [vmem:[%s51] sm:$0x1]
    %53 = vst.msk [vmem:[#allocation2 + $0x2] sm:$0x1] %vm44, %v52
    %s54 = sld [smem:[#allocation4 + $0x3]]
    %s55 = scalar_lea.vmem %s2, %s54
    %v56 = vld [vmem:[%s55] sm:$0x1]
    %57 = vst.msk [vmem:[#allocation2 + $0x3] sm:$0x1] %vm44, %v56
    %s58 = sld [smem:[#allocation4 + $0x4]]
    %s59 = scalar_lea.vmem %s2, %s58
    %v60 = vld [vmem:[%s59] sm:$0x1]
    %61 = vst.msk [vmem:[#allocation2 + $0x4] sm:$0x1] %vm44, %v60
    %s62 = sld [smem:[#allocation4 + $0x5]]
    %s63 = scalar_lea.vmem %s2, %s62
    %v64 = vld [vmem:[%s63] sm:$0x1]
    %65 = vst.msk [vmem:[#allocation2 + $0x5] sm:$0x1] %vm44, %v64
    %s66 = sld [smem:[#allocation4 + $0x6]]
    %s67 = scalar_lea.vmem %s2, %s66
    %v68 = vld [vmem:[%s67] sm:$0x1]
    %69 = vst.msk [vmem:[#allocation2 + $0x6] sm:$0x1] %vm44, %v68
    %s70 = sld [smem:[#allocation4 + $0x7]]
    %s71 = scalar_lea.vmem %s2, %s70
    %v72 = vld [vmem:[%s71] sm:$0x1]
    %73 = vst.msk [vmem:[#allocation2 + $0x7] sm:$0x1] %vm44, %v72
    %v74 = vld [vmem:[#allocation2] sm:$0xff]
    %v75 = vld [vmem:[#allocation5] sm:$0xff]
    %v76 = vld [vmem:[#allocation5 + $0x8] sm:$0xff]
    %v77 = vld [vmem:[#allocation5 + $0x58] sm:$0xff]
    %v78 = vld [vmem:[#allocation5 + $0x60] sm:$0xff]
    %v79 = vld [vmem:[#allocation5 + $0xb0] sm:$0xff]
    %v80 = vld [vmem:[#allocation5 + $0xb8] sm:$0xff]
    %v81 = vld [vmem:[#allocation5 + $0x108] sm:$0xff]
    %v82 = vld [vmem:[#allocation5 + $0x110] sm:$0xff]
    %v83 = vld [vmem:[%s5] ss:$4 sm:$0x3]
    %v85 = vlaneseq
    %v86 = vshrl.u32 %v85, 7
    %v87 = vsub.s32 0, %v86
    %v88 = vrot.slane %v83, %v87
    %v89 = vlaneseq
    %v90 = vshrl.u32 %v89, 7
    %v91 = vsub.s32 1, %v90
    %v92 = vrot.slane %v83, %v91
    %vm95 = vcmask 261120
    %v97 = vsel %vm95, %v74, 0
    %99 = vmatprep.subr.mxu0 0.0
    %100 = vmatpush1.msra.mxu0 0.0
    %101 = vmatprep.subr.mxu0 0.0
    %102 = vmatpush1.msra.mxu0 0.0
    %103 = vmatprep.subr.mxu0 0.0
    %104 = vmatpush1.msra.mxu0 0.0
    %105 = vmatprep.subr.mxu0 0.0
    %106 = vmatpush1.msra.mxu0 0.0
    %107 = vmatprep.subr.mxu0 0.0
    %108 = vmatpush1.msra.mxu0 0.0
    %109 = vmatprep.subr.mxu0 0.0
    %110 = vmatpush1.msra.mxu0 0.0
    %111 = vmatprep.subr.mxu0 0.0
    %112 = vmatpush1.msra.mxu0 0.0
    %113 = vmatprep.subr.mxu0 0.0
    %114 = vmatpush1.msra.mxu0 0.0
    %115 = vmatprep.subr.mxu0 0.0
    %116 = vmatpush1.msra.mxu0 0.0
    %117 = vmatprep.subr.mxu0 0.0
    %118 = vmatpush1.msra.mxu0 0.0
    %119 = vmatprep.subr.mxu0 0.0
    %120 = vmatpush1.msra.mxu0 0.0
    %121 = vmatprep.subr.mxu0 0.0
    %122 = vmatpush1.msra.mxu0 0.0
    %123 = vmatprep.subr.mxu0 %v82
    %124 = vmatpush1.msra.mxu0 %v81
    %125 = vmatprep.subr.mxu0 %v80
    %126 = vmatpush1.msra.mxu0 %v79
    %127 = vmatprep.subr.mxu0 %v78
    %128 = vmatpush1.msra.mxu0 %v77
    %129 = vmatprep.subr.mxu0 %v76
    %130 = vmatpush1.msra.mxu0 %v75
    %131 = vmatprep.subr.mxu0 0.0
    %132 = vmatpush2.msra.mxu0 0.0
    %133 = vmatprep.subr.mxu0 0.0
    %134 = vmatpush2.msra.mxu0 0.0
    %135 = vmatprep.subr.mxu0 0.0
    %136 = vmatpush2.msra.mxu0 0.0
    %137 = vmatprep.subr.mxu0 0.0
    %138 = vmatpush2.msra.mxu0 0.0
    %139 = vmatprep.subr.mxu0 0.0
    %140 = vmatpush2.msra.mxu0 0.0
    %141 = vmatprep.subr.mxu0 0.0
    %142 = vmatpush2.msra.mxu0 0.0
    %143 = vmatprep.subr.mxu0 0.0
    %144 = vmatpush2.msra.mxu0 0.0
    %145 = vmatprep.subr.mxu0 0.0
    %146 = vmatpush2.msra.mxu0 0.0
    %147 = vmatprep.subr.mxu0 0.0
    %148 = vmatpush2.msra.mxu0 0.0
    %149 = vmatprep.subr.mxu0 0.0
    %150 = vmatpush2.msra.mxu0 0.0
    %151 = vmatprep.subr.mxu0 0.0
    %152 = vmatpush2.msra.mxu0 0.0
    %153 = vmatprep.subr.mxu0 0.0
    %154 = vmatpush2.msra.mxu0 0.0
    %155 = vmatprep.subr.mxu0 0.0
    %156 = vmatpush2.msra.mxu0 0.0
    %157 = vmatprep.subr.mxu0 0.0
    %158 = vmatpush2.msra.mxu0 0.0
    %159 = vmatprep.subr.mxu0 0.0
    %160 = vmatpush2.msra.mxu0 0.0
    %161 = vmatprep.subr.mxu0 0.0
    %162 = vmatpush2.msra.mxu0 0.0
    %163 = vmatprep.mubr.f32.mxu0 0.0
    %164 = vmatmul.mubr.f32.gmra.mxu0 %v97
    %v165 = vpop.f32.mrf.mxu0
    %v166 = vadd.f32 %v88, %v165
    %v167 = vpop.f32.mrf.mxu0
    %v168 = vadd.f32 %v92, %v167
    %169 = vdwg.mxu0
    %v170 = vld [vmem:[%s3] sm:$0xff]
    %v171 = vld [vmem:[%s3 + $0x8] sm:$0x3]
    %v172 = vld [vmem:[#allocation5 + $0x48] sm:$0xff]
    %v173 = vld [vmem:[#allocation5 + $0xa0] sm:$0xff]
    %v174 = vld [vmem:[#allocation5 + $0xf8] sm:$0xff]
    %v175 = vld [vmem:[#allocation5 + $0x150] sm:$0xff]
    %v177 = vsel %vm95, %v170, 0
    %v180 = vsel %vm95, %v171, 0
    %182 = vmatprep.subr.mxu0 0.0
    %183 = vmatpush1.msra.mxu0 0.0
    %184 = vmatprep.subr.mxu0 0.0
    %185 = vmatpush1.msra.mxu0 0.0
    %186 = vmatprep.subr.mxu0 0.0
    %187 = vmatpush1.msra.mxu0 0.0
    %188 = vmatprep.subr.mxu0 0.0
    %189 = vmatpush1.msra.mxu0 0.0
    %190 = vmatprep.subr.mxu0 0.0
    %191 = vmatpush1.msra.mxu0 0.0
    %192 = vmatprep.subr.mxu0 0.0
    %193 = vmatpush1.msra.mxu0 0.0
    %194 = vmatprep.subr.mxu0 0.0
    %195 = vmatpush1.msra.mxu0 0.0
    %196 = vmatprep.subr.mxu0 0.0
    %197 = vmatpush1.msra.mxu0 0.0
    %198 = vmatprep.subr.mxu0 0.0
    %199 = vmatpush1.msra.mxu0 0.0
    %200 = vmatprep.subr.mxu0 0.0
    %201 = vmatpush1.msra.mxu0 0.0
    %202 = vmatprep.subr.mxu0 0.0
    %203 = vmatpush1.msra.mxu0 0.0
    %204 = vmatprep.subr.mxu0 0.0
    %205 = vmatpush1.msra.mxu0 0.0
    %206 = vmatprep.subr.mxu0 0.0
    %207 = vmatpush1.msra.mxu0 %v175
    %208 = vmatprep.subr.mxu0 0.0
    %209 = vmatpush1.msra.mxu0 %v174
    %210 = vmatprep.subr.mxu0 0.0
    %211 = vmatpush1.msra.mxu0 %v173
    %212 = vmatprep.subr.mxu0 0.0
    %213 = vmatpush1.msra.mxu0 %v172
    %214 = vmatprep.subr.mxu0 0.0
    %215 = vmatpush2.msra.mxu0 0.0
    %216 = vmatprep.subr.mxu0 0.0
    %217 = vmatpush2.msra.mxu0 0.0
    %218 = vmatprep.subr.mxu0 0.0
    %219 = vmatpush2.msra.mxu0 0.0
    %220 = vmatprep.subr.mxu0 0.0
    %221 = vmatpush2.msra.mxu0 0.0
    %222 = vmatprep.subr.mxu0 0.0
    %223 = vmatpush2.msra.mxu0 0.0
    %224 = vmatprep.subr.mxu0 0.0
    %225 = vmatpush2.msra.mxu0 0.0
    %226 = vmatprep.subr.mxu0 0.0
    %227 = vmatpush2.msra.mxu0 0.0
    %228 = vmatprep.subr.mxu0 0.0
    %229 = vmatpush2.msra.mxu0 0.0
    %230 = vmatprep.subr.mxu0 0.0
    %231 = vmatpush2.msra.mxu0 0.0
    %232 = vmatprep.subr.mxu0 0.0
    %233 = vmatpush2.msra.mxu0 0.0
    %234 = vmatprep.subr.mxu0 0.0
    %235 = vmatpush2.msra.mxu0 0.0
    %236 = vmatprep.subr.mxu0 0.0
    %237 = vmatpush2.msra.mxu0 0.0
    %238 = vmatprep.subr.mxu0 0.0
    %239 = vmatpush2.msra.mxu0 0.0
    %240 = vmatprep.subr.mxu0 0.0
    %241 = vmatpush2.msra.mxu0 0.0
    %242 = vmatprep.subr.mxu0 0.0
    %243 = vmatpush2.msra.mxu0 0.0
    %244 = vmatprep.subr.mxu0 0.0
    %245 = vmatpush2.msra.mxu0 0.0
    %246 = vmatprep.mubr.f32.mxu0 0.0
    %247 = vmatmul.mubr.f32.gmra.mxu0 %v177
    %v248 = vpop.f32.mrf.mxu0
    %v249 = vadd.f32 0.0, %v248
    %v250 = vpop.f32.mrf.mxu0
    %251 = vmatprep.mubr.f32.mxu0 0.0
    %252 = vmatmul.mubr.f32.gmra.mxu0 %v180
    %v253 = vpop.f32.mrf.mxu0
    %v254 = vadd.f32 0.0, %v253
    %v255 = vpop.f32.mrf.mxu0
    %256 = vdwg.mxu0
    %s257 = scalar_lea.vmem %s5, 1
    %v258 = vld [vmem:[%s257] ss:$4 sm:$0xf]
    %s259 = scalar_lea.vmem %s5, 2
    %v260 = vld [vmem:[%s259] ss:$4 sm:$0x7]
    %v261 = vld [vmem:[%s5 + $0x3] sm:$0x1]
    %v262 = vld [vmem:[%s1] sm:$0x1]
    %v263 = vld [vmem:[#allocation5 + $0x10] sm:$0xff]
    %v264 = vld [vmem:[#allocation5 + $0x18] sm:$0xff]
    %v265 = vld [vmem:[#allocation5 + $0x20] sm:$0xff]
    %v266 = vld [vmem:[#allocation5 + $0x28] sm:$0xff]
    %v267 = vld [vmem:[#allocation5 + $0x68] sm:$0xff]
    %v268 = vld [vmem:[#allocation5 + $0x70] sm:$0xff]
    %v269 = vld [vmem:[#allocation5 + $0x78] sm:$0xff]
    %v270 = vld [vmem:[#allocation5 + $0x80] sm:$0xff]
    %v271 = vld [vmem:[#allocation5 + $0xc0] sm:$0xff]
    %v272 = vld [vmem:[#allocation5 + $0xc8] sm:$0xff]
    %v273 = vld [vmem:[#allocation5 + $0xd0] sm:$0xff]
    %v274 = vld [vmem:[#allocation5 + $0xd8] sm:$0xff]
    %v275 = vld [vmem:[#allocation5 + $0x118] sm:$0xff]
    %v276 = vld [vmem:[#allocation5 + $0x120] sm:$0xff]
    %v277 = vld [vmem:[#allocation5 + $0x128] sm:$0xff]
    %v278 = vld [vmem:[#allocation5 + $0x130] sm:$0xff]
    %v280 = vlaneseq
    %v281 = vshrl.u32 %v280, 7
    %v282 = vsub.s32 0, %v281
    %v283 = vrot.slane %v258, %v282
    %v284 = vlaneseq
    %v285 = vshrl.u32 %v284, 7
    %v286 = vsub.s32 1, %v285
    %v287 = vrot.slane %v258, %v286
    %v288 = vlaneseq
    %v289 = vshrl.u32 %v288, 7
    %v290 = vsub.s32 2, %v289
    %v291 = vrot.slane %v258, %v290
    %v292 = vlaneseq
    %v293 = vshrl.u32 %v292, 7
    %v294 = vsub.s32 3, %v293
    %v295 = vrot.slane %v258, %v294
    %v301 = vsel %vm95, %v262, 0
    %303 = vmatprep.subr.mxu0 0.0
    %304 = vmatpush1.msra.mxu0 0.0
    %305 = vmatprep.subr.mxu0 0.0
    %306 = vmatpush1.msra.mxu0 0.0
    %307 = vmatprep.subr.mxu0 0.0
    %308 = vmatpush1.msra.mxu0 0.0
    %309 = vmatprep.subr.mxu0 0.0
    %310 = vmatpush1.msra.mxu0 0.0
    %311 = vmatprep.subr.mxu0 0.0
    %312 = vmatpush1.msra.mxu0 0.0
    %313 = vmatprep.subr.mxu0 0.0
    %314 = vmatpush1.msra.mxu0 0.0
    %315 = vmatprep.subr.mxu0 0.0
    %316 = vmatpush1.msra.mxu0 0.0
    %317 = vmatprep.subr.mxu0 0.0
    %318 = vmatpush1.msra.mxu0 0.0
    %319 = vmatprep.subr.mxu0 0.0
    %320 = vmatpush1.msra.mxu0 0.0
    %321 = vmatprep.subr.mxu0 0.0
    %322 = vmatpush1.msra.mxu0 0.0
    %323 = vmatprep.subr.mxu0 0.0
    %324 = vmatpush1.msra.mxu0 0.0
    %325 = vmatprep.subr.mxu0 0.0
    %326 = vmatpush1.msra.mxu0 0.0
    %327 = vmatprep.subr.mxu0 %v276
    %328 = vmatpush1.msra.mxu0 %v275
    %329 = vmatprep.subr.mxu0 %v272
    %330 = vmatpush1.msra.mxu0 %v271
    %331 = vmatprep.subr.mxu0 %v268
    %332 = vmatpush1.msra.mxu0 %v267
    %333 = vmatprep.subr.mxu0 %v264
    %334 = vmatpush1.msra.mxu0 %v263
    %335 = vmatprep.subr.mxu0 0.0
    %336 = vmatpush2.msra.mxu0 0.0
    %337 = vmatprep.subr.mxu0 0.0
    %338 = vmatpush2.msra.mxu0 0.0
    %339 = vmatprep.subr.mxu0 0.0
    %340 = vmatpush2.msra.mxu0 0.0
    %341 = vmatprep.subr.mxu0 0.0
    %342 = vmatpush2.msra.mxu0 0.0
    %343 = vmatprep.subr.mxu0 0.0
    %344 = vmatpush2.msra.mxu0 0.0
    %345 = vmatprep.subr.mxu0 0.0
    %346 = vmatpush2.msra.mxu0 0.0
    %347 = vmatprep.subr.mxu0 0.0
    %348 = vmatpush2.msra.mxu0 0.0
    %349 = vmatprep.subr.mxu0 0.0
    %350 = vmatpush2.msra.mxu0 0.0
    %351 = vmatprep.subr.mxu0 0.0
    %352 = vmatpush2.msra.mxu0 0.0
    %353 = vmatprep.subr.mxu0 0.0
    %354 = vmatpush2.msra.mxu0 0.0
    %355 = vmatprep.subr.mxu0 0.0
    %356 = vmatpush2.msra.mxu0 0.0
    %357 = vmatprep.subr.mxu0 0.0
    %358 = vmatpush2.msra.mxu0 0.0
    %359 = vmatprep.subr.mxu0 0.0
    %360 = vmatpush2.msra.mxu0 0.0
    %361 = vmatprep.subr.mxu0 0.0
    %362 = vmatpush2.msra.mxu0 0.0
    %363 = vmatprep.subr.mxu0 0.0
    %364 = vmatpush2.msra.mxu0 0.0
    %365 = vmatprep.subr.mxu0 0.0
    %366 = vmatpush2.msra.mxu0 0.0
    %367 = vmatprep.mubr.f32.mxu0 0.0
    %368 = vmatmul.mubr.f32.gmra.mxu0 %v301
    %v369 = vpop.f32.mrf.mxu0
    %v370 = vadd.f32 %v283, %v369
    %v371 = vpop.f32.mrf.mxu0
    %v372 = vadd.f32 %v287, %v371
    %373 = vdwg.mxu0
    %374 = vmatprep.subr.mxu0 0.0
    %375 = vmatpush1.msra.mxu0 0.0
    %376 = vmatprep.subr.mxu0 0.0
    %377 = vmatpush1.msra.mxu0 0.0
    %378 = vmatprep.subr.mxu0 0.0
    %379 = vmatpush1.msra.mxu0 0.0
    %380 = vmatprep.subr.mxu0 0.0
    %381 = vmatpush1.msra.mxu0 0.0
    %382 = vmatprep.subr.mxu0 0.0
    %383 = vmatpush1.msra.mxu0 0.0
    %384 = vmatprep.subr.mxu0 0.0
    %385 = vmatpush1.msra.mxu0 0.0
    %386 = vmatprep.subr.mxu0 0.0
    %387 = vmatpush1.msra.mxu0 0.0
    %388 = vmatprep.subr.mxu0 0.0
    %389 = vmatpush1.msra.mxu0 0.0
    %390 = vmatprep.subr.mxu0 0.0
    %391 = vmatpush1.msra.mxu0 0.0
    %392 = vmatprep.subr.mxu0 0.0
    %393 = vmatpush1.msra.mxu0 0.0
    %394 = vmatprep.subr.mxu0 0.0
    %395 = vmatpush1.msra.mxu0 0.0
    %396 = vmatprep.subr.mxu0 0.0
    %397 = vmatpush1.msra.mxu0 0.0
    %398 = vmatprep.subr.mxu0 %v278
    %399 = vmatpush1.msra.mxu0 %v277
    %400 = vmatprep.subr.mxu0 %v274
    %401 = vmatpush1.msra.mxu0 %v273
    %402 = vmatprep.subr.mxu0 %v270
    %403 = vmatpush1.msra.mxu0 %v269
    %404 = vmatprep.subr.mxu0 %v266
    %405 = vmatpush1.msra.mxu0 %v265
    %406 = vmatprep.subr.mxu0 0.0
    %407 = vmatpush2.msra.mxu0 0.0
    %408 = vmatprep.subr.mxu0 0.0
    %409 = vmatpush2.msra.mxu0 0.0
    %410 = vmatprep.subr.mxu0 0.0
    %411 = vmatpush2.msra.mxu0 0.0
    %412 = vmatprep.subr.mxu0 0.0
    %413 = vmatpush2.msra.mxu0 0.0
    %414 = vmatprep.subr.mxu0 0.0
    %415 = vmatpush2.msra.mxu0 0.0
    %416 = vmatprep.subr.mxu0 0.0
    %417 = vmatpush2.msra.mxu0 0.0
    %418 = vmatprep.subr.mxu0 0.0
    %419 = vmatpush2.msra.mxu0 0.0
    %420 = vmatprep.subr.mxu0 0.0
    %421 = vmatpush2.msra.mxu0 0.0
    %422 = vmatprep.subr.mxu0 0.0
    %423 = vmatpush2.msra.mxu0 0.0
    %424 = vmatprep.subr.mxu0 0.0
    %425 = vmatpush2.msra.mxu0 0.0
    %426 = vmatprep.subr.mxu0 0.0
    %427 = vmatpush2.msra.mxu0 0.0
    %428 = vmatprep.subr.mxu0 0.0
    %429 = vmatpush2.msra.mxu0 0.0
    %430 = vmatprep.subr.mxu0 0.0
    %431 = vmatpush2.msra.mxu0 0.0
    %432 = vmatprep.subr.mxu0 0.0
    %433 = vmatpush2.msra.mxu0 0.0
    %434 = vmatprep.subr.mxu0 0.0
    %435 = vmatpush2.msra.mxu0 0.0
    %436 = vmatprep.subr.mxu0 0.0
    %437 = vmatpush2.msra.mxu0 0.0
    %438 = vmatprep.mubr.f32.mxu0 0.0
    %439 = vmatmul.mubr.f32.gmra.mxu0 %v301
    %v440 = vpop.f32.mrf.mxu0
    %v441 = vadd.f32 %v291, %v440
    %v442 = vpop.f32.mrf.mxu0
    %v443 = vadd.f32 %v295, %v442
    %444 = vdwg.mxu0
    %v445 = vadd.f32 %v166, %v370
    %vm446 = vcmask 73728
    %v447 = vsel %vm446, %v445, -inf
    %448 = vmax.xlane.f32.xlu0 %v447
    %v449 = vpop.xlane.xlu0 %448
    %v450 = vsub.f32 %v445, %v449
    %v451 = vmul.f32 %v450, 1.442695
    %v452 = vpow.pop %v451
    %v453 = vsel %vm446, %v452, 0.0
    %454 = vadd.xlane.f32.xlu0 %v453
    %v455 = vpop.xlane.xlu0 %454
    %v456 = vrcp.pop %v455
    %v457 = vmul.f32 %v452, %v456
    %vm458 = vcmask 80896
    %v460 = vsel %vm458, %v457, 0
    %vm462 = vcmask 1041408
    %v464 = vsel %vm462, %v254, 0
    %466 = vmatprep.subr.mxu0 0.0
    %467 = vmatpush1.msra.mxu0 0.0
    %468 = vmatprep.subr.mxu0 0.0
    %469 = vmatpush1.msra.mxu0 0.0
    %470 = vmatprep.subr.mxu0 0.0
    %471 = vmatpush1.msra.mxu0 0.0
    %472 = vmatprep.subr.mxu0 0.0
    %473 = vmatpush1.msra.mxu0 0.0
    %474 = vmatprep.subr.mxu0 0.0
    %475 = vmatpush1.msra.mxu0 0.0
    %476 = vmatprep.subr.mxu0 0.0
    %477 = vmatpush1.msra.mxu0 0.0
    %478 = vmatprep.subr.mxu0 0.0
    %479 = vmatpush1.msra.mxu0 0.0
    %480 = vmatprep.subr.mxu0 0.0
    %481 = vmatpush1.msra.mxu0 0.0
    %482 = vmatprep.subr.mxu0 0.0
    %483 = vmatpush1.msra.mxu0 0.0
    %484 = vmatprep.subr.mxu0 0.0
    %485 = vmatpush1.msra.mxu0 0.0
    %486 = vmatprep.subr.mxu0 0.0
    %487 = vmatpush1.msra.mxu0 0.0
    %488 = vmatprep.subr.mxu0 0.0
    %489 = vmatpush1.msra.mxu0 0.0
    %490 = vmatprep.subr.mxu0 0.0
    %491 = vmatpush1.msra.mxu0 0.0
    %492 = vmatprep.subr.mxu0 0.0
    %493 = vmatpush1.msra.mxu0 0.0
    %494 = vmatprep.subr.mxu0 0.0
    %495 = vmatpush1.msra.mxu0 %v464
    %496 = vmatprep.subr.mxu0 0.0
    %497 = vmatpush1.msra.mxu0 %v249
    %498 = vmatprep.subr.mxu0 0.0
    %499 = vmatpush2.msra.mxu0 0.0
    %500 = vmatprep.subr.mxu0 0.0
    %501 = vmatpush2.msra.mxu0 0.0
    %502 = vmatprep.subr.mxu0 0.0
    %503 = vmatpush2.msra.mxu0 0.0
    %504 = vmatprep.subr.mxu0 0.0
    %505 = vmatpush2.msra.mxu0 0.0
    %506 = vmatprep.subr.mxu0 0.0
    %507 = vmatpush2.msra.mxu0 0.0
    %508 = vmatprep.subr.mxu0 0.0
    %509 = vmatpush2.msra.mxu0 0.0
    %510 = vmatprep.subr.mxu0 0.0
    %511 = vmatpush2.msra.mxu0 0.0
    %512 = vmatprep.subr.mxu0 0.0
    %513 = vmatpush2.msra.mxu0 0.0
    %514 = vmatprep.subr.mxu0 0.0
    %515 = vmatpush2.msra.mxu0 0.0
    %516 = vmatprep.subr.mxu0 0.0
    %517 = vmatpush2.msra.mxu0 0.0
    %518 = vmatprep.subr.mxu0 0.0
    %519 = vmatpush2.msra.mxu0 0.0
    %520 = vmatprep.subr.mxu0 0.0
    %521 = vmatpush2.msra.mxu0 0.0
    %522 = vmatprep.subr.mxu0 0.0
    %523 = vmatpush2.msra.mxu0 0.0
    %524 = vmatprep.subr.mxu0 0.0
    %525 = vmatpush2.msra.mxu0 0.0
    %526 = vmatprep.subr.mxu0 0.0
    %527 = vmatpush2.msra.mxu0 0.0
    %528 = vmatprep.subr.mxu0 0.0
    %529 = vmatpush2.msra.mxu0 0.0
    %530 = vmatprep.mubr.f32.mxu0 0.0
    %531 = vmatmul.mubr.f32.gmra.mxu0 %v460
    %v532 = vpop.f32.mrf.mxu0
    %v533 = vadd.f32 0.0, %v532
    %v534 = vpop.f32.mrf.mxu0
    %535 = vdwg.mxu0
    %v536 = vadd.f32 %v168, %v533
    %v537 = vmax.f32 %v536, 0.0
    %v538 = vld [vmem:[#allocation5 + $0x30] sm:$0xff]
    %v539 = vld [vmem:[#allocation5 + $0x38] sm:$0xff]
    %v540 = vld [vmem:[#allocation5 + $0x40] sm:$0xff]
    %v541 = vld [vmem:[#allocation5 + $0x88] sm:$0xff]
    %v542 = vld [vmem:[#allocation5 + $0x90] sm:$0xff]
    %v543 = vld [vmem:[#allocation5 + $0x98] sm:$0xff]
    %v544 = vld [vmem:[#allocation5 + $0xe0] sm:$0xff]
    %v545 = vld [vmem:[#allocation5 + $0xe8] sm:$0xff]
    %v546 = vld [vmem:[#allocation5 + $0xf0] sm:$0xff]
    %v547 = vld [vmem:[#allocation5 + $0x138] sm:$0xff]
    %v548 = vld [vmem:[#allocation5 + $0x140] sm:$0xff]
    %v549 = vld [vmem:[#allocation5 + $0x148] sm:$0xff]
    %v551 = vlaneseq
    %v552 = vshrl.u32 %v551, 7
    %v553 = vsub.s32 0, %v552
    %v554 = vrot.slane %v260, %v553
    %v555 = vlaneseq
    %v556 = vshrl.u32 %v555, 7
    %v557 = vsub.s32 1, %v556
    %v558 = vrot.slane %v260, %v557
    %v559 = vlaneseq
    %v560 = vshrl.u32 %v559, 7
    %v561 = vsub.s32 2, %v560
    %v562 = vrot.slane %v260, %v561
    %v567 = vsel %vm95, %v537, 0
    %569 = vmatprep.subr.mxu0 0.0
    %570 = vmatpush1.msra.mxu0 0.0
    %571 = vmatprep.subr.mxu0 0.0
    %572 = vmatpush1.msra.mxu0 0.0
    %573 = vmatprep.subr.mxu0 0.0
    %574 = vmatpush1.msra.mxu0 0.0
    %575 = vmatprep.subr.mxu0 0.0
    %576 = vmatpush1.msra.mxu0 0.0
    %577 = vmatprep.subr.mxu0 0.0
    %578 = vmatpush1.msra.mxu0 0.0
    %579 = vmatprep.subr.mxu0 0.0
    %580 = vmatpush1.msra.mxu0 0.0
    %581 = vmatprep.subr.mxu0 0.0
    %582 = vmatpush1.msra.mxu0 0.0
    %583 = vmatprep.subr.mxu0 0.0
    %584 = vmatpush1.msra.mxu0 0.0
    %585 = vmatprep.subr.mxu0 0.0
    %586 = vmatpush1.msra.mxu0 0.0
    %587 = vmatprep.subr.mxu0 0.0
    %588 = vmatpush1.msra.mxu0 0.0
    %589 = vmatprep.subr.mxu0 0.0
    %590 = vmatpush1.msra.mxu0 0.0
    %591 = vmatprep.subr.mxu0 0.0
    %592 = vmatpush1.msra.mxu0 0.0
    %593 = vmatprep.subr.mxu0 %v548
    %594 = vmatpush1.msra.mxu0 %v547
    %595 = vmatprep.subr.mxu0 %v545
    %596 = vmatpush1.msra.mxu0 %v544
    %597 = vmatprep.subr.mxu0 %v542
    %598 = vmatpush1.msra.mxu0 %v541
    %599 = vmatprep.subr.mxu0 %v539
    %600 = vmatpush1.msra.mxu0 %v538
    %601 = vmatprep.subr.mxu0 0.0
    %602 = vmatpush2.msra.mxu0 0.0
    %603 = vmatprep.subr.mxu0 0.0
    %604 = vmatpush2.msra.mxu0 0.0
    %605 = vmatprep.subr.mxu0 0.0
    %606 = vmatpush2.msra.mxu0 0.0
    %607 = vmatprep.subr.mxu0 0.0
    %608 = vmatpush2.msra.mxu0 0.0
    %609 = vmatprep.subr.mxu0 0.0
    %610 = vmatpush2.msra.mxu0 0.0
    %611 = vmatprep.subr.mxu0 0.0
    %612 = vmatpush2.msra.mxu0 0.0
    %613 = vmatprep.subr.mxu0 0.0
    %614 = vmatpush2.msra.mxu0 0.0
    %615 = vmatprep.subr.mxu0 0.0
    %616 = vmatpush2.msra.mxu0 0.0
    %617 = vmatprep.subr.mxu0 0.0
    %618 = vmatpush2.msra.mxu0 0.0
    %619 = vmatprep.subr.mxu0 0.0
    %620 = vmatpush2.msra.mxu0 0.0
    %621 = vmatprep.subr.mxu0 0.0
    %622 = vmatpush2.msra.mxu0 0.0
    %623 = vmatprep.subr.mxu0 0.0
    %624 = vmatpush2.msra.mxu0 0.0
    %625 = vmatprep.subr.mxu0 0.0
    %626 = vmatpush2.msra.mxu0 0.0
    %627 = vmatprep.subr.mxu0 0.0
    %628 = vmatpush2.msra.mxu0 0.0
    %629 = vmatprep.subr.mxu0 0.0
    %630 = vmatpush2.msra.mxu0 0.0
    %631 = vmatprep.subr.mxu0 0.0
    %632 = vmatpush2.msra.mxu0 0.0
    %633 = vmatprep.mubr.f32.mxu0 0.0
    %634 = vmatmul.mubr.f32.gmra.mxu0 %v567
    %v635 = vpop.f32.mrf.mxu0
    %v636 = vadd.f32 %v554, %v635
    %v637 = vpop.f32.mrf.mxu0
    %v638 = vadd.f32 %v558, %v637
    %639 = vdwg.mxu0
    %640 = vmatprep.subr.mxu0 0.0
    %641 = vmatpush1.msra.mxu0 0.0
    %642 = vmatprep.subr.mxu0 0.0
    %643 = vmatpush1.msra.mxu0 0.0
    %644 = vmatprep.subr.mxu0 0.0
    %645 = vmatpush1.msra.mxu0 0.0
    %646 = vmatprep.subr.mxu0 0.0
    %647 = vmatpush1.msra.mxu0 0.0
    %648 = vmatprep.subr.mxu0 0.0
    %649 = vmatpush1.msra.mxu0 0.0
    %650 = vmatprep.subr.mxu0 0.0
    %651 = vmatpush1.msra.mxu0 0.0
    %652 = vmatprep.subr.mxu0 0.0
    %653 = vmatpush1.msra.mxu0 0.0
    %654 = vmatprep.subr.mxu0 0.0
    %655 = vmatpush1.msra.mxu0 0.0
    %656 = vmatprep.subr.mxu0 0.0
    %657 = vmatpush1.msra.mxu0 0.0
    %658 = vmatprep.subr.mxu0 0.0
    %659 = vmatpush1.msra.mxu0 0.0
    %660 = vmatprep.subr.mxu0 0.0
    %661 = vmatpush1.msra.mxu0 0.0
    %662 = vmatprep.subr.mxu0 0.0
    %663 = vmatpush1.msra.mxu0 0.0
    %664 = vmatprep.subr.mxu0 0.0
    %665 = vmatpush1.msra.mxu0 %v549
    %666 = vmatprep.subr.mxu0 0.0
    %667 = vmatpush1.msra.mxu0 %v546
    %668 = vmatprep.subr.mxu0 0.0
    %669 = vmatpush1.msra.mxu0 %v543
    %670 = vmatprep.subr.mxu0 0.0
    %671 = vmatpush1.msra.mxu0 %v540
    %672 = vmatprep.subr.mxu0 0.0
    %673 = vmatpush2.msra.mxu0 0.0
    %674 = vmatprep.subr.mxu0 0.0
    %675 = vmatpush2.msra.mxu0 0.0
    %676 = vmatprep.subr.mxu0 0.0
    %677 = vmatpush2.msra.mxu0 0.0
    %678 = vmatprep.subr.mxu0 0.0
    %679 = vmatpush2.msra.mxu0 0.0
    %680 = vmatprep.subr.mxu0 0.0
    %681 = vmatpush2.msra.mxu0 0.0
    %682 = vmatprep.subr.mxu0 0.0
    %683 = vmatpush2.msra.mxu0 0.0
    %684 = vmatprep.subr.mxu0 0.0
    %685 = vmatpush2.msra.mxu0 0.0
    %686 = vmatprep.subr.mxu0 0.0
    %687 = vmatpush2.msra.mxu0 0.0
    %688 = vmatprep.subr.mxu0 0.0
    %689 = vmatpush2.msra.mxu0 0.0
    %690 = vmatprep.subr.mxu0 0.0
    %691 = vmatpush2.msra.mxu0 0.0
    %692 = vmatprep.subr.mxu0 0.0
    %693 = vmatpush2.msra.mxu0 0.0
    %694 = vmatprep.subr.mxu0 0.0
    %695 = vmatpush2.msra.mxu0 0.0
    %696 = vmatprep.subr.mxu0 0.0
    %697 = vmatpush2.msra.mxu0 0.0
    %698 = vmatprep.subr.mxu0 0.0
    %699 = vmatpush2.msra.mxu0 0.0
    %700 = vmatprep.subr.mxu0 0.0
    %701 = vmatpush2.msra.mxu0 0.0
    %702 = vmatprep.subr.mxu0 0.0
    %703 = vmatpush2.msra.mxu0 0.0
    %704 = vmatprep.mubr.f32.mxu0 0.0
    %705 = vmatmul.mubr.f32.gmra.mxu0 %v567
    %v706 = vpop.f32.mrf.mxu0
    %v707 = vadd.f32 %v562, %v706
    %v708 = vpop.f32.mrf.mxu0
    %709 = vdwg.mxu0
    %v710 = vadd.f32 %v636, %v372
    %v711 = vxor.u32 %v710, 2147483648
    %v712 = vmul.f32 %v711, 1.442695
    %v713 = vpow.pop %v712
    %v714 = vadd.f32 %v713, 1.0
    %v715 = vrcp.pop %v714
    %v716 = vmul.f32 1.0, %v715
    %v717 = vadd.f32 %v638, %v441
    %v718 = vxor.u32 %v717, 2147483648
    %v719 = vmul.f32 %v718, 1.442695
    %v720 = vpow.pop %v719
    %v721 = vadd.f32 %v720, 1.0
    %v722 = vrcp.pop %v721
    %v723 = vmul.f32 1.0, %v722
    %v724 = vmul.f32 %v716, %v443
    %v725 = vadd.f32 %v707, %v724
    %v726 = vtanh.pop %v725
    %v727 = vsub.f32 1.0, %v723
    %v728 = vmul.f32 %v727, %v726
    %v729 = vmul.f32 %v723, %v262
    %v730 = vadd.f32 %v728, %v729
    %v731 = vld [vmem:[#allocation5 + $0x50] sm:$0xff]
    %v732 = vld [vmem:[#allocation5 + $0xa8] sm:$0xff]
    %v733 = vld [vmem:[#allocation5 + $0x100] sm:$0xff]
    %v734 = vld [vmem:[#allocation5 + $0x158] sm:$0xff]
    %v736 = vsel %vm95, %v730, 0
    %738 = vmatprep.subr.mxu0 0.0
    %739 = vmatpush1.msra.mxu0 0.0
    %740 = vmatprep.subr.mxu0 0.0
    %741 = vmatpush1.msra.mxu0 0.0
    %742 = vmatprep.subr.mxu0 0.0
    %743 = vmatpush1.msra.mxu0 0.0
    %744 = vmatprep.subr.mxu0 0.0
    %745 = vmatpush1.msra.mxu0 0.0
    %746 = vmatprep.subr.mxu0 0.0
    %747 = vmatpush1.msra.mxu0 0.0
    %748 = vmatprep.subr.mxu0 0.0
    %749 = vmatpush1.msra.mxu0 0.0
    %750 = vmatprep.subr.mxu0 0.0
    %751 = vmatpush1.msra.mxu0 0.0
    %752 = vmatprep.subr.mxu0 0.0
    %753 = vmatpush1.msra.mxu0 0.0
    %754 = vmatprep.subr.mxu0 0.0
    %755 = vmatpush1.msra.mxu0 0.0
    %756 = vmatprep.subr.mxu0 0.0
    %757 = vmatpush1.msra.mxu0 0.0
    %758 = vmatprep.subr.mxu0 0.0
    %759 = vmatpush1.msra.mxu0 0.0
    %760 = vmatprep.subr.mxu0 0.0
    %761 = vmatpush1.msra.mxu0 0.0
    %762 = vmatprep.subr.mxu0 0.0
    %763 = vmatpush1.msra.mxu0 %v734
    %764 = vmatprep.subr.mxu0 0.0
    %765 = vmatpush1.msra.mxu0 %v733
    %766 = vmatprep.subr.mxu0 0.0
    %767 = vmatpush1.msra.mxu0 %v732
    %768 = vmatprep.subr.mxu0 0.0
    %769 = vmatpush1.msra.mxu0 %v731
    %770 = vmatprep.subr.mxu0 0.0
    %771 = vmatpush2.msra.mxu0 0.0
    %772 = vmatprep.subr.mxu0 0.0
    %773 = vmatpush2.msra.mxu0 0.0
    %774 = vmatprep.subr.mxu0 0.0
    %775 = vmatpush2.msra.mxu0 0.0
    %776 = vmatprep.subr.mxu0 0.0
    %777 = vmatpush2.msra.mxu0 0.0
    %778 = vmatprep.subr.mxu0 0.0
    %779 = vmatpush2.msra.mxu0 0.0
    %780 = vmatprep.subr.mxu0 0.0
    %781 = vmatpush2.msra.mxu0 0.0
    %782 = vmatprep.subr.mxu0 0.0
    %783 = vmatpush2.msra.mxu0 0.0
    %784 = vmatprep.subr.mxu0 0.0
    %785 = vmatpush2.msra.mxu0 0.0
    %786 = vmatprep.subr.mxu0 0.0
    %787 = vmatpush2.msra.mxu0 0.0
    %788 = vmatprep.subr.mxu0 0.0
    %789 = vmatpush2.msra.mxu0 0.0
    %790 = vmatprep.subr.mxu0 0.0
    %791 = vmatpush2.msra.mxu0 0.0
    %792 = vmatprep.subr.mxu0 0.0
    %793 = vmatpush2.msra.mxu0 0.0
    %794 = vmatprep.subr.mxu0 0.0
    %795 = vmatpush2.msra.mxu0 0.0
    %796 = vmatprep.subr.mxu0 0.0
    %797 = vmatpush2.msra.mxu0 0.0
    %798 = vmatprep.subr.mxu0 0.0
    %799 = vmatpush2.msra.mxu0 0.0
    %800 = vmatprep.subr.mxu0 0.0
    %801 = vmatpush2.msra.mxu0 0.0
    %802 = vmatprep.mubr.f32.mxu0 0.0
    %803 = vmatmul.mubr.f32.gmra.mxu0 %v736
    %v804 = vpop.f32.mrf.mxu0
    %v805 = vadd.f32 %v261, %v804
    %v806 = vpop.f32.mrf.mxu0
    %807 = vdwg.mxu0
    %vm808 = vcmask 516096
    %v809 = vsel %vm808, %v805, -inf
    %810 = vmax.xlane.f32.xlu0 %v809
    %v811 = vpop.xlane.xlu0 %810
    %v812 = vsub.f32 %v805, %v811
    %v813 = vmul.f32 %v812, 1.442695
    %v814 = vpow.pop %v813
    %v815 = vsel %vm808, %v814, 0.0
    %816 = vadd.xlane.f32.xlu0 %v815
    %v817 = vpop.xlane.xlu0 %816
    %v818 = vlog2.pop %v817
    %v819 = vmul.f32 %v818, 0.6931472
    %v820 = vadd.f32 %v819, %v811
    %v821 = vsub.f32 %v805, %v820
    %822 = vst.msk [vmem:[%s6] sm:$0x1] %vm808, %v821
    %823 = vst.msk [vmem:[%s6 + $0x8] sm:$0x1] %vm44, %v730
    %824 = vst.msk [vmem:[%s6 + $0x10] sm:$0x1] %vm446, %v457
    %v825 = vld [vmem:[#allocation5 + $0x10] sm:$0xff]
    %v826 = vld [vmem:[#allocation5 + $0x18] sm:$0xff]
    %v827 = vld [vmem:[#allocation5 + $0x20] sm:$0xff]
    %v828 = vld [vmem:[#allocation5 + $0x28] sm:$0xff]
    %v829 = vld [vmem:[#allocation5 + $0x68] sm:$0xff]
    %v830 = vld [vmem:[#allocation5 + $0x70] sm:$0xff]
    %v831 = vld [vmem:[#allocation5 + $0x78] sm:$0xff]
    %v832 = vld [vmem:[#allocation5 + $0x80] sm:$0xff]
    %v833 = vld [vmem:[#allocation5 + $0xc0] sm:$0xff]
    %v834 = vld [vmem:[#allocation5 + $0xc8] sm:$0xff]
    %v835 = vld [vmem:[#allocation5 + $0xd0] sm:$0xff]
    %v836 = vld [vmem:[#allocation5 + $0xd8] sm:$0xff]
    %v837 = vld [vmem:[#allocation5 + $0x118] sm:$0xff]
    %v838 = vld [vmem:[#allocation5 + $0x120] sm:$0xff]
    %v839 = vld [vmem:[#allocation5 + $0x128] sm:$0xff]
    %v840 = vld [vmem:[#allocation5 + $0x130] sm:$0xff]
    %841 = vmatprep.subr.mxu0 0.0
    %842 = vmatpush1.msra.mxu0 0.0
    %843 = vmatprep.subr.mxu0 0.0
    %844 = vmatpush1.msra.mxu0 0.0
    %845 = vmatprep.subr.mxu0 0.0
    %846 = vmatpush1.msra.mxu0 0.0
    %847 = vmatprep.subr.mxu0 0.0
    %848 = vmatpush1.msra.mxu0 0.0
    %849 = vmatprep.subr.mxu0 0.0
    %850 = vmatpush1.msra.mxu0 0.0
    %851 = vmatprep.subr.mxu0 0.0
    %852 = vmatpush1.msra.mxu0 0.0
    %853 = vmatprep.subr.mxu0 0.0
    %854 = vmatpush1.msra.mxu0 0.0
    %855 = vmatprep.subr.mxu0 0.0
    %856 = vmatpush1.msra.mxu0 0.0
    %857 = vmatprep.subr.mxu0 0.0
    %858 = vmatpush1.msra.mxu0 0.0
    %859 = vmatprep.subr.mxu0 0.0
    %860 = vmatpush1.msra.mxu0 0.0
    %861 = vmatprep.subr.mxu0 0.0
    %862 = vmatpush1.msra.mxu0 0.0
    %863 = vmatprep.subr.mxu0 0.0
    %864 = vmatpush1.msra.mxu0 0.0
    %865 = vmatprep.subr.mxu0 %v838
    %866 = vmatpush1.msra.mxu0 %v837
    %867 = vmatprep.subr.mxu0 %v834
    %868 = vmatpush1.msra.mxu0 %v833
    %869 = vmatprep.subr.mxu0 %v830
    %870 = vmatpush1.msra.mxu0 %v829
    %871 = vmatprep.subr.mxu0 %v826
    %872 = vmatpush1.msra.mxu0 %v825
    %873 = vmatprep.subr.mxu0 0.0
    %874 = vmatpush2.msra.mxu0 0.0
    %875 = vmatprep.subr.mxu0 0.0
    %876 = vmatpush2.msra.mxu0 0.0
    %877 = vmatprep.subr.mxu0 0.0
    %878 = vmatpush2.msra.mxu0 0.0
    %879 = vmatprep.subr.mxu0 0.0
    %880 = vmatpush2.msra.mxu0 0.0
    %881 = vmatprep.subr.mxu0 0.0
    %882 = vmatpush2.msra.mxu0 0.0
    %883 = vmatprep.subr.mxu0 0.0
    %884 = vmatpush2.msra.mxu0 0.0
    %885 = vmatprep.subr.mxu0 0.0
    %886 = vmatpush2.msra.mxu0 0.0
    %887 = vmatprep.subr.mxu0 0.0
    %888 = vmatpush2.msra.mxu0 0.0
    %889 = vmatprep.subr.mxu0 0.0
    %890 = vmatpush2.msra.mxu0 0.0
    %891 = vmatprep.subr.mxu0 0.0
    %892 = vmatpush2.msra.mxu0 0.0
    %893 = vmatprep.subr.mxu0 0.0
    %894 = vmatpush2.msra.mxu0 0.0
    %895 = vmatprep.subr.mxu0 0.0
    %896 = vmatpush2.msra.mxu0 0.0
    %897 = vmatprep.subr.mxu0 0.0
    %898 = vmatpush2.msra.mxu0 0.0
    %899 = vmatprep.subr.mxu0 0.0
    %900 = vmatpush2.msra.mxu0 0.0
    %901 = vmatprep.subr.mxu0 0.0
    %902 = vmatpush2.msra.mxu0 0.0
    %903 = vmatprep.subr.mxu0 0.0
    %904 = vmatpush2.msra.mxu0 0.0
    %905 = vmatprep.mubr.f32.mxu0 0.0
    %906 = vmatmul.mubr.f32.gmra.mxu0 %v736
    %v907 = vpop.f32.mrf.mxu0
    %v908 = vadd.f32 %v283, %v907
    %v909 = vpop.f32.mrf.mxu0
    %v910 = vadd.f32 %v287, %v909
    %911 = vdwg.mxu0
    %912 = vmatprep.subr.mxu0 0.0
    %913 = vmatpush1.msra.mxu0 0.0
    %914 = vmatprep.subr.mxu0 0.0
    %915 = vmatpush1.msra.mxu0 0.0
    %916 = vmatprep.subr.mxu0 0.0
    %917 = vmatpush1.msra.mxu0 0.0
    %918 = vmatprep.subr.mxu0 0.0
    %919 = vmatpush1.msra.mxu0 0.0
    %920 = vmatprep.subr.mxu0 0.0
    %921 = vmatpush1.msra.mxu0 0.0
    %922 = vmatprep.subr.mxu0 0.0
    %923 = vmatpush1.msra.mxu0 0.0
    %924 = vmatprep.subr.mxu0 0.0
    %925 = vmatpush1.msra.mxu0 0.0
    %926 = vmatprep.subr.mxu0 0.0
    %927 = vmatpush1.msra.mxu0 0.0
    %928 = vmatprep.subr.mxu0 0.0
    %929 = vmatpush1.msra.mxu0 0.0
    %930 = vmatprep.subr.mxu0 0.0
    %931 = vmatpush1.msra.mxu0 0.0
    %932 = vmatprep.subr.mxu0 0.0
    %933 = vmatpush1.msra.mxu0 0.0
    %934 = vmatprep.subr.mxu0 0.0
    %935 = vmatpush1.msra.mxu0 0.0
    %936 = vmatprep.subr.mxu0 %v840
    %937 = vmatpush1.msra.mxu0 %v839
    %938 = vmatprep.subr.mxu0 %v836
    %939 = vmatpush1.msra.mxu0 %v835
    %940 = vmatprep.subr.mxu0 %v832
    %941 = vmatpush1.msra.mxu0 %v831
    %942 = vmatprep.subr.mxu0 %v828
    %943 = vmatpush1.msra.mxu0 %v827
    %944 = vmatprep.subr.mxu0 0.0
    %945 = vmatpush2.msra.mxu0 0.0
    %946 = vmatprep.subr.mxu0 0.0
    %947 = vmatpush2.msra.mxu0 0.0
    %948 = vmatprep.subr.mxu0 0.0
    %949 = vmatpush2.msra.mxu0 0.0
    %950 = vmatprep.subr.mxu0 0.0
    %951 = vmatpush2.msra.mxu0 0.0
    %952 = vmatprep.subr.mxu0 0.0
    %953 = vmatpush2.msra.mxu0 0.0
    %954 = vmatprep.subr.mxu0 0.0
    %955 = vmatpush2.msra.mxu0 0.0
    %956 = vmatprep.subr.mxu0 0.0
    %957 = vmatpush2.msra.mxu0 0.0
    %958 = vmatprep.subr.mxu0 0.0
    %959 = vmatpush2.msra.mxu0 0.0
    %960 = vmatprep.subr.mxu0 0.0
    %961 = vmatpush2.msra.mxu0 0.0
    %962 = vmatprep.subr.mxu0 0.0
    %963 = vmatpush2.msra.mxu0 0.0
    %964 = vmatprep.subr.mxu0 0.0
    %965 = vmatpush2.msra.mxu0 0.0
    %966 = vmatprep.subr.mxu0 0.0
    %967 = vmatpush2.msra.mxu0 0.0
    %968 = vmatprep.subr.mxu0 0.0
    %969 = vmatpush2.msra.mxu0 0.0
    %970 = vmatprep.subr.mxu0 0.0
    %971 = vmatpush2.msra.mxu0 0.0
    %972 = vmatprep.subr.mxu0 0.0
    %973 = vmatpush2.msra.mxu0 0.0
    %974 = vmatprep.subr.mxu0 0.0
    %975 = vmatpush2.msra.mxu0 0.0
    %976 = vmatprep.mubr.f32.mxu0 0.0
    %977 = vmatmul.mubr.f32.gmra.mxu0 %v736
    %v978 = vpop.f32.mrf.mxu0
    %v979 = vadd.f32 %v291, %v978
    %v980 = vpop.f32.mrf.mxu0
    %v981 = vadd.f32 %v295, %v980
    %982 = vdwg.mxu0
    %v984 = vrot.slane %v908, 7
    %v986 = vadd.f32 %v166, %v984
    %vm987 = vcmask 74753
    %v988 = vsel %vm987, %v986, -inf
    %989 = vmax.xlane.f32.xlu0 %v988
    %v990 = vpop.xlane.xlu0 %989
    %v991 = vsub.f32 %v986, %v990
    %v992 = vmul.f32 %v991, 1.442695
    %v993 = vpow.pop %v992
    %v994 = vsel %vm987, %v993, 0.0
    %995 = vadd.xlane.f32.xlu0 %v994
    %v996 = vpop.xlane.xlu0 %995
    %v997 = vrcp.pop %v996
    %v998 = vmul.f32 %v993, %v997
    %v1000 = vrot.slane %v998, 1
    %v1001 = vsel %vm458, %v1000, 0
    %1003 = vmatprep.subr.mxu0 0.0
    %1004 = vmatpush1.msra.mxu0 0.0
    %1005 = vmatprep.subr.mxu0 0.0
    %1006 = vmatpush1.msra.mxu0 0.0
    %1007 = vmatprep.subr.mxu0 0.0
    %1008 = vmatpush1.msra.mxu0 0.0
    %1009 = vmatprep.subr.mxu0 0.0
    %1010 = vmatpush1.msra.mxu0 0.0
    %1011 = vmatprep.subr.mxu0 0.0
    %1012 = vmatpush1.msra.mxu0 0.0
    %1013 = vmatprep.subr.mxu0 0.0
    %1014 = vmatpush1.msra.mxu0 0.0
    %1015 = vmatprep.subr.mxu0 0.0
    %1016 = vmatpush1.msra.mxu0 0.0
    %1017 = vmatprep.subr.mxu0 0.0
    %1018 = vmatpush1.msra.mxu0 0.0
    %1019 = vmatprep.subr.mxu0 0.0
    %1020 = vmatpush1.msra.mxu0 0.0
    %1021 = vmatprep.subr.mxu0 0.0
    %1022 = vmatpush1.msra.mxu0 0.0
    %1023 = vmatprep.subr.mxu0 0.0
    %1024 = vmatpush1.msra.mxu0 0.0
    %1025 = vmatprep.subr.mxu0 0.0
    %1026 = vmatpush1.msra.mxu0 0.0
    %1027 = vmatprep.subr.mxu0 0.0
    %1028 = vmatpush1.msra.mxu0 0.0
    %1029 = vmatprep.subr.mxu0 0.0
    %1030 = vmatpush1.msra.mxu0 0.0
    %1031 = vmatprep.subr.mxu0 0.0
    %1032 = vmatpush1.msra.mxu0 %v464
    %1033 = vmatprep.subr.mxu0 0.0
    %1034 = vmatpush1.msra.mxu0 %v249
    %1035 = vmatprep.subr.mxu0 0.0
    %1036 = vmatpush2.msra.mxu0 0.0
    %1037 = vmatprep.subr.mxu0 0.0
    %1038 = vmatpush2.msra.mxu0 0.0
    %1039 = vmatprep.subr.mxu0 0.0
    %1040 = vmatpush2.msra.mxu0 0.0
    %1041 = vmatprep.subr.mxu0 0.0
    %1042 = vmatpush2.msra.mxu0 0.0
    %1043 = vmatprep.subr.mxu0 0.0
    %1044 = vmatpush2.msra.mxu0 0.0
    %1045 = vmatprep.subr.mxu0 0.0
    %1046 = vmatpush2.msra.mxu0 0.0
    %1047 = vmatprep.subr.mxu0 0.0
    %1048 = vmatpush2.msra.mxu0 0.0
    %1049 = vmatprep.subr.mxu0 0.0
    %1050 = vmatpush2.msra.mxu0 0.0
    %1051 = vmatprep.subr.mxu0 0.0
    %1052 = vmatpush2.msra.mxu0 0.0
    %1053 = vmatprep.subr.mxu0 0.0
    %1054 = vmatpush2.msra.mxu0 0.0
    %1055 = vmatprep.subr.mxu0 0.0
    %1056 = vmatpush2.msra.mxu0 0.0
    %1057 = vmatprep.subr.mxu0 0.0
    %1058 = vmatpush2.msra.mxu0 0.0
    %1059 = vmatprep.subr.mxu0 0.0
    %1060 = vmatpush2.msra.mxu0 0.0
    %1061 = vmatprep.subr.mxu0 0.0
    %1062 = vmatpush2.msra.mxu0 0.0
    %1063 = vmatprep.subr.mxu0 0.0
    %1064 = vmatpush2.msra.mxu0 0.0
    %1065 = vmatprep.subr.mxu0 0.0
    %1066 = vmatpush2.msra.mxu0 0.0
    %1067 = vmatprep.mubr.f32.mxu0 0.0
    %1068 = vmatmul.mubr.f32.gmra.mxu0 %v1001
    %v1069 = vpop.f32.mrf.mxu0
    %v1070 = vadd.f32 0.0, %v1069
    %v1071 = vpop.f32.mrf.mxu0
    %1072 = vdwg.mxu0
    %v1074 = vrot.slane %v1070, 7
    %v1076 = vadd.f32 %v168, %v1074
    %v1077 = vmax.f32 %v1076, 0.0
    %v1078 = vld [vmem:[#allocation5 + $0x30] sm:$0xff]
    %v1079 = vld [vmem:[#allocation5 + $0x38] sm:$0xff]
    %v1080 = vld [vmem:[#allocation5 + $0x40] sm:$0xff]
    %v1081 = vld [vmem:[#allocation5 + $0x88] sm:$0xff]
    %v1082 = vld [vmem:[#allocation5 + $0x90] sm:$0xff]
    %v1083 = vld [vmem:[#allocation5 + $0x98] sm:$0xff]
    %v1084 = vld [vmem:[#allocation5 + $0xe0] sm:$0xff]
    %v1085 = vld [vmem:[#allocation5 + $0xe8] sm:$0xff]
    %v1086 = vld [vmem:[#allocation5 + $0xf0] sm:$0xff]
    %v1087 = vld [vmem:[#allocation5 + $0x138] sm:$0xff]
    %v1088 = vld [vmem:[#allocation5 + $0x140] sm:$0xff]
    %v1089 = vld [vmem:[#allocation5 + $0x148] sm:$0xff]
    %v1091 = vrot.slane %v1077, 1
    %v1092 = vsel %vm95, %v1091, 0
    %1094 = vmatprep.subr.mxu0 0.0
    %1095 = vmatpush1.msra.mxu0 0.0
    %1096 = vmatprep.subr.mxu0 0.0
    %1097 = vmatpush1.msra.mxu0 0.0
    %1098 = vmatprep.subr.mxu0 0.0
    %1099 = vmatpush1.msra.mxu0 0.0
    %1100 = vmatprep.subr.mxu0 0.0
    %1101 = vmatpush1.msra.mxu0 0.0
    %1102 = vmatprep.subr.mxu0 0.0
    %1103 = vmatpush1.msra.mxu0 0.0
    %1104 = vmatprep.subr.mxu0 0.0
    %1105 = vmatpush1.msra.mxu0 0.0
    %1106 = vmatprep.subr.mxu0 0.0
    %1107 = vmatpush1.msra.mxu0 0.0
    %1108 = vmatprep.subr.mxu0 0.0
    %1109 = vmatpush1.msra.mxu0 0.0
    %1110 = vmatprep.subr.mxu0 0.0
    %1111 = vmatpush1.msra.mxu0 0.0
    %1112 = vmatprep.subr.mxu0 0.0
    %1113 = vmatpush1.msra.mxu0 0.0
    %1114 = vmatprep.subr.mxu0 0.0
    %1115 = vmatpush1.msra.mxu0 0.0
    %1116 = vmatprep.subr.mxu0 0.0
    %1117 = vmatpush1.msra.mxu0 0.0
    %1118 = vmatprep.subr.mxu0 %v1088
    %1119 = vmatpush1.msra.mxu0 %v1087
    %1120 = vmatprep.subr.mxu0 %v1085
    %1121 = vmatpush1.msra.mxu0 %v1084
    %1122 = vmatprep.subr.mxu0 %v1082
    %1123 = vmatpush1.msra.mxu0 %v1081
    %1124 = vmatprep.subr.mxu0 %v1079
    %1125 = vmatpush1.msra.mxu0 %v1078
    %1126 = vmatprep.subr.mxu0 0.0
    %1127 = vmatpush2.msra.mxu0 0.0
    %1128 = vmatprep.subr.mxu0 0.0
    %1129 = vmatpush2.msra.mxu0 0.0
    %1130 = vmatprep.subr.mxu0 0.0
    %1131 = vmatpush2.msra.mxu0 0.0
    %1132 = vmatprep.subr.mxu0 0.0
    %1133 = vmatpush2.msra.mxu0 0.0
    %1134 = vmatprep.subr.mxu0 0.0
    %1135 = vmatpush2.msra.mxu0 0.0
    %1136 = vmatprep.subr.mxu0 0.0
    %1137 = vmatpush2.msra.mxu0 0.0
    %1138 = vmatprep.subr.mxu0 0.0
    %1139 = vmatpush2.msra.mxu0 0.0
    %1140 = vmatprep.subr.mxu0 0.0
    %1141 = vmatpush2.msra.mxu0 0.0
    %1142 = vmatprep.subr.mxu0 0.0
    %1143 = vmatpush2.msra.mxu0 0.0
    %1144 = vmatprep.subr.mxu0 0.0
    %1145 = vmatpush2.msra.mxu0 0.0
    %1146 = vmatprep.subr.mxu0 0.0
    %1147 = vmatpush2.msra.mxu0 0.0
    %1148 = vmatprep.subr.mxu0 0.0
    %1149 = vmatpush2.msra.mxu0 0.0
    %1150 = vmatprep.subr.mxu0 0.0
    %1151 = vmatpush2.msra.mxu0 0.0
    %1152 = vmatprep.subr.mxu0 0.0
    %1153 = vmatpush2.msra.mxu0 0.0
    %1154 = vmatprep.subr.mxu0 0.0
    %1155 = vmatpush2.msra.mxu0 0.0
    %1156 = vmatprep.subr.mxu0 0.0
    %1157 = vmatpush2.msra.mxu0 0.0
    %1158 = vmatprep.mubr.f32.mxu0 0.0
    %1159 = vmatmul.mubr.f32.gmra.mxu0 %v1092
    %v1160 = vpop.f32.mrf.mxu0
    %v1161 = vadd.f32 %v554, %v1160
    %v1162 = vpop.f32.mrf.mxu0
    %v1163 = vadd.f32 %v558, %v1162
    %1164 = vdwg.mxu0
    %1165 = vmatprep.subr.mxu0 0.0
    %1166 = vmatpush1.msra.mxu0 0.0
    %1167 = vmatprep.subr.mxu0 0.0
    %1168 = vmatpush1.msra.mxu0 0.0
    %1169 = vmatprep.subr.mxu0 0.0
    %1170 = vmatpush1.msra.mxu0 0.0
    %1171 = vmatprep.subr.mxu0 0.0
    %1172 = vmatpush1.msra.mxu0 0.0
    %1173 = vmatprep.subr.mxu0 0.0
    %1174 = vmatpush1.msra.mxu0 0.0
    %1175 = vmatprep.subr.mxu0 0.0
    %1176 = vmatpush1.msra.mxu0 0.0
    %1177 = vmatprep.subr.mxu0 0.0
    %1178 = vmatpush1.msra.mxu0 0.0
    %1179 = vmatprep.subr.mxu0 0.0
    %1180 = vmatpush1.msra.mxu0 0.0
    %1181 = vmatprep.subr.mxu0 0.0
    %1182 = vmatpush1.msra.mxu0 0.0
    %1183 = vmatprep.subr.mxu0 0.0
    %1184 = vmatpush1.msra.mxu0 0.0
    %1185 = vmatprep.subr.mxu0 0.0
    %1186 = vmatpush1.msra.mxu0 0.0
    %1187 = vmatprep.subr.mxu0 0.0
    %1188 = vmatpush1.msra.mxu0 0.0
    %1189 = vmatprep.subr.mxu0 0.0
    %1190 = vmatpush1.msra.mxu0 %v1089
    %1191 = vmatprep.subr.mxu0 0.0
    %1192 = vmatpush1.msra.mxu0 %v1086
    %1193 = vmatprep.subr.mxu0 0.0
    %1194 = vmatpush1.msra.mxu0 %v1083
    %1195 = vmatprep.subr.mxu0 0.0
    %1196 = vmatpush1.msra.mxu0 %v1080
    %1197 = vmatprep.subr.mxu0 0.0
    %1198 = vmatpush2.msra.mxu0 0.0
    %1199 = vmatprep.subr.mxu0 0.0
    %1200 = vmatpush2.msra.mxu0 0.0
    %1201 = vmatprep.subr.mxu0 0.0
    %1202 = vmatpush2.msra.mxu0 0.0
    %1203 = vmatprep.subr.mxu0 0.0
    %1204 = vmatpush2.msra.mxu0 0.0
    %1205 = vmatprep.subr.mxu0 0.0
    %1206 = vmatpush2.msra.mxu0 0.0
    %1207 = vmatprep.subr.mxu0 0.0
    %1208 = vmatpush2.msra.mxu0 0.0
    %1209 = vmatprep.subr.mxu0 0.0
    %1210 = vmatpush2.msra.mxu0 0.0
    %1211 = vmatprep.subr.mxu0 0.0
    %1212 = vmatpush2.msra.mxu0 0.0
    %1213 = vmatprep.subr.mxu0 0.0
    %1214 = vmatpush2.msra.mxu0 0.0
    %1215 = vmatprep.subr.mxu0 0.0
    %1216 = vmatpush2.msra.mxu0 0.0
    %1217 = vmatprep.subr.mxu0 0.0
    %1218 = vmatpush2.msra.mxu0 0.0
    %1219 = vmatprep.subr.mxu0 0.0
    %1220 = vmatpush2.msra.mxu0 0.0
    %1221 = vmatprep.subr.mxu0 0.0
    %1222 = vmatpush2.msra.mxu0 0.0
    %1223 = vmatprep.subr.mxu0 0.0
    %1224 = vmatpush2.msra.mxu0 0.0
    %1225 = vmatprep.subr.mxu0 0.0
    %1226 = vmatpush2.msra.mxu0 0.0
    %1227 = vmatprep.subr.mxu0 0.0
    %1228 = vmatpush2.msra.mxu0 0.0
    %1229 = vmatprep.mubr.f32.mxu0 0.0
    %1230 = vmatmul.mubr.f32.gmra.mxu0 %v1092
    %v1231 = vpop.f32.mrf.mxu0
    %v1232 = vadd.f32 %v562, %v1231
    %v1233 = vpop.f32.mrf.mxu0
    %1234 = vdwg.mxu0
    %v1235 = vadd.f32 %v1161, %v910
    %v1236 = vxor.u32 %v1235, 2147483648
    %v1237 = vmul.f32 %v1236, 1.442695
    %v1238 = vpow.pop %v1237
    %v1239 = vadd.f32 %v1238, 1.0
    %v1240 = vrcp.pop %v1239
    %v1241 = vmul.f32 1.0, %v1240
    %v1242 = vadd.f32 %v1163, %v979
    %v1243 = vxor.u32 %v1242, 2147483648
    %v1244 = vmul.f32 %v1243, 1.442695
    %v1245 = vpow.pop %v1244
    %v1246 = vadd.f32 %v1245, 1.0
    %v1247 = vrcp.pop %v1246
    %v1248 = vmul.f32 1.0, %v1247
    %v1249 = vmul.f32 %v1241, %v981
    %v1250 = vadd.f32 %v1232, %v1249
    %v1251 = vtanh.pop %v1250
    %v1252 = vsub.f32 1.0, %v1248
    %v1253 = vmul.f32 %v1252, %v1251
    %v1254 = vmul.f32 %v1248, %v730
    %v1255 = vadd.f32 %v1253, %v1254
    %v1256 = vld [vmem:[#allocation5 + $0x50] sm:$0xff]
    %v1257 = vld [vmem:[#allocation5 + $0xa8] sm:$0xff]
    %v1258 = vld [vmem:[#allocation5 + $0x100] sm:$0xff]
    %v1259 = vld [vmem:[#allocation5 + $0x158] sm:$0xff]
    %v1261 = vsel %vm95, %v1255, 0
    %1263 = vmatprep.subr.mxu0 0.0
    %1264 = vmatpush1.msra.mxu0 0.0
    %1265 = vmatprep.subr.mxu0 0.0
    %1266 = vmatpush1.msra.mxu0 0.0
    %1267 = vmatprep.subr.mxu0 0.0
    %1268 = vmatpush1.msra.mxu0 0.0
    %1269 = vmatprep.subr.mxu0 0.0
    %1270 = vmatpush1.msra.mxu0 0.0
    %1271 = vmatprep.subr.mxu0 0.0
    %1272 = vmatpush1.msra.mxu0 0.0
    %1273 = vmatprep.subr.mxu0 0.0
    %1274 = vmatpush1.msra.mxu0 0.0
    %1275 = vmatprep.subr.mxu0 0.0
    %1276 = vmatpush1.msra.mxu0 0.0
    %1277 = vmatprep.subr.mxu0 0.0
    %1278 = vmatpush1.msra.mxu0 0.0
    %1279 = vmatprep.subr.mxu0 0.0
    %1280 = vmatpush1.msra.mxu0 0.0
    %1281 = vmatprep.subr.mxu0 0.0
    %1282 = vmatpush1.msra.mxu0 0.0
    %1283 = vmatprep.subr.mxu0 0.0
    %1284 = vmatpush1.msra.mxu0 0.0
    %1285 = vmatprep.subr.mxu0 0.0
    %1286 = vmatpush1.msra.mxu0 0.0
    %1287 = vmatprep.subr.mxu0 0.0
    %1288 = vmatpush1.msra.mxu0 %v1259
    %1289 = vmatprep.subr.mxu0 0.0
    %1290 = vmatpush1.msra.mxu0 %v1258
    %1291 = vmatprep.subr.mxu0 0.0
    %1292 = vmatpush1.msra.mxu0 %v1257
    %1293 = vmatprep.subr.mxu0 0.0
    %1294 = vmatpush1.msra.mxu0 %v1256
    %1295 = vmatprep.subr.mxu0 0.0
    %1296 = vmatpush2.msra.mxu0 0.0
    %1297 = vmatprep.subr.mxu0 0.0
    %1298 = vmatpush2.msra.mxu0 0.0
    %1299 = vmatprep.subr.mxu0 0.0
    %1300 = vmatpush2.msra.mxu0 0.0
    %1301 = vmatprep.subr.mxu0 0.0
    %1302 = vmatpush2.msra.mxu0 0.0
    %1303 = vmatprep.subr.mxu0 0.0
    %1304 = vmatpush2.msra.mxu0 0.0
    %1305 = vmatprep.subr.mxu0 0.0
    %1306 = vmatpush2.msra.mxu0 0.0
    %1307 = vmatprep.subr.mxu0 0.0
    %1308 = vmatpush2.msra.mxu0 0.0
    %1309 = vmatprep.subr.mxu0 0.0
    %1310 = vmatpush2.msra.mxu0 0.0
    %1311 = vmatprep.subr.mxu0 0.0
    %1312 = vmatpush2.msra.mxu0 0.0
    %1313 = vmatprep.subr.mxu0 0.0
    %1314 = vmatpush2.msra.mxu0 0.0
    %1315 = vmatprep.subr.mxu0 0.0
    %1316 = vmatpush2.msra.mxu0 0.0
    %1317 = vmatprep.subr.mxu0 0.0
    %1318 = vmatpush2.msra.mxu0 0.0
    %1319 = vmatprep.subr.mxu0 0.0
    %1320 = vmatpush2.msra.mxu0 0.0
    %1321 = vmatprep.subr.mxu0 0.0
    %1322 = vmatpush2.msra.mxu0 0.0
    %1323 = vmatprep.subr.mxu0 0.0
    %1324 = vmatpush2.msra.mxu0 0.0
    %1325 = vmatprep.subr.mxu0 0.0
    %1326 = vmatpush2.msra.mxu0 0.0
    %1327 = vmatprep.mubr.f32.mxu0 0.0
    %1328 = vmatmul.mubr.f32.gmra.mxu0 %v1261
    %v1329 = vpop.f32.mrf.mxu0
    %v1330 = vadd.f32 %v261, %v1329
    %v1331 = vpop.f32.mrf.mxu0
    %1332 = vdwg.mxu0
    %v1333 = vsel %vm808, %v1330, -inf
    %1334 = vmax.xlane.f32.xlu0 %v1333
    %v1335 = vpop.xlane.xlu0 %1334
    %v1336 = vsub.f32 %v1330, %v1335
    %v1337 = vmul.f32 %v1336, 1.442695
    %v1338 = vpow.pop %v1337
    %v1339 = vsel %vm808, %v1338, 0.0
    %1340 = vadd.xlane.f32.xlu0 %v1339
    %v1341 = vpop.xlane.xlu0 %1340
    %v1342 = vlog2.pop %v1341
    %v1343 = vmul.f32 %v1342, 0.6931472
    %v1344 = vadd.f32 %v1343, %v1335
    %v1345 = vsub.f32 %v1330, %v1344
    %1346 = vst.msk [vmem:[%s6 + $0x1] sm:$0x1] %vm808, %v1345
    %1347 = vst.msk [vmem:[%s6 + $0x9] sm:$0x1] %vm44, %v1255
    %1349 = vst.msk [vmem:[%s6 + $0x11] sm:$0x1] %vm446, %v1000
    %v1350 = vld [vmem:[#allocation5 + $0x10] sm:$0xff]
    %v1351 = vld [vmem:[#allocation5 + $0x18] sm:$0xff]
    %v1352 = vld [vmem:[#allocation5 + $0x20] sm:$0xff]
    %v1353 = vld [vmem:[#allocation5 + $0x28] sm:$0xff]
    %v1354 = vld [vmem:[#allocation5 + $0x68] sm:$0xff]
    %v1355 = vld [vmem:[#allocation5 + $0x70] sm:$0xff]
    %v1356 = vld [vmem:[#allocation5 + $0x78] sm:$0xff]
    %v1357 = vld [vmem:[#allocation5 + $0x80] sm:$0xff]
    %v1358 = vld [vmem:[#allocation5 + $0xc0] sm:$0xff]
    %v1359 = vld [vmem:[#allocation5 + $0xc8] sm:$0xff]
    %v1360 = vld [vmem:[#allocation5 + $0xd0] sm:$0xff]
    %v1361 = vld [vmem:[#allocation5 + $0xd8] sm:$0xff]
    %v1362 = vld [vmem:[#allocation5 + $0x118] sm:$0xff]
    %v1363 = vld [vmem:[#allocation5 + $0x120] sm:$0xff]
    %v1364 = vld [vmem:[#allocation5 + $0x128] sm:$0xff]
    %v1365 = vld [vmem:[#allocation5 + $0x130] sm:$0xff]
    %1366 = vmatprep.subr.mxu0 0.0
    %1367 = vmatpush1.msra.mxu0 0.0
    %1368 = vmatprep.subr.mxu0 0.0
    %1369 = vmatpush1.msra.mxu0 0.0
    %1370 = vmatprep.subr.mxu0 0.0
    %1371 = vmatpush1.msra.mxu0 0.0
    %1372 = vmatprep.subr.mxu0 0.0
    %1373 = vmatpush1.msra.mxu0 0.0
    %1374 = vmatprep.subr.mxu0 0.0
    %1375 = vmatpush1.msra.mxu0 0.0
    %1376 = vmatprep.subr.mxu0 0.0
    %1377 = vmatpush1.msra.mxu0 0.0
    %1378 = vmatprep.subr.mxu0 0.0
    %1379 = vmatpush1.msra.mxu0 0.0
    %1380 = vmatprep.subr.mxu0 0.0
    %1381 = vmatpush1.msra.mxu0 0.0
    %1382 = vmatprep.subr.mxu0 0.0
    %1383 = vmatpush1.msra.mxu0 0.0
    %1384 = vmatprep.subr.mxu0 0.0
    %1385 = vmatpush1.msra.mxu0 0.0
    %1386 = vmatprep.subr.mxu0 0.0
    %1387 = vmatpush1.msra.mxu0 0.0
    %1388 = vmatprep.subr.mxu0 0.0
    %1389 = vmatpush1.msra.mxu0 0.0
    %1390 = vmatprep.subr.mxu0 %v1363
    %1391 = vmatpush1.msra.mxu0 %v1362
    %1392 = vmatprep.subr.mxu0 %v1359
    %1393 = vmatpush1.msra.mxu0 %v1358
    %1394 = vmatprep.subr.mxu0 %v1355
    %1395 = vmatpush1.msra.mxu0 %v1354
    %1396 = vmatprep.subr.mxu0 %v1351
    %1397 = vmatpush1.msra.mxu0 %v1350
    %1398 = vmatprep.subr.mxu0 0.0
    %1399 = vmatpush2.msra.mxu0 0.0
    %1400 = vmatprep.subr.mxu0 0.0
    %1401 = vmatpush2.msra.mxu0 0.0
    %1402 = vmatprep.subr.mxu0 0.0
    %1403 = vmatpush2.msra.mxu0 0.0
    %1404 = vmatprep.subr.mxu0 0.0
    %1405 = vmatpush2.msra.mxu0 0.0
    %1406 = vmatprep.subr.mxu0 0.0
    %1407 = vmatpush2.msra.mxu0 0.0
    %1408 = vmatprep.subr.mxu0 0.0
    %1409 = vmatpush2.msra.mxu0 0.0
    %1410 = vmatprep.subr.mxu0 0.0
    %1411 = vmatpush2.msra.mxu0 0.0
    %1412 = vmatprep.subr.mxu0 0.0
    %1413 = vmatpush2.msra.mxu0 0.0
    %1414 = vmatprep.subr.mxu0 0.0
    %1415 = vmatpush2.msra.mxu0 0.0
    %1416 = vmatprep.subr.mxu0 0.0
    %1417 = vmatpush2.msra.mxu0 0.0
    %1418 = vmatprep.subr.mxu0 0.0
    %1419 = vmatpush2.msra.mxu0 0.0
    %1420 = vmatprep.subr.mxu0 0.0
    %1421 = vmatpush2.msra.mxu0 0.0
    %1422 = vmatprep.subr.mxu0 0.0
    %1423 = vmatpush2.msra.mxu0 0.0
    %1424 = vmatprep.subr.mxu0 0.0
    %1425 = vmatpush2.msra.mxu0 0.0
    %1426 = vmatprep.subr.mxu0 0.0
    %1427 = vmatpush2.msra.mxu0 0.0
    %1428 = vmatprep.subr.mxu0 0.0
    %1429 = vmatpush2.msra.mxu0 0.0
    %1430 = vmatprep.mubr.f32.mxu0 0.0
    %1431 = vmatmul.mubr.f32.gmra.mxu0 %v1261
    %v1432 = vpop.f32.mrf.mxu0
    %v1433 = vadd.f32 %v283, %v1432
    %v1434 = vpop.f32.mrf.mxu0
    %v1435 = vadd.f32 %v287, %v1434
    %1436 = vdwg.mxu0
    %1437 = vmatprep.subr.mxu0 0.0
    %1438 = vmatpush1.msra.mxu0 0.0
    %1439 = vmatprep.subr.mxu0 0.0
    %1440 = vmatpush1.msra.mxu0 0.0
    %1441 = vmatprep.subr.mxu0 0.0
    %1442 = vmatpush1.msra.mxu0 0.0
    %1443 = vmatprep.subr.mxu0 0.0
    %1444 = vmatpush1.msra.mxu0 0.0
    %1445 = vmatprep.subr.mxu0 0.0
    %1446 = vmatpush1.msra.mxu0 0.0
    %1447 = vmatprep.subr.mxu0 0.0
    %1448 = vmatpush1.msra.mxu0 0.0
    %1449 = vmatprep.subr.mxu0 0.0
    %1450 = vmatpush1.msra.mxu0 0.0
    %1451 = vmatprep.subr.mxu0 0.0
    %1452 = vmatpush1.msra.mxu0 0.0
    %1453 = vmatprep.subr.mxu0 0.0
    %1454 = vmatpush1.msra.mxu0 0.0
    %1455 = vmatprep.subr.mxu0 0.0
    %1456 = vmatpush1.msra.mxu0 0.0
    %1457 = vmatprep.subr.mxu0 0.0
    %1458 = vmatpush1.msra.mxu0 0.0
    %1459 = vmatprep.subr.mxu0 0.0
    %1460 = vmatpush1.msra.mxu0 0.0
    %1461 = vmatprep.subr.mxu0 %v1365
    %1462 = vmatpush1.msra.mxu0 %v1364
    %1463 = vmatprep.subr.mxu0 %v1361
    %1464 = vmatpush1.msra.mxu0 %v1360
    %1465 = vmatprep.subr.mxu0 %v1357
    %1466 = vmatpush1.msra.mxu0 %v1356
    %1467 = vmatprep.subr.mxu0 %v1353
    %1468 = vmatpush1.msra.mxu0 %v1352
    %1469 = vmatprep.subr.mxu0 0.0
    %1470 = vmatpush2.msra.mxu0 0.0
    %1471 = vmatprep.subr.mxu0 0.0
    %1472 = vmatpush2.msra.mxu0 0.0
    %1473 = vmatprep.subr.mxu0 0.0
    %1474 = vmatpush2.msra.mxu0 0.0
    %1475 = vmatprep.subr.mxu0 0.0
    %1476 = vmatpush2.msra.mxu0 0.0
    %1477 = vmatprep.subr.mxu0 0.0
    %1478 = vmatpush2.msra.mxu0 0.0
    %1479 = vmatprep.subr.mxu0 0.0
    %1480 = vmatpush2.msra.mxu0 0.0
    %1481 = vmatprep.subr.mxu0 0.0
    %1482 = vmatpush2.msra.mxu0 0.0
    %1483 = vmatprep.subr.mxu0 0.0
    %1484 = vmatpush2.msra.mxu0 0.0
    %1485 = vmatprep.subr.mxu0 0.0
    %1486 = vmatpush2.msra.mxu0 0.0
    %1487 = vmatprep.subr.mxu0 0.0
    %1488 = vmatpush2.msra.mxu0 0.0
    %1489 = vmatprep.subr.mxu0 0.0
    %1490 = vmatpush2.msra.mxu0 0.0
    %1491 = vmatprep.subr.mxu0 0.0
    %1492 = vmatpush2.msra.mxu0 0.0
    %1493 = vmatprep.subr.mxu0 0.0
    %1494 = vmatpush2.msra.mxu0 0.0
    %1495 = vmatprep.subr.mxu0 0.0
    %1496 = vmatpush2.msra.mxu0 0.0
    %1497 = vmatprep.subr.mxu0 0.0
    %1498 = vmatpush2.msra.mxu0 0.0
    %1499 = vmatprep.subr.mxu0 0.0
    %1500 = vmatpush2.msra.mxu0 0.0
    %1501 = vmatprep.mubr.f32.mxu0 0.0
    %1502 = vmatmul.mubr.f32.gmra.mxu0 %v1261
    %v1503 = vpop.f32.mrf.mxu0
    %v1504 = vadd.f32 %v291, %v1503
    %v1505 = vpop.f32.mrf.mxu0
    %v1506 = vadd.f32 %v295, %v1505
    %1507 = vdwg.mxu0
    %v1509 = vrot.slane %v1433, 6
    %v1511 = vadd.f32 %v166, %v1509
    %vm1512 = vcmask 75778
    %v1513 = vsel %vm1512, %v1511, -inf
    %1514 = vmax.xlane.f32.xlu0 %v1513
    %v1515 = vpop.xlane.xlu0 %1514
    %v1516 = vsub.f32 %v1511, %v1515
    %v1517 = vmul.f32 %v1516, 1.442695
    %v1518 = vpow.pop %v1517
    %v1519 = vsel %vm1512, %v1518, 0.0
    %1520 = vadd.xlane.f32.xlu0 %v1519
    %v1521 = vpop.xlane.xlu0 %1520
    %v1522 = vrcp.pop %v1521
    %v1523 = vmul.f32 %v1518, %v1522
    %v1525 = vrot.slane %v1523, 2
    %v1526 = vsel %vm458, %v1525, 0
    %1528 = vmatprep.subr.mxu0 0.0
    %1529 = vmatpush1.msra.mxu0 0.0
    %1530 = vmatprep.subr.mxu0 0.0
    %1531 = vmatpush1.msra.mxu0 0.0
    %1532 = vmatprep.subr.mxu0 0.0
    %1533 = vmatpush1.msra.mxu0 0.0
    %1534 = vmatprep.subr.mxu0 0.0
    %1535 = vmatpush1.msra.mxu0 0.0
    %1536 = vmatprep.subr.mxu0 0.0
    %1537 = vmatpush1.msra.mxu0 0.0
    %1538 = vmatprep.subr.mxu0 0.0
    %1539 = vmatpush1.msra.mxu0 0.0
    %1540 = vmatprep.subr.mxu0 0.0
    %1541 = vmatpush1.msra.mxu0 0.0
    %1542 = vmatprep.subr.mxu0 0.0
    %1543 = vmatpush1.msra.mxu0 0.0
    %1544 = vmatprep.subr.mxu0 0.0
    %1545 = vmatpush1.msra.mxu0 0.0
    %1546 = vmatprep.subr.mxu0 0.0
    %1547 = vmatpush1.msra.mxu0 0.0
    %1548 = vmatprep.subr.mxu0 0.0
    %1549 = vmatpush1.msra.mxu0 0.0
    %1550 = vmatprep.subr.mxu0 0.0
    %1551 = vmatpush1.msra.mxu0 0.0
    %1552 = vmatprep.subr.mxu0 0.0
    %1553 = vmatpush1.msra.mxu0 0.0
    %1554 = vmatprep.subr.mxu0 0.0
    %1555 = vmatpush1.msra.mxu0 0.0
    %1556 = vmatprep.subr.mxu0 0.0
    %1557 = vmatpush1.msra.mxu0 %v464
    %1558 = vmatprep.subr.mxu0 0.0
    %1559 = vmatpush1.msra.mxu0 %v249
    %1560 = vmatprep.subr.mxu0 0.0
    %1561 = vmatpush2.msra.mxu0 0.0
    %1562 = vmatprep.subr.mxu0 0.0
    %1563 = vmatpush2.msra.mxu0 0.0
    %1564 = vmatprep.subr.mxu0 0.0
    %1565 = vmatpush2.msra.mxu0 0.0
    %1566 = vmatprep.subr.mxu0 0.0
    %1567 = vmatpush2.msra.mxu0 0.0
    %1568 = vmatprep.subr.mxu0 0.0
    %1569 = vmatpush2.msra.mxu0 0.0
    %1570 = vmatprep.subr.mxu0 0.0
    %1571 = vmatpush2.msra.mxu0 0.0
    %1572 = vmatprep.subr.mxu0 0.0
    %1573 = vmatpush2.msra.mxu0 0.0
    %1574 = vmatprep.subr.mxu0 0.0
    %1575 = vmatpush2.msra.mxu0 0.0
    %1576 = vmatprep.subr.mxu0 0.0
    %1577 = vmatpush2.msra.mxu0 0.0
    %1578 = vmatprep.subr.mxu0 0.0
    %1579 = vmatpush2.msra.mxu0 0.0
    %1580 = vmatprep.subr.mxu0 0.0
    %1581 = vmatpush2.msra.mxu0 0.0
    %1582 = vmatprep.subr.mxu0 0.0
    %1583 = vmatpush2.msra.mxu0 0.0
    %1584 = vmatprep.subr.mxu0 0.0
    %1585 = vmatpush2.msra.mxu0 0.0
    %1586 = vmatprep.subr.mxu0 0.0
    %1587 = vmatpush2.msra.mxu0 0.0
    %1588 = vmatprep.subr.mxu0 0.0
    %1589 = vmatpush2.msra.mxu0 0.0
    %1590 = vmatprep.subr.mxu0 0.0
    %1591 = vmatpush2.msra.mxu0 0.0
    %1592 = vmatprep.mubr.f32.mxu0 0.0
    %1593 = vmatmul.mubr.f32.gmra.mxu0 %v1526
    %v1594 = vpop.f32.mrf.mxu0
    %v1595 = vadd.f32 0.0, %v1594
    %v1596 = vpop.f32.mrf.mxu0
    %1597 = vdwg.mxu0
    %v1599 = vrot.slane %v1595, 6
    %v1601 = vadd.f32 %v168, %v1599
    %v1602 = vmax.f32 %v1601, 0.0
    %v1603 = vld [vmem:[#allocation5 + $0x30] sm:$0xff]
    %v1604 = vld [vmem:[#allocation5 + $0x38] sm:$0xff]
    %v1605 = vld [vmem:[#allocation5 + $0x40] sm:$0xff]
    %v1606 = vld [vmem:[#allocation5 + $0x88] sm:$0xff]
    %v1607 = vld [vmem:[#allocation5 + $0x90] sm:$0xff]
    %v1608 = vld [vmem:[#allocation5 + $0x98] sm:$0xff]
    %v1609 = vld [vmem:[#allocation5 + $0xe0] sm:$0xff]
    %v1610 = vld [vmem:[#allocation5 + $0xe8] sm:$0xff]
    %v1611 = vld [vmem:[#allocation5 + $0xf0] sm:$0xff]
    %v1612 = vld [vmem:[#allocation5 + $0x138] sm:$0xff]
    %v1613 = vld [vmem:[#allocation5 + $0x140] sm:$0xff]
    %v1614 = vld [vmem:[#allocation5 + $0x148] sm:$0xff]
    %v1616 = vrot.slane %v1602, 2
    %v1617 = vsel %vm95, %v1616, 0
    %1619 = vmatprep.subr.mxu0 0.0
    %1620 = vmatpush1.msra.mxu0 0.0
    %1621 = vmatprep.subr.mxu0 0.0
    %1622 = vmatpush1.msra.mxu0 0.0
    %1623 = vmatprep.subr.mxu0 0.0
    %1624 = vmatpush1.msra.mxu0 0.0
    %1625 = vmatprep.subr.mxu0 0.0
    %1626 = vmatpush1.msra.mxu0 0.0
    %1627 = vmatprep.subr.mxu0 0.0
    %1628 = vmatpush1.msra.mxu0 0.0
    %1629 = vmatprep.subr.mxu0 0.0
    %1630 = vmatpush1.msra.mxu0 0.0
    %1631 = vmatprep.subr.mxu0 0.0
    %1632 = vmatpush1.msra.mxu0 0.0
    %1633 = vmatprep.subr.mxu0 0.0
    %1634 = vmatpush1.msra.mxu0 0.0
    %1635 = vmatprep.subr.mxu0 0.0
    %1636 = vmatpush1.msra.mxu0 0.0
    %1637 = vmatprep.subr.mxu0 0.0
    %1638 = vmatpush1.msra.mxu0 0.0
    %1639 = vmatprep.subr.mxu0 0.0
    %1640 = vmatpush1.msra.mxu0 0.0
    %1641 = vmatprep.subr.mxu0 0.0
    %1642 = vmatpush1.msra.mxu0 0.0
    %1643 = vmatprep.subr.mxu0 %v1613
    %1644 = vmatpush1.msra.mxu0 %v1612
    %1645 = vmatprep.subr.mxu0 %v1610
    %1646 = vmatpush1.msra.mxu0 %v1609
    %1647 = vmatprep.subr.mxu0 %v1607
    %1648 = vmatpush1.msra.mxu0 %v1606
    %1649 = vmatprep.subr.mxu0 %v1604
    %1650 = vmatpush1.msra.mxu0 %v1603
    %1651 = vmatprep.subr.mxu0 0.0
    %1652 = vmatpush2.msra.mxu0 0.0
    %1653 = vmatprep.subr.mxu0 0.0
    %1654 = vmatpush2.msra.mxu0 0.0
    %1655 = vmatprep.subr.mxu0 0.0
    %1656 = vmatpush2.msra.mxu0 0.0
    %1657 = vmatprep.subr.mxu0 0.0
    %1658 = vmatpush2.msra.mxu0 0.0
    %1659 = vmatprep.subr.mxu0 0.0
    %1660 = vmatpush2.msra.mxu0 0.0
    %1661 = vmatprep.subr.mxu0 0.0
    %1662 = vmatpush2.msra.mxu0 0.0
    %1663 = vmatprep.subr.mxu0 0.0
    %1664 = vmatpush2.msra.mxu0 0.0
    %1665 = vmatprep.subr.mxu0 0.0
    %1666 = vmatpush2.msra.mxu0 0.0
    %1667 = vmatprep.subr.mxu0 0.0
    %1668 = vmatpush2.msra.mxu0 0.0
    %1669 = vmatprep.subr.mxu0 0.0
    %1670 = vmatpush2.msra.mxu0 0.0
    %1671 = vmatprep.subr.mxu0 0.0
    %1672 = vmatpush2.msra.mxu0 0.0
    %1673 = vmatprep.subr.mxu0 0.0
    %1674 = vmatpush2.msra.mxu0 0.0
    %1675 = vmatprep.subr.mxu0 0.0
    %1676 = vmatpush2.msra.mxu0 0.0
    %1677 = vmatprep.subr.mxu0 0.0
    %1678 = vmatpush2.msra.mxu0 0.0
    %1679 = vmatprep.subr.mxu0 0.0
    %1680 = vmatpush2.msra.mxu0 0.0
    %1681 = vmatprep.subr.mxu0 0.0
    %1682 = vmatpush2.msra.mxu0 0.0
    %1683 = vmatprep.mubr.f32.mxu0 0.0
    %1684 = vmatmul.mubr.f32.gmra.mxu0 %v1617
    %v1685 = vpop.f32.mrf.mxu0
    %v1686 = vadd.f32 %v554, %v1685
    %v1687 = vpop.f32.mrf.mxu0
    %v1688 = vadd.f32 %v558, %v1687
    %1689 = vdwg.mxu0
    %1690 = vmatprep.subr.mxu0 0.0
    %1691 = vmatpush1.msra.mxu0 0.0
    %1692 = vmatprep.subr.mxu0 0.0
    %1693 = vmatpush1.msra.mxu0 0.0
    %1694 = vmatprep.subr.mxu0 0.0
    %1695 = vmatpush1.msra.mxu0 0.0
    %1696 = vmatprep.subr.mxu0 0.0
    %1697 = vmatpush1.msra.mxu0 0.0
    %1698 = vmatprep.subr.mxu0 0.0
    %1699 = vmatpush1.msra.mxu0 0.0
    %1700 = vmatprep.subr.mxu0 0.0
    %1701 = vmatpush1.msra.mxu0 0.0
    %1702 = vmatprep.subr.mxu0 0.0
    %1703 = vmatpush1.msra.mxu0 0.0
    %1704 = vmatprep.subr.mxu0 0.0
    %1705 = vmatpush1.msra.mxu0 0.0
    %1706 = vmatprep.subr.mxu0 0.0
    %1707 = vmatpush1.msra.mxu0 0.0
    %1708 = vmatprep.subr.mxu0 0.0
    %1709 = vmatpush1.msra.mxu0 0.0
    %1710 = vmatprep.subr.mxu0 0.0
    %1711 = vmatpush1.msra.mxu0 0.0
    %1712 = vmatprep.subr.mxu0 0.0
    %1713 = vmatpush1.msra.mxu0 0.0
    %1714 = vmatprep.subr.mxu0 0.0
    %1715 = vmatpush1.msra.mxu0 %v1614
    %1716 = vmatprep.subr.mxu0 0.0
    %1717 = vmatpush1.msra.mxu0 %v1611
    %1718 = vmatprep.subr.mxu0 0.0
    %1719 = vmatpush1.msra.mxu0 %v1608
    %1720 = vmatprep.subr.mxu0 0.0
    %1721 = vmatpush1.msra.mxu0 %v1605
    %1722 = vmatprep.subr.mxu0 0.0
    %1723 = vmatpush2.msra.mxu0 0.0
    %1724 = vmatprep.subr.mxu0 0.0
    %1725 = vmatpush2.msra.mxu0 0.0
    %1726 = vmatprep.subr.mxu0 0.0
    %1727 = vmatpush2.msra.mxu0 0.0
    %1728 = vmatprep.subr.mxu0 0.0
    %1729 = vmatpush2.msra.mxu0 0.0
    %1730 = vmatprep.subr.mxu0 0.0
    %1731 = vmatpush2.msra.mxu0 0.0
    %1732 = vmatprep.subr.mxu0 0.0
    %1733 = vmatpush2.msra.mxu0 0.0
    %1734 = vmatprep.subr.mxu0 0.0
    %1735 = vmatpush2.msra.mxu0 0.0
    %1736 = vmatprep.subr.mxu0 0.0
    %1737 = vmatpush2.msra.mxu0 0.0
    %1738 = vmatprep.subr.mxu0 0.0
    %1739 = vmatpush2.msra.mxu0 0.0
    %1740 = vmatprep.subr.mxu0 0.0
    %1741 = vmatpush2.msra.mxu0 0.0
    %1742 = vmatprep.subr.mxu0 0.0
    %1743 = vmatpush2.msra.mxu0 0.0
    %1744 = vmatprep.subr.mxu0 0.0
    %1745 = vmatpush2.msra.mxu0 0.0
    %1746 = vmatprep.subr.mxu0 0.0
    %1747 = vmatpush2.msra.mxu0 0.0
    %1748 = vmatprep.subr.mxu0 0.0
    %1749 = vmatpush2.msra.mxu0 0.0
    %1750 = vmatprep.subr.mxu0 0.0
    %1751 = vmatpush2.msra.mxu0 0.0
    %1752 = vmatprep.subr.mxu0 0.0
    %1753 = vmatpush2.msra.mxu0 0.0
    %1754 = vmatprep.mubr.f32.mxu0 0.0
    %1755 = vmatmul.mubr.f32.gmra.mxu0 %v1617
    %v1756 = vpop.f32.mrf.mxu0
    %v1757 = vadd.f32 %v562, %v1756
    %v1758 = vpop.f32.mrf.mxu0
    %1759 = vdwg.mxu0
    %v1760 = vadd.f32 %v1686, %v1435
    %v1761 = vxor.u32 %v1760, 2147483648
    %v1762 = vmul.f32 %v1761, 1.442695
    %v1763 = vpow.pop %v1762
    %v1764 = vadd.f32 %v1763, 1.0
    %v1765 = vrcp.pop %v1764
    %v1766 = vmul.f32 1.0, %v1765
    %v1767 = vadd.f32 %v1688, %v1504
    %v1768 = vxor.u32 %v1767, 2147483648
    %v1769 = vmul.f32 %v1768, 1.442695
    %v1770 = vpow.pop %v1769
    %v1771 = vadd.f32 %v1770, 1.0
    %v1772 = vrcp.pop %v1771
    %v1773 = vmul.f32 1.0, %v1772
    %v1774 = vmul.f32 %v1766, %v1506
    %v1775 = vadd.f32 %v1757, %v1774
    %v1776 = vtanh.pop %v1775
    %v1777 = vsub.f32 1.0, %v1773
    %v1778 = vmul.f32 %v1777, %v1776
    %v1779 = vmul.f32 %v1773, %v1255
    %v1780 = vadd.f32 %v1778, %v1779
    %v1781 = vld [vmem:[#allocation5 + $0x50] sm:$0xff]
    %v1782 = vld [vmem:[#allocation5 + $0xa8] sm:$0xff]
    %v1783 = vld [vmem:[#allocation5 + $0x100] sm:$0xff]
    %v1784 = vld [vmem:[#allocation5 + $0x158] sm:$0xff]
    %v1786 = vsel %vm95, %v1780, 0
    %1788 = vmatprep.subr.mxu0 0.0
    %1789 = vmatpush1.msra.mxu0 0.0
    %1790 = vmatprep.subr.mxu0 0.0
    %1791 = vmatpush1.msra.mxu0 0.0
    %1792 = vmatprep.subr.mxu0 0.0
    %1793 = vmatpush1.msra.mxu0 0.0
    %1794 = vmatprep.subr.mxu0 0.0
    %1795 = vmatpush1.msra.mxu0 0.0
    %1796 = vmatprep.subr.mxu0 0.0
    %1797 = vmatpush1.msra.mxu0 0.0
    %1798 = vmatprep.subr.mxu0 0.0
    %1799 = vmatpush1.msra.mxu0 0.0
    %1800 = vmatprep.subr.mxu0 0.0
    %1801 = vmatpush1.msra.mxu0 0.0
    %1802 = vmatprep.subr.mxu0 0.0
    %1803 = vmatpush1.msra.mxu0 0.0
    %1804 = vmatprep.subr.mxu0 0.0
    %1805 = vmatpush1.msra.mxu0 0.0
    %1806 = vmatprep.subr.mxu0 0.0
    %1807 = vmatpush1.msra.mxu0 0.0
    %1808 = vmatprep.subr.mxu0 0.0
    %1809 = vmatpush1.msra.mxu0 0.0
    %1810 = vmatprep.subr.mxu0 0.0
    %1811 = vmatpush1.msra.mxu0 0.0
    %1812 = vmatprep.subr.mxu0 0.0
    %1813 = vmatpush1.msra.mxu0 %v1784
    %1814 = vmatprep.subr.mxu0 0.0
    %1815 = vmatpush1.msra.mxu0 %v1783
    %1816 = vmatprep.subr.mxu0 0.0
    %1817 = vmatpush1.msra.mxu0 %v1782
    %1818 = vmatprep.subr.mxu0 0.0
    %1819 = vmatpush1.msra.mxu0 %v1781
    %1820 = vmatprep.subr.mxu0 0.0
    %1821 = vmatpush2.msra.mxu0 0.0
    %1822 = vmatprep.subr.mxu0 0.0
    %1823 = vmatpush2.msra.mxu0 0.0
    %1824 = vmatprep.subr.mxu0 0.0
    %1825 = vmatpush2.msra.mxu0 0.0
    %1826 = vmatprep.subr.mxu0 0.0
    %1827 = vmatpush2.msra.mxu0 0.0
    %1828 = vmatprep.subr.mxu0 0.0
    %1829 = vmatpush2.msra.mxu0 0.0
    %1830 = vmatprep.subr.mxu0 0.0
    %1831 = vmatpush2.msra.mxu0 0.0
    %1832 = vmatprep.subr.mxu0 0.0
    %1833 = vmatpush2.msra.mxu0 0.0
    %1834 = vmatprep.subr.mxu0 0.0
    %1835 = vmatpush2.msra.mxu0 0.0
    %1836 = vmatprep.subr.mxu0 0.0
    %1837 = vmatpush2.msra.mxu0 0.0
    %1838 = vmatprep.subr.mxu0 0.0
    %1839 = vmatpush2.msra.mxu0 0.0
    %1840 = vmatprep.subr.mxu0 0.0
    %1841 = vmatpush2.msra.mxu0 0.0
    %1842 = vmatprep.subr.mxu0 0.0
    %1843 = vmatpush2.msra.mxu0 0.0
    %1844 = vmatprep.subr.mxu0 0.0
    %1845 = vmatpush2.msra.mxu0 0.0
    %1846 = vmatprep.subr.mxu0 0.0
    %1847 = vmatpush2.msra.mxu0 0.0
    %1848 = vmatprep.subr.mxu0 0.0
    %1849 = vmatpush2.msra.mxu0 0.0
    %1850 = vmatprep.subr.mxu0 0.0
    %1851 = vmatpush2.msra.mxu0 0.0
    %1852 = vmatprep.mubr.f32.mxu0 0.0
    %1853 = vmatmul.mubr.f32.gmra.mxu0 %v1786
    %v1854 = vpop.f32.mrf.mxu0
    %v1855 = vadd.f32 %v261, %v1854
    %v1856 = vpop.f32.mrf.mxu0
    %1857 = vdwg.mxu0
    %v1858 = vsel %vm808, %v1855, -inf
    %1859 = vmax.xlane.f32.xlu0 %v1858
    %v1860 = vpop.xlane.xlu0 %1859
    %v1861 = vsub.f32 %v1855, %v1860
    %v1862 = vmul.f32 %v1861, 1.442695
    %v1863 = vpow.pop %v1862
    %v1864 = vsel %vm808, %v1863, 0.0
    %1865 = vadd.xlane.f32.xlu0 %v1864
    %v1866 = vpop.xlane.xlu0 %1865
    %v1867 = vlog2.pop %v1866
    %v1868 = vmul.f32 %v1867, 0.6931472
    %v1869 = vadd.f32 %v1868, %v1860
    %v1870 = vsub.f32 %v1855, %v1869
    %1871 = vst.msk [vmem:[%s6 + $0x2] sm:$0x1] %vm808, %v1870
    %1872 = vst.msk [vmem:[%s6 + $0xa] sm:$0x1] %vm44, %v1780
    %1874 = vst.msk [vmem:[%s6 + $0x12] sm:$0x1] %vm446, %v1525
    %v1875 = vld [vmem:[#allocation5 + $0x10] sm:$0xff]
    %v1876 = vld [vmem:[#allocation5 + $0x18] sm:$0xff]
    %v1877 = vld [vmem:[#allocation5 + $0x20] sm:$0xff]
    %v1878 = vld [vmem:[#allocation5 + $0x28] sm:$0xff]
    %v1879 = vld [vmem:[#allocation5 + $0x68] sm:$0xff]
    %v1880 = vld [vmem:[#allocation5 + $0x70] sm:$0xff]
    %v1881 = vld [vmem:[#allocation5 + $0x78] sm:$0xff]
    %v1882 = vld [vmem:[#allocation5 + $0x80] sm:$0xff]
    %v1883 = vld [vmem:[#allocation5 + $0xc0] sm:$0xff]
    %v1884 = vld [vmem:[#allocation5 + $0xc8] sm:$0xff]
    %v1885 = vld [vmem:[#allocation5 + $0xd0] sm:$0xff]
    %v1886 = vld [vmem:[#allocation5 + $0xd8] sm:$0xff]
    %v1887 = vld [vmem:[#allocation5 + $0x118] sm:$0xff]
    %v1888 = vld [vmem:[#allocation5 + $0x120] sm:$0xff]
    %v1889 = vld [vmem:[#allocation5 + $0x128] sm:$0xff]
    %v1890 = vld [vmem:[#allocation5 + $0x130] sm:$0xff]
    %1891 = vmatprep.subr.mxu0 0.0
    %1892 = vmatpush1.msra.mxu0 0.0
    %1893 = vmatprep.subr.mxu0 0.0
    %1894 = vmatpush1.msra.mxu0 0.0
    %1895 = vmatprep.subr.mxu0 0.0
    %1896 = vmatpush1.msra.mxu0 0.0
    %1897 = vmatprep.subr.mxu0 0.0
    %1898 = vmatpush1.msra.mxu0 0.0
    %1899 = vmatprep.subr.mxu0 0.0
    %1900 = vmatpush1.msra.mxu0 0.0
    %1901 = vmatprep.subr.mxu0 0.0
    %1902 = vmatpush1.msra.mxu0 0.0
    %1903 = vmatprep.subr.mxu0 0.0
    %1904 = vmatpush1.msra.mxu0 0.0
    %1905 = vmatprep.subr.mxu0 0.0
    %1906 = vmatpush1.msra.mxu0 0.0
    %1907 = vmatprep.subr.mxu0 0.0
    %1908 = vmatpush1.msra.mxu0 0.0
    %1909 = vmatprep.subr.mxu0 0.0
    %1910 = vmatpush1.msra.mxu0 0.0
    %1911 = vmatprep.subr.mxu0 0.0
    %1912 = vmatpush1.msra.mxu0 0.0
    %1913 = vmatprep.subr.mxu0 0.0
    %1914 = vmatpush1.msra.mxu0 0.0
    %1915 = vmatprep.subr.mxu0 %v1888
    %1916 = vmatpush1.msra.mxu0 %v1887
    %1917 = vmatprep.subr.mxu0 %v1884
    %1918 = vmatpush1.msra.mxu0 %v1883
    %1919 = vmatprep.subr.mxu0 %v1880
    %1920 = vmatpush1.msra.mxu0 %v1879
    %1921 = vmatprep.subr.mxu0 %v1876
    %1922 = vmatpush1.msra.mxu0 %v1875
    %1923 = vmatprep.subr.mxu0 0.0
    %1924 = vmatpush2.msra.mxu0 0.0
    %1925 = vmatprep.subr.mxu0 0.0
    %1926 = vmatpush2.msra.mxu0 0.0
    %1927 = vmatprep.subr.mxu0 0.0
    %1928 = vmatpush2.msra.mxu0 0.0
    %1929 = vmatprep.subr.mxu0 0.0
    %1930 = vmatpush2.msra.mxu0 0.0
    %1931 = vmatprep.subr.mxu0 0.0
    %1932 = vmatpush2.msra.mxu0 0.0
    %1933 = vmatprep.subr.mxu0 0.0
    %1934 = vmatpush2.msra.mxu0 0.0
    %1935 = vmatprep.subr.mxu0 0.0
    %1936 = vmatpush2.msra.mxu0 0.0
    %1937 = vmatprep.subr.mxu0 0.0
    %1938 = vmatpush2.msra.mxu0 0.0
    %1939 = vmatprep.subr.mxu0 0.0
    %1940 = vmatpush2.msra.mxu0 0.0
    %1941 = vmatprep.subr.mxu0 0.0
    %1942 = vmatpush2.msra.mxu0 0.0
    %1943 = vmatprep.subr.mxu0 0.0
    %1944 = vmatpush2.msra.mxu0 0.0
    %1945 = vmatprep.subr.mxu0 0.0
    %1946 = vmatpush2.msra.mxu0 0.0
    %1947 = vmatprep.subr.mxu0 0.0
    %1948 = vmatpush2.msra.mxu0 0.0
    %1949 = vmatprep.subr.mxu0 0.0
    %1950 = vmatpush2.msra.mxu0 0.0
    %1951 = vmatprep.subr.mxu0 0.0
    %1952 = vmatpush2.msra.mxu0 0.0
    %1953 = vmatprep.subr.mxu0 0.0
    %1954 = vmatpush2.msra.mxu0 0.0
    %1955 = vmatprep.mubr.f32.mxu0 0.0
    %1956 = vmatmul.mubr.f32.gmra.mxu0 %v1786
    %v1957 = vpop.f32.mrf.mxu0
    %v1958 = vadd.f32 %v283, %v1957
    %v1959 = vpop.f32.mrf.mxu0
    %v1960 = vadd.f32 %v287, %v1959
    %1961 = vdwg.mxu0
    %1962 = vmatprep.subr.mxu0 0.0
    %1963 = vmatpush1.msra.mxu0 0.0
    %1964 = vmatprep.subr.mxu0 0.0
    %1965 = vmatpush1.msra.mxu0 0.0
    %1966 = vmatprep.subr.mxu0 0.0
    %1967 = vmatpush1.msra.mxu0 0.0
    %1968 = vmatprep.subr.mxu0 0.0
    %1969 = vmatpush1.msra.mxu0 0.0
    %1970 = vmatprep.subr.mxu0 0.0
    %1971 = vmatpush1.msra.mxu0 0.0
    %1972 = vmatprep.subr.mxu0 0.0
    %1973 = vmatpush1.msra.mxu0 0.0
    %1974 = vmatprep.subr.mxu0 0.0
    %1975 = vmatpush1.msra.mxu0 0.0
    %1976 = vmatprep.subr.mxu0 0.0
    %1977 = vmatpush1.msra.mxu0 0.0
    %1978 = vmatprep.subr.mxu0 0.0
    %1979 = vmatpush1.msra.mxu0 0.0
    %1980 = vmatprep.subr.mxu0 0.0
    %1981 = vmatpush1.msra.mxu0 0.0
    %1982 = vmatprep.subr.mxu0 0.0
    %1983 = vmatpush1.msra.mxu0 0.0
    %1984 = vmatprep.subr.mxu0 0.0
    %1985 = vmatpush1.msra.mxu0 0.0
    %1986 = vmatprep.subr.mxu0 %v1890
    %1987 = vmatpush1.msra.mxu0 %v1889
    %1988 = vmatprep.subr.mxu0 %v1886
    %1989 = vmatpush1.msra.mxu0 %v1885
    %1990 = vmatprep.subr.mxu0 %v1882
    %1991 = vmatpush1.msra.mxu0 %v1881
    %1992 = vmatprep.subr.mxu0 %v1878
    %1993 = vmatpush1.msra.mxu0 %v1877
    %1994 = vmatprep.subr.mxu0 0.0
    %1995 = vmatpush2.msra.mxu0 0.0
    %1996 = vmatprep.subr.mxu0 0.0
    %1997 = vmatpush2.msra.mxu0 0.0
    %1998 = vmatprep.subr.mxu0 0.0
    %1999 = vmatpush2.msra.mxu0 0.0
    %2000 = vmatprep.subr.mxu0 0.0
    %2001 = vmatpush2.msra.mxu0 0.0
    %2002 = vmatprep.subr.mxu0 0.0
    %2003 = vmatpush2.msra.mxu0 0.0
    %2004 = vmatprep.subr.mxu0 0.0
    %2005 = vmatpush2.msra.mxu0 0.0
    %2006 = vmatprep.subr.mxu0 0.0
    %2007 = vmatpush2.msra.mxu0 0.0
    %2008 = vmatprep.subr.mxu0 0.0
    %2009 = vmatpush2.msra.mxu0 0.0
    %2010 = vmatprep.subr.mxu0 0.0
    %2011 = vmatpush2.msra.mxu0 0.0
    %2012 = vmatprep.subr.mxu0 0.0
    %2013 = vmatpush2.msra.mxu0 0.0
    %2014 = vmatprep.subr.mxu0 0.0
    %2015 = vmatpush2.msra.mxu0 0.0
    %2016 = vmatprep.subr.mxu0 0.0
    %2017 = vmatpush2.msra.mxu0 0.0
    %2018 = vmatprep.subr.mxu0 0.0
    %2019 = vmatpush2.msra.mxu0 0.0
    %2020 = vmatprep.subr.mxu0 0.0
    %2021 = vmatpush2.msra.mxu0 0.0
    %2022 = vmatprep.subr.mxu0 0.0
    %2023 = vmatpush2.msra.mxu0 0.0
    %2024 = vmatprep.subr.mxu0 0.0
    %2025 = vmatpush2.msra.mxu0 0.0
    %2026 = vmatprep.mubr.f32.mxu0 0.0
    %2027 = vmatmul.mubr.f32.gmra.mxu0 %v1786
    %v2028 = vpop.f32.mrf.mxu0
    %v2029 = vadd.f32 %v291, %v2028
    %v2030 = vpop.f32.mrf.mxu0
    %v2031 = vadd.f32 %v295, %v2030
    %2032 = vdwg.mxu0
    %v2034 = vrot.slane %v1958, 5
    %v2036 = vadd.f32 %v166, %v2034
    %vm2037 = vcmask 76803
    %v2038 = vsel %vm2037, %v2036, -inf
    %2039 = vmax.xlane.f32.xlu0 %v2038
    %v2040 = vpop.xlane.xlu0 %2039
    %v2041 = vsub.f32 %v2036, %v2040
    %v2042 = vmul.f32 %v2041, 1.442695
    %v2043 = vpow.pop %v2042
    %v2044 = vsel %vm2037, %v2043, 0.0
    %2045 = vadd.xlane.f32.xlu0 %v2044
    %v2046 = vpop.xlane.xlu0 %2045
    %v2047 = vrcp.pop %v2046
    %v2048 = vmul.f32 %v2043, %v2047
    %v2050 = vrot.slane %v2048, 3
    %v2051 = vsel %vm458, %v2050, 0
    %2053 = vmatprep.subr.mxu0 0.0
    %2054 = vmatpush1.msra.mxu0 0.0
    %2055 = vmatprep.subr.mxu0 0.0
    %2056 = vmatpush1.msra.mxu0 0.0
    %2057 = vmatprep.subr.mxu0 0.0
    %2058 = vmatpush1.msra.mxu0 0.0
    %2059 = vmatprep.subr.mxu0 0.0
    %2060 = vmatpush1.msra.mxu0 0.0
    %2061 = vmatprep.subr.mxu0 0.0
    %2062 = vmatpush1.msra.mxu0 0.0
    %2063 = vmatprep.subr.mxu0 0.0
    %2064 = vmatpush1.msra.mxu0 0.0
    %2065 = vmatprep.subr.mxu0 0.0
    %2066 = vmatpush1.msra.mxu0 0.0
    %2067 = vmatprep.subr.mxu0 0.0
    %2068 = vmatpush1.msra.mxu0 0.0
    %2069 = vmatprep.subr.mxu0 0.0
    %2070 = vmatpush1.msra.mxu0 0.0
    %2071 = vmatprep.subr.mxu0 0.0
    %2072 = vmatpush1.msra.mxu0 0.0
    %2073 = vmatprep.subr.mxu0 0.0
    %2074 = vmatpush1.msra.mxu0 0.0
    %2075 = vmatprep.subr.mxu0 0.0
    %2076 = vmatpush1.msra.mxu0 0.0
    %2077 = vmatprep.subr.mxu0 0.0
    %2078 = vmatpush1.msra.mxu0 0.0
    %2079 = vmatprep.subr.mxu0 0.0
    %2080 = vmatpush1.msra.mxu0 0.0
    %2081 = vmatprep.subr.mxu0 0.0
    %2082 = vmatpush1.msra.mxu0 %v464
    %2083 = vmatprep.subr.mxu0 0.0
    %2084 = vmatpush1.msra.mxu0 %v249
    %2085 = vmatprep.subr.mxu0 0.0
    %2086 = vmatpush2.msra.mxu0 0.0
    %2087 = vmatprep.subr.mxu0 0.0
    %2088 = vmatpush2.msra.mxu0 0.0
    %2089 = vmatprep.subr.mxu0 0.0
    %2090 = vmatpush2.msra.mxu0 0.0
    %2091 = vmatprep.subr.mxu0 0.0
    %2092 = vmatpush2.msra.mxu0 0.0
    %2093 = vmatprep.subr.mxu0 0.0
    %2094 = vmatpush2.msra.mxu0 0.0
    %2095 = vmatprep.subr.mxu0 0.0
    %2096 = vmatpush2.msra.mxu0 0.0
    %2097 = vmatprep.subr.mxu0 0.0
    %2098 = vmatpush2.msra.mxu0 0.0
    %2099 = vmatprep.subr.mxu0 0.0
    %2100 = vmatpush2.msra.mxu0 0.0
    %2101 = vmatprep.subr.mxu0 0.0
    %2102 = vmatpush2.msra.mxu0 0.0
    %2103 = vmatprep.subr.mxu0 0.0
    %2104 = vmatpush2.msra.mxu0 0.0
    %2105 = vmatprep.subr.mxu0 0.0
    %2106 = vmatpush2.msra.mxu0 0.0
    %2107 = vmatprep.subr.mxu0 0.0
    %2108 = vmatpush2.msra.mxu0 0.0
    %2109 = vmatprep.subr.mxu0 0.0
    %2110 = vmatpush2.msra.mxu0 0.0
    %2111 = vmatprep.subr.mxu0 0.0
    %2112 = vmatpush2.msra.mxu0 0.0
    %2113 = vmatprep.subr.mxu0 0.0
    %2114 = vmatpush2.msra.mxu0 0.0
    %2115 = vmatprep.subr.mxu0 0.0
    %2116 = vmatpush2.msra.mxu0 0.0
    %2117 = vmatprep.mubr.f32.mxu0 0.0
    %2118 = vmatmul.mubr.f32.gmra.mxu0 %v2051
    %v2119 = vpop.f32.mrf.mxu0
    %v2120 = vadd.f32 0.0, %v2119
    %v2121 = vpop.f32.mrf.mxu0
    %2122 = vdwg.mxu0
    %v2124 = vrot.slane %v2120, 5
    %v2126 = vadd.f32 %v168, %v2124
    %v2127 = vmax.f32 %v2126, 0.0
    %v2128 = vld [vmem:[#allocation5 + $0x30] sm:$0xff]
    %v2129 = vld [vmem:[#allocation5 + $0x38] sm:$0xff]
    %v2130 = vld [vmem:[#allocation5 + $0x40] sm:$0xff]
    %v2131 = vld [vmem:[#allocation5 + $0x88] sm:$0xff]
    %v2132 = vld [vmem:[#allocation5 + $0x90] sm:$0xff]
    %v2133 = vld [vmem:[#allocation5 + $0x98] sm:$0xff]
    %v2134 = vld [vmem:[#allocation5 + $0xe0] sm:$0xff]
    %v2135 = vld [vmem:[#allocation5 + $0xe8] sm:$0xff]
    %v2136 = vld [vmem:[#allocation5 + $0xf0] sm:$0xff]
    %v2137 = vld [vmem:[#allocation5 + $0x138] sm:$0xff]
    %v2138 = vld [vmem:[#allocation5 + $0x140] sm:$0xff]
    %v2139 = vld [vmem:[#allocation5 + $0x148] sm:$0xff]
    %v2141 = vrot.slane %v2127, 3
    %v2142 = vsel %vm95, %v2141, 0
    %2144 = vmatprep.subr.mxu0 0.0
    %2145 = vmatpush1.msra.mxu0 0.0
    %2146 = vmatprep.subr.mxu0 0.0
    %2147 = vmatpush1.msra.mxu0 0.0
    %2148 = vmatprep.subr.mxu0 0.0
    %2149 = vmatpush1.msra.mxu0 0.0
    %2150 = vmatprep.subr.mxu0 0.0
    %2151 = vmatpush1.msra.mxu0 0.0
    %2152 = vmatprep.subr.mxu0 0.0
    %2153 = vmatpush1.msra.mxu0 0.0
    %2154 = vmatprep.subr.mxu0 0.0
    %2155 = vmatpush1.msra.mxu0 0.0
    %2156 = vmatprep.subr.mxu0 0.0
    %2157 = vmatpush1.msra.mxu0 0.0
    %2158 = vmatprep.subr.mxu0 0.0
    %2159 = vmatpush1.msra.mxu0 0.0
    %2160 = vmatprep.subr.mxu0 0.0
    %2161 = vmatpush1.msra.mxu0 0.0
    %2162 = vmatprep.subr.mxu0 0.0
    %2163 = vmatpush1.msra.mxu0 0.0
    %2164 = vmatprep.subr.mxu0 0.0
    %2165 = vmatpush1.msra.mxu0 0.0
    %2166 = vmatprep.subr.mxu0 0.0
    %2167 = vmatpush1.msra.mxu0 0.0
    %2168 = vmatprep.subr.mxu0 %v2138
    %2169 = vmatpush1.msra.mxu0 %v2137
    %2170 = vmatprep.subr.mxu0 %v2135
    %2171 = vmatpush1.msra.mxu0 %v2134
    %2172 = vmatprep.subr.mxu0 %v2132
    %2173 = vmatpush1.msra.mxu0 %v2131
    %2174 = vmatprep.subr.mxu0 %v2129
    %2175 = vmatpush1.msra.mxu0 %v2128
    %2176 = vmatprep.subr.mxu0 0.0
    %2177 = vmatpush2.msra.mxu0 0.0
    %2178 = vmatprep.subr.mxu0 0.0
    %2179 = vmatpush2.msra.mxu0 0.0
    %2180 = vmatprep.subr.mxu0 0.0
    %2181 = vmatpush2.msra.mxu0 0.0
    %2182 = vmatprep.subr.mxu0 0.0
    %2183 = vmatpush2.msra.mxu0 0.0
    %2184 = vmatprep.subr.mxu0 0.0
    %2185 = vmatpush2.msra.mxu0 0.0
    %2186 = vmatprep.subr.mxu0 0.0
    %2187 = vmatpush2.msra.mxu0 0.0
    %2188 = vmatprep.subr.mxu0 0.0
    %2189 = vmatpush2.msra.mxu0 0.0
    %2190 = vmatprep.subr.mxu0 0.0
    %2191 = vmatpush2.msra.mxu0 0.0
    %2192 = vmatprep.subr.mxu0 0.0
    %2193 = vmatpush2.msra.mxu0 0.0
    %2194 = vmatprep.subr.mxu0 0.0
    %2195 = vmatpush2.msra.mxu0 0.0
    %2196 = vmatprep.subr.mxu0 0.0
    %2197 = vmatpush2.msra.mxu0 0.0
    %2198 = vmatprep.subr.mxu0 0.0
    %2199 = vmatpush2.msra.mxu0 0.0
    %2200 = vmatprep.subr.mxu0 0.0
    %2201 = vmatpush2.msra.mxu0 0.0
    %2202 = vmatprep.subr.mxu0 0.0
    %2203 = vmatpush2.msra.mxu0 0.0
    %2204 = vmatprep.subr.mxu0 0.0
    %2205 = vmatpush2.msra.mxu0 0.0
    %2206 = vmatprep.subr.mxu0 0.0
    %2207 = vmatpush2.msra.mxu0 0.0
    %2208 = vmatprep.mubr.f32.mxu0 0.0
    %2209 = vmatmul.mubr.f32.gmra.mxu0 %v2142
    %v2210 = vpop.f32.mrf.mxu0
    %v2211 = vadd.f32 %v554, %v2210
    %v2212 = vpop.f32.mrf.mxu0
    %v2213 = vadd.f32 %v558, %v2212
    %2214 = vdwg.mxu0
    %2215 = vmatprep.subr.mxu0 0.0
    %2216 = vmatpush1.msra.mxu0 0.0
    %2217 = vmatprep.subr.mxu0 0.0
    %2218 = vmatpush1.msra.mxu0 0.0
    %2219 = vmatprep.subr.mxu0 0.0
    %2220 = vmatpush1.msra.mxu0 0.0
    %2221 = vmatprep.subr.mxu0 0.0
    %2222 = vmatpush1.msra.mxu0 0.0
    %2223 = vmatprep.subr.mxu0 0.0
    %2224 = vmatpush1.msra.mxu0 0.0
    %2225 = vmatprep.subr.mxu0 0.0
    %2226 = vmatpush1.msra.mxu0 0.0
    %2227 = vmatprep.subr.mxu0 0.0
    %2228 = vmatpush1.msra.mxu0 0.0
    %2229 = vmatprep.subr.mxu0 0.0
    %2230 = vmatpush1.msra.mxu0 0.0
    %2231 = vmatprep.subr.mxu0 0.0
    %2232 = vmatpush1.msra.mxu0 0.0
    %2233 = vmatprep.subr.mxu0 0.0
    %2234 = vmatpush1.msra.mxu0 0.0
    %2235 = vmatprep.subr.mxu0 0.0
    %2236 = vmatpush1.msra.mxu0 0.0
    %2237 = vmatprep.subr.mxu0 0.0
    %2238 = vmatpush1.msra.mxu0 0.0
    %2239 = vmatprep.subr.mxu0 0.0
    %2240 = vmatpush1.msra.mxu0 %v2139
    %2241 = vmatprep.subr.mxu0 0.0
    %2242 = vmatpush1.msra.mxu0 %v2136
    %2243 = vmatprep.subr.mxu0 0.0
    %2244 = vmatpush1.msra.mxu0 %v2133
    %2245 = vmatprep.subr.mxu0 0.0
    %2246 = vmatpush1.msra.mxu0 %v2130
    %2247 = vmatprep.subr.mxu0 0.0
    %2248 = vmatpush2.msra.mxu0 0.0
    %2249 = vmatprep.subr.mxu0 0.0
    %2250 = vmatpush2.msra.mxu0 0.0
    %2251 = vmatprep.subr.mxu0 0.0
    %2252 = vmatpush2.msra.mxu0 0.0
    %2253 = vmatprep.subr.mxu0 0.0
    %2254 = vmatpush2.msra.mxu0 0.0
    %2255 = vmatprep.subr.mxu0 0.0
    %2256 = vmatpush2.msra.mxu0 0.0
    %2257 = vmatprep.subr.mxu0 0.0
    %2258 = vmatpush2.msra.mxu0 0.0
    %2259 = vmatprep.subr.mxu0 0.0
    %2260 = vmatpush2.msra.mxu0 0.0
    %2261 = vmatprep.subr.mxu0 0.0
    %2262 = vmatpush2.msra.mxu0 0.0
    %2263 = vmatprep.subr.mxu0 0.0
    %2264 = vmatpush2.msra.mxu0 0.0
    %2265 = vmatprep.subr.mxu0 0.0
    %2266 = vmatpush2.msra.mxu0 0.0
    %2267 = vmatprep.subr.mxu0 0.0
    %2268 = vmatpush2.msra.mxu0 0.0
    %2269 = vmatprep.subr.mxu0 0.0
    %2270 = vmatpush2.msra.mxu0 0.0
    %2271 = vmatprep.subr.mxu0 0.0
    %2272 = vmatpush2.msra.mxu0 0.0
    %2273 = vmatprep.subr.mxu0 0.0
    %2274 = vmatpush2.msra.mxu0 0.0
    %2275 = vmatprep.subr.mxu0 0.0
    %2276 = vmatpush2.msra.mxu0 0.0
    %2277 = vmatprep.subr.mxu0 0.0
    %2278 = vmatpush2.msra.mxu0 0.0
    %2279 = vmatprep.mubr.f32.mxu0 0.0
    %2280 = vmatmul.mubr.f32.gmra.mxu0 %v2142
    %v2281 = vpop.f32.mrf.mxu0
    %v2282 = vadd.f32 %v562, %v2281
    %v2283 = vpop.f32.mrf.mxu0
    %2284 = vdwg.mxu0
    %v2285 = vadd.f32 %v2211, %v1960
    %v2286 = vxor.u32 %v2285, 2147483648
    %v2287 = vmul.f32 %v2286, 1.442695
    %v2288 = vpow.pop %v2287
    %v2289 = vadd.f32 %v2288, 1.0
    %v2290 = vrcp.pop %v2289
    %v2291 = vmul.f32 1.0, %v2290
    %v2292 = vadd.f32 %v2213, %v2029
    %v2293 = vxor.u32 %v2292, 2147483648
    %v2294 = vmul.f32 %v2293, 1.442695
    %v2295 = vpow.pop %v2294
    %v2296 = vadd.f32 %v2295, 1.0
    %v2297 = vrcp.pop %v2296
    %v2298 = vmul.f32 1.0, %v2297
    %v2299 = vmul.f32 %v2291, %v2031
    %v2300 = vadd.f32 %v2282, %v2299
    %v2301 = vtanh.pop %v2300
    %v2302 = vsub.f32 1.0, %v2298
    %v2303 = vmul.f32 %v2302, %v2301
    %v2304 = vmul.f32 %v2298, %v1780
    %v2305 = vadd.f32 %v2303, %v2304
    %v2306 = vld [vmem:[#allocation5 + $0x50] sm:$0xff]
    %v2307 = vld [vmem:[#allocation5 + $0xa8] sm:$0xff]
    %v2308 = vld [vmem:[#allocation5 + $0x100] sm:$0xff]
    %v2309 = vld [vmem:[#allocation5 + $0x158] sm:$0xff]
    %v2311 = vsel %vm95, %v2305, 0
    %2313 = vmatprep.subr.mxu0 0.0
    %2314 = vmatpush1.msra.mxu0 0.0
    %2315 = vmatprep.subr.mxu0 0.0
    %2316 = vmatpush1.msra.mxu0 0.0
    %2317 = vmatprep.subr.mxu0 0.0
    %2318 = vmatpush1.msra.mxu0 0.0
    %2319 = vmatprep.subr.mxu0 0.0
    %2320 = vmatpush1.msra.mxu0 0.0
    %2321 = vmatprep.subr.mxu0 0.0
    %2322 = vmatpush1.msra.mxu0 0.0
    %2323 = vmatprep.subr.mxu0 0.0
    %2324 = vmatpush1.msra.mxu0 0.0
    %2325 = vmatprep.subr.mxu0 0.0
    %2326 = vmatpush1.msra.mxu0 0.0
    %2327 = vmatprep.subr.mxu0 0.0
    %2328 = vmatpush1.msra.mxu0 0.0
    %2329 = vmatprep.subr.mxu0 0.0
    %2330 = vmatpush1.msra.mxu0 0.0
    %2331 = vmatprep.subr.mxu0 0.0
    %2332 = vmatpush1.msra.mxu0 0.0
    %2333 = vmatprep.subr.mxu0 0.0
    %2334 = vmatpush1.msra.mxu0 0.0
    %2335 = vmatprep.subr.mxu0 0.0
    %2336 = vmatpush1.msra.mxu0 0.0
    %2337 = vmatprep.subr.mxu0 0.0
    %2338 = vmatpush1.msra.mxu0 %v2309
    %2339 = vmatprep.subr.mxu0 0.0
    %2340 = vmatpush1.msra.mxu0 %v2308
    %2341 = vmatprep.subr.mxu0 0.0
    %2342 = vmatpush1.msra.mxu0 %v2307
    %2343 = vmatprep.subr.mxu0 0.0
    %2344 = vmatpush1.msra.mxu0 %v2306
    %2345 = vmatprep.subr.mxu0 0.0
    %2346 = vmatpush2.msra.mxu0 0.0
    %2347 = vmatprep.subr.mxu0 0.0
    %2348 = vmatpush2.msra.mxu0 0.0
    %2349 = vmatprep.subr.mxu0 0.0
    %2350 = vmatpush2.msra.mxu0 0.0
    %2351 = vmatprep.subr.mxu0 0.0
    %2352 = vmatpush2.msra.mxu0 0.0
    %2353 = vmatprep.subr.mxu0 0.0
    %2354 = vmatpush2.msra.mxu0 0.0
    %2355 = vmatprep.subr.mxu0 0.0
    %2356 = vmatpush2.msra.mxu0 0.0
    %2357 = vmatprep.subr.mxu0 0.0
    %2358 = vmatpush2.msra.mxu0 0.0
    %2359 = vmatprep.subr.mxu0 0.0
    %2360 = vmatpush2.msra.mxu0 0.0
    %2361 = vmatprep.subr.mxu0 0.0
    %2362 = vmatpush2.msra.mxu0 0.0
    %2363 = vmatprep.subr.mxu0 0.0
    %2364 = vmatpush2.msra.mxu0 0.0
    %2365 = vmatprep.subr.mxu0 0.0
    %2366 = vmatpush2.msra.mxu0 0.0
    %2367 = vmatprep.subr.mxu0 0.0
    %2368 = vmatpush2.msra.mxu0 0.0
    %2369 = vmatprep.subr.mxu0 0.0
    %2370 = vmatpush2.msra.mxu0 0.0
    %2371 = vmatprep.subr.mxu0 0.0
    %2372 = vmatpush2.msra.mxu0 0.0
    %2373 = vmatprep.subr.mxu0 0.0
    %2374 = vmatpush2.msra.mxu0 0.0
    %2375 = vmatprep.subr.mxu0 0.0
    %2376 = vmatpush2.msra.mxu0 0.0
    %2377 = vmatprep.mubr.f32.mxu0 0.0
    %2378 = vmatmul.mubr.f32.gmra.mxu0 %v2311
    %v2379 = vpop.f32.mrf.mxu0
    %v2380 = vadd.f32 %v261, %v2379
    %v2381 = vpop.f32.mrf.mxu0
    %2382 = vdwg.mxu0
    %v2383 = vsel %vm808, %v2380, -inf
    %2384 = vmax.xlane.f32.xlu0 %v2383
    %v2385 = vpop.xlane.xlu0 %2384
    %v2386 = vsub.f32 %v2380, %v2385
    %v2387 = vmul.f32 %v2386, 1.442695
    %v2388 = vpow.pop %v2387
    %v2389 = vsel %vm808, %v2388, 0.0
    %2390 = vadd.xlane.f32.xlu0 %v2389
    %v2391 = vpop.xlane.xlu0 %2390
    %v2392 = vlog2.pop %v2391
    %v2393 = vmul.f32 %v2392, 0.6931472
    %v2394 = vadd.f32 %v2393, %v2385
    %v2395 = vsub.f32 %v2380, %v2394
    %2396 = vst.msk [vmem:[%s6 + $0x3] sm:$0x1] %vm808, %v2395
    %2397 = vst.msk [vmem:[%s6 + $0xb] sm:$0x1] %vm44, %v2305
    %2399 = vst.msk [vmem:[%s6 + $0x13] sm:$0x1] %vm446, %v2050
    %v2400 = vld [vmem:[#allocation5 + $0x10] sm:$0xff]
    %v2401 = vld [vmem:[#allocation5 + $0x18] sm:$0xff]
    %v2402 = vld [vmem:[#allocation5 + $0x20] sm:$0xff]
    %v2403 = vld [vmem:[#allocation5 + $0x28] sm:$0xff]
    %v2404 = vld [vmem:[#allocation5 + $0x68] sm:$0xff]
    %v2405 = vld [vmem:[#allocation5 + $0x70] sm:$0xff]
    %v2406 = vld [vmem:[#allocation5 + $0x78] sm:$0xff]
    %v2407 = vld [vmem:[#allocation5 + $0x80] sm:$0xff]
    %v2408 = vld [vmem:[#allocation5 + $0xc0] sm:$0xff]
    %v2409 = vld [vmem:[#allocation5 + $0xc8] sm:$0xff]
    %v2410 = vld [vmem:[#allocation5 + $0xd0] sm:$0xff]
    %v2411 = vld [vmem:[#allocation5 + $0xd8] sm:$0xff]
    %v2412 = vld [vmem:[#allocation5 + $0x118] sm:$0xff]
    %v2413 = vld [vmem:[#allocation5 + $0x120] sm:$0xff]
    %v2414 = vld [vmem:[#allocation5 + $0x128] sm:$0xff]
    %v2415 = vld [vmem:[#allocation5 + $0x130] sm:$0xff]
    %2416 = vmatprep.subr.mxu0 0.0
    %2417 = vmatpush1.msra.mxu0 0.0
    %2418 = vmatprep.subr.mxu0 0.0
    %2419 = vmatpush1.msra.mxu0 0.0
    %2420 = vmatprep.subr.mxu0 0.0
    %2421 = vmatpush1.msra.mxu0 0.0
    %2422 = vmatprep.subr.mxu0 0.0
    %2423 = vmatpush1.msra.mxu0 0.0
    %2424 = vmatprep.subr.mxu0 0.0
    %2425 = vmatpush1.msra.mxu0 0.0
    %2426 = vmatprep.subr.mxu0 0.0
    %2427 = vmatpush1.msra.mxu0 0.0
    %2428 = vmatprep.subr.mxu0 0.0
    %2429 = vmatpush1.msra.mxu0 0.0
    %2430 = vmatprep.subr.mxu0 0.0
    %2431 = vmatpush1.msra.mxu0 0.0
    %2432 = vmatprep.subr.mxu0 0.0
    %2433 = vmatpush1.msra.mxu0 0.0
    %2434 = vmatprep.subr.mxu0 0.0
    %2435 = vmatpush1.msra.mxu0 0.0
    %2436 = vmatprep.subr.mxu0 0.0
    %2437 = vmatpush1.msra.mxu0 0.0
    %2438 = vmatprep.subr.mxu0 0.0
    %2439 = vmatpush1.msra.mxu0 0.0
    %2440 = vmatprep.subr.mxu0 %v2413
    %2441 = vmatpush1.msra.mxu0 %v2412
    %2442 = vmatprep.subr.mxu0 %v2409
    %2443 = vmatpush1.msra.mxu0 %v2408
    %2444 = vmatprep.subr.mxu0 %v2405
    %2445 = vmatpush1.msra.mxu0 %v2404
    %2446 = vmatprep.subr.mxu0 %v2401
    %2447 = vmatpush1.msra.mxu0 %v2400
    %2448 = vmatprep.subr.mxu0 0.0
    %2449 = vmatpush2.msra.mxu0 0.0
    %2450 = vmatprep.subr.mxu0 0.0
    %2451 = vmatpush2.msra.mxu0 0.0
    %2452 = vmatprep.subr.mxu0 0.0
    %2453 = vmatpush2.msra.mxu0 0.0
    %2454 = vmatprep.subr.mxu0 0.0
    %2455 = vmatpush2.msra.mxu0 0.0
    %2456 = vmatprep.subr.mxu0 0.0
    %2457 = vmatpush2.msra.mxu0 0.0
    %2458 = vmatprep.subr.mxu0 0.0
    %2459 = vmatpush2.msra.mxu0 0.0
    %2460 = vmatprep.subr.mxu0 0.0
    %2461 = vmatpush2.msra.mxu0 0.0
    %2462 = vmatprep.subr.mxu0 0.0
    %2463 = vmatpush2.msra.mxu0 0.0
    %2464 = vmatprep.subr.mxu0 0.0
    %2465 = vmatpush2.msra.mxu0 0.0
    %2466 = vmatprep.subr.mxu0 0.0
    %2467 = vmatpush2.msra.mxu0 0.0
    %2468 = vmatprep.subr.mxu0 0.0
    %2469 = vmatpush2.msra.mxu0 0.0
    %2470 = vmatprep.subr.mxu0 0.0
    %2471 = vmatpush2.msra.mxu0 0.0
    %2472 = vmatprep.subr.mxu0 0.0
    %2473 = vmatpush2.msra.mxu0 0.0
    %2474 = vmatprep.subr.mxu0 0.0
    %2475 = vmatpush2.msra.mxu0 0.0
    %2476 = vmatprep.subr.mxu0 0.0
    %2477 = vmatpush2.msra.mxu0 0.0
    %2478 = vmatprep.subr.mxu0 0.0
    %2479 = vmatpush2.msra.mxu0 0.0
    %2480 = vmatprep.mubr.f32.mxu0 0.0
    %2481 = vmatmul.mubr.f32.gmra.mxu0 %v2311
    %v2482 = vpop.f32.mrf.mxu0
    %v2483 = vadd.f32 %v283, %v2482
    %v2484 = vpop.f32.mrf.mxu0
    %v2485 = vadd.f32 %v287, %v2484
    %2486 = vdwg.mxu0
    %2487 = vmatprep.subr.mxu0 0.0
    %2488 = vmatpush1.msra.mxu0 0.0
    %2489 = vmatprep.subr.mxu0 0.0
    %2490 = vmatpush1.msra.mxu0 0.0
    %2491 = vmatprep.subr.mxu0 0.0
    %2492 = vmatpush1.msra.mxu0 0.0
    %2493 = vmatprep.subr.mxu0 0.0
    %2494 = vmatpush1.msra.mxu0 0.0
    %2495 = vmatprep.subr.mxu0 0.0
    %2496 = vmatpush1.msra.mxu0 0.0
    %2497 = vmatprep.subr.mxu0 0.0
    %2498 = vmatpush1.msra.mxu0 0.0
    %2499 = vmatprep.subr.mxu0 0.0
    %2500 = vmatpush1.msra.mxu0 0.0
    %2501 = vmatprep.subr.mxu0 0.0
    %2502 = vmatpush1.msra.mxu0 0.0
    %2503 = vmatprep.subr.mxu0 0.0
    %2504 = vmatpush1.msra.mxu0 0.0
    %2505 = vmatprep.subr.mxu0 0.0
    %2506 = vmatpush1.msra.mxu0 0.0
    %2507 = vmatprep.subr.mxu0 0.0
    %2508 = vmatpush1.msra.mxu0 0.0
    %2509 = vmatprep.subr.mxu0 0.0
    %2510 = vmatpush1.msra.mxu0 0.0
    %2511 = vmatprep.subr.mxu0 %v2415
    %2512 = vmatpush1.msra.mxu0 %v2414
    %2513 = vmatprep.subr.mxu0 %v2411
    %2514 = vmatpush1.msra.mxu0 %v2410
    %2515 = vmatprep.subr.mxu0 %v2407
    %2516 = vmatpush1.msra.mxu0 %v2406
    %2517 = vmatprep.subr.mxu0 %v2403
    %2518 = vmatpush1.msra.mxu0 %v2402
    %2519 = vmatprep.subr.mxu0 0.0
    %2520 = vmatpush2.msra.mxu0 0.0
    %2521 = vmatprep.subr.mxu0 0.0
    %2522 = vmatpush2.msra.mxu0 0.0
    %2523 = vmatprep.subr.mxu0 0.0
    %2524 = vmatpush2.msra.mxu0 0.0
    %2525 = vmatprep.subr.mxu0 0.0
    %2526 = vmatpush2.msra.mxu0 0.0
    %2527 = vmatprep.subr.mxu0 0.0
    %2528 = vmatpush2.msra.mxu0 0.0
    %2529 = vmatprep.subr.mxu0 0.0
    %2530 = vmatpush2.msra.mxu0 0.0
    %2531 = vmatprep.subr.mxu0 0.0
    %2532 = vmatpush2.msra.mxu0 0.0
    %2533 = vmatprep.subr.mxu0 0.0
    %2534 = vmatpush2.msra.mxu0 0.0
    %2535 = vmatprep.subr.mxu0 0.0
    %2536 = vmatpush2.msra.mxu0 0.0
    %2537 = vmatprep.subr.mxu0 0.0
    %2538 = vmatpush2.msra.mxu0 0.0
    %2539 = vmatprep.subr.mxu0 0.0
    %2540 = vmatpush2.msra.mxu0 0.0
    %2541 = vmatprep.subr.mxu0 0.0
    %2542 = vmatpush2.msra.mxu0 0.0
    %2543 = vmatprep.subr.mxu0 0.0
    %2544 = vmatpush2.msra.mxu0 0.0
    %2545 = vmatprep.subr.mxu0 0.0
    %2546 = vmatpush2.msra.mxu0 0.0
    %2547 = vmatprep.subr.mxu0 0.0
    %2548 = vmatpush2.msra.mxu0 0.0
    %2549 = vmatprep.subr.mxu0 0.0
    %2550 = vmatpush2.msra.mxu0 0.0
    %2551 = vmatprep.mubr.f32.mxu0 0.0
    %2552 = vmatmul.mubr.f32.gmra.mxu0 %v2311
    %v2553 = vpop.f32.mrf.mxu0
    %v2554 = vadd.f32 %v291, %v2553
    %v2555 = vpop.f32.mrf.mxu0
    %v2556 = vadd.f32 %v295, %v2555
    %2557 = vdwg.mxu0
    %v2559 = vrot.slane %v2483, 4
    %v2561 = vadd.f32 %v166, %v2559
    %vm2562 = vcmask 77828
    %v2563 = vsel %vm2562, %v2561, -inf
    %2564 = vmax.xlane.f32.xlu0 %v2563
    %v2565 = vpop.xlane.xlu0 %2564
    %v2566 = vsub.f32 %v2561, %v2565
    %v2567 = vmul.f32 %v2566, 1.442695
    %v2568 = vpow.pop %v2567
    %v2569 = vsel %vm2562, %v2568, 0.0
    %2570 = vadd.xlane.f32.xlu0 %v2569
    %v2571 = vpop.xlane.xlu0 %2570
    %v2572 = vrcp.pop %v2571
    %v2573 = vmul.f32 %v2568, %v2572
    %v2575 = vrot.slane %v2573, 4
    %v2576 = vsel %vm458, %v2575, 0
    %2578 = vmatprep.subr.mxu0 0.0
    %2579 = vmatpush1.msra.mxu0 0.0
    %2580 = vmatprep.subr.mxu0 0.0
    %2581 = vmatpush1.msra.mxu0 0.0
    %2582 = vmatprep.subr.mxu0 0.0
    %2583 = vmatpush1.msra.mxu0 0.0
    %2584 = vmatprep.subr.mxu0 0.0
    %2585 = vmatpush1.msra.mxu0 0.0
    %2586 = vmatprep.subr.mxu0 0.0
    %2587 = vmatpush1.msra.mxu0 0.0
    %2588 = vmatprep.subr.mxu0 0.0
    %2589 = vmatpush1.msra.mxu0 0.0
    %2590 = vmatprep.subr.mxu0 0.0
    %2591 = vmatpush1.msra.mxu0 0.0
    %2592 = vmatprep.subr.mxu0 0.0
    %2593 = vmatpush1.msra.mxu0 0.0
    %2594 = vmatprep.subr.mxu0 0.0
    %2595 = vmatpush1.msra.mxu0 0.0
    %2596 = vmatprep.subr.mxu0 0.0
    %2597 = vmatpush1.msra.mxu0 0.0
    %2598 = vmatprep.subr.mxu0 0.0
    %2599 = vmatpush1.msra.mxu0 0.0
    %2600 = vmatprep.subr.mxu0 0.0
    %2601 = vmatpush1.msra.mxu0 0.0
    %2602 = vmatprep.subr.mxu0 0.0
    %2603 = vmatpush1.msra.mxu0 0.0
    %2604 = vmatprep.subr.mxu0 0.0
    %2605 = vmatpush1.msra.mxu0 0.0
    %2606 = vmatprep.subr.mxu0 0.0
    %2607 = vmatpush1.msra.mxu0 %v464
    %2608 = vmatprep.subr.mxu0 0.0
    %2609 = vmatpush1.msra.mxu0 %v249
    %2610 = vmatprep.subr.mxu0 0.0
    %2611 = vmatpush2.msra.mxu0 0.0
    %2612 = vmatprep.subr.mxu0 0.0
    %2613 = vmatpush2.msra.mxu0 0.0
    %2614 = vmatprep.subr.mxu0 0.0
    %2615 = vmatpush2.msra.mxu0 0.0
    %2616 = vmatprep.subr.mxu0 0.0
    %2617 = vmatpush2.msra.mxu0 0.0
    %2618 = vmatprep.subr.mxu0 0.0
    %2619 = vmatpush2.msra.mxu0 0.0
    %2620 = vmatprep.subr.mxu0 0.0
    %2621 = vmatpush2.msra.mxu0 0.0
    %2622 = vmatprep.subr.mxu0 0.0
    %2623 = vmatpush2.msra.mxu0 0.0
    %2624 = vmatprep.subr.mxu0 0.0
    %2625 = vmatpush2.msra.mxu0 0.0
    %2626 = vmatprep.subr.mxu0 0.0
    %2627 = vmatpush2.msra.mxu0 0.0
    %2628 = vmatprep.subr.mxu0 0.0
    %2629 = vmatpush2.msra.mxu0 0.0
    %2630 = vmatprep.subr.mxu0 0.0
    %2631 = vmatpush2.msra.mxu0 0.0
    %2632 = vmatprep.subr.mxu0 0.0
    %2633 = vmatpush2.msra.mxu0 0.0
    %2634 = vmatprep.subr.mxu0 0.0
    %2635 = vmatpush2.msra.mxu0 0.0
    %2636 = vmatprep.subr.mxu0 0.0
    %2637 = vmatpush2.msra.mxu0 0.0
    %2638 = vmatprep.subr.mxu0 0.0
    %2639 = vmatpush2.msra.mxu0 0.0
    %2640 = vmatprep.subr.mxu0 0.0
    %2641 = vmatpush2.msra.mxu0 0.0
    %2642 = vmatprep.mubr.f32.mxu0 0.0
    %2643 = vmatmul.mubr.f32.gmra.mxu0 %v2576
    %v2644 = vpop.f32.mrf.mxu0
    %v2645 = vadd.f32 0.0, %v2644
    %v2646 = vpop.f32.mrf.mxu0
    %2647 = vdwg.mxu0
    %v2649 = vrot.slane %v2645, 4
    %v2651 = vadd.f32 %v168, %v2649
    %v2652 = vmax.f32 %v2651, 0.0
    %v2653 = vld [vmem:[#allocation5 + $0x30] sm:$0xff]
    %v2654 = vld [vmem:[#allocation5 + $0x38] sm:$0xff]
    %v2655 = vld [vmem:[#allocation5 + $0x40] sm:$0xff]
    %v2656 = vld [vmem:[#allocation5 + $0x88] sm:$0xff]
    %v2657 = vld [vmem:[#allocation5 + $0x90] sm:$0xff]
    %v2658 = vld [vmem:[#allocation5 + $0x98] sm:$0xff]
    %v2659 = vld [vmem:[#allocation5 + $0xe0] sm:$0xff]
    %v2660 = vld [vmem:[#allocation5 + $0xe8] sm:$0xff]
    %v2661 = vld [vmem:[#allocation5 + $0xf0] sm:$0xff]
    %v2662 = vld [vmem:[#allocation5 + $0x138] sm:$0xff]
    %v2663 = vld [vmem:[#allocation5 + $0x140] sm:$0xff]
    %v2664 = vld [vmem:[#allocation5 + $0x148] sm:$0xff]
    %v2666 = vrot.slane %v2652, 4
    %v2667 = vsel %vm95, %v2666, 0
    %2669 = vmatprep.subr.mxu0 0.0
    %2670 = vmatpush1.msra.mxu0 0.0
    %2671 = vmatprep.subr.mxu0 0.0
    %2672 = vmatpush1.msra.mxu0 0.0
    %2673 = vmatprep.subr.mxu0 0.0
    %2674 = vmatpush1.msra.mxu0 0.0
    %2675 = vmatprep.subr.mxu0 0.0
    %2676 = vmatpush1.msra.mxu0 0.0
    %2677 = vmatprep.subr.mxu0 0.0
    %2678 = vmatpush1.msra.mxu0 0.0
    %2679 = vmatprep.subr.mxu0 0.0
    %2680 = vmatpush1.msra.mxu0 0.0
    %2681 = vmatprep.subr.mxu0 0.0
    %2682 = vmatpush1.msra.mxu0 0.0
    %2683 = vmatprep.subr.mxu0 0.0
    %2684 = vmatpush1.msra.mxu0 0.0
    %2685 = vmatprep.subr.mxu0 0.0
    %2686 = vmatpush1.msra.mxu0 0.0
    %2687 = vmatprep.subr.mxu0 0.0
    %2688 = vmatpush1.msra.mxu0 0.0
    %2689 = vmatprep.subr.mxu0 0.0
    %2690 = vmatpush1.msra.mxu0 0.0
    %2691 = vmatprep.subr.mxu0 0.0
    %2692 = vmatpush1.msra.mxu0 0.0
    %2693 = vmatprep.subr.mxu0 %v2663
    %2694 = vmatpush1.msra.mxu0 %v2662
    %2695 = vmatprep.subr.mxu0 %v2660
    %2696 = vmatpush1.msra.mxu0 %v2659
    %2697 = vmatprep.subr.mxu0 %v2657
    %2698 = vmatpush1.msra.mxu0 %v2656
    %2699 = vmatprep.subr.mxu0 %v2654
    %2700 = vmatpush1.msra.mxu0 %v2653
    %2701 = vmatprep.subr.mxu0 0.0
    %2702 = vmatpush2.msra.mxu0 0.0
    %2703 = vmatprep.subr.mxu0 0.0
    %2704 = vmatpush2.msra.mxu0 0.0
    %2705 = vmatprep.subr.mxu0 0.0
    %2706 = vmatpush2.msra.mxu0 0.0
    %2707 = vmatprep.subr.mxu0 0.0
    %2708 = vmatpush2.msra.mxu0 0.0
    %2709 = vmatprep.subr.mxu0 0.0
    %2710 = vmatpush2.msra.mxu0 0.0
    %2711 = vmatprep.subr.mxu0 0.0
    %2712 = vmatpush2.msra.mxu0 0.0
    %2713 = vmatprep.subr.mxu0 0.0
    %2714 = vmatpush2.msra.mxu0 0.0
    %2715 = vmatprep.subr.mxu0 0.0
    %2716 = vmatpush2.msra.mxu0 0.0
    %2717 = vmatprep.subr.mxu0 0.0
    %2718 = vmatpush2.msra.mxu0 0.0
    %2719 = vmatprep.subr.mxu0 0.0
    %2720 = vmatpush2.msra.mxu0 0.0
    %2721 = vmatprep.subr.mxu0 0.0
    %2722 = vmatpush2.msra.mxu0 0.0
    %2723 = vmatprep.subr.mxu0 0.0
    %2724 = vmatpush2.msra.mxu0 0.0
    %2725 = vmatprep.subr.mxu0 0.0
    %2726 = vmatpush2.msra.mxu0 0.0
    %2727 = vmatprep.subr.mxu0 0.0
    %2728 = vmatpush2.msra.mxu0 0.0
    %2729 = vmatprep.subr.mxu0 0.0
    %2730 = vmatpush2.msra.mxu0 0.0
    %2731 = vmatprep.subr.mxu0 0.0
    %2732 = vmatpush2.msra.mxu0 0.0
    %2733 = vmatprep.mubr.f32.mxu0 0.0
    %2734 = vmatmul.mubr.f32.gmra.mxu0 %v2667
    %v2735 = vpop.f32.mrf.mxu0
    %v2736 = vadd.f32 %v554, %v2735
    %v2737 = vpop.f32.mrf.mxu0
    %v2738 = vadd.f32 %v558, %v2737
    %2739 = vdwg.mxu0
    %2740 = vmatprep.subr.mxu0 0.0
    %2741 = vmatpush1.msra.mxu0 0.0
    %2742 = vmatprep.subr.mxu0 0.0
    %2743 = vmatpush1.msra.mxu0 0.0
    %2744 = vmatprep.subr.mxu0 0.0
    %2745 = vmatpush1.msra.mxu0 0.0
    %2746 = vmatprep.subr.mxu0 0.0
    %2747 = vmatpush1.msra.mxu0 0.0
    %2748 = vmatprep.subr.mxu0 0.0
    %2749 = vmatpush1.msra.mxu0 0.0
    %2750 = vmatprep.subr.mxu0 0.0
    %2751 = vmatpush1.msra.mxu0 0.0
    %2752 = vmatprep.subr.mxu0 0.0
    %2753 = vmatpush1.msra.mxu0 0.0
    %2754 = vmatprep.subr.mxu0 0.0
    %2755 = vmatpush1.msra.mxu0 0.0
    %2756 = vmatprep.subr.mxu0 0.0
    %2757 = vmatpush1.msra.mxu0 0.0
    %2758 = vmatprep.subr.mxu0 0.0
    %2759 = vmatpush1.msra.mxu0 0.0
    %2760 = vmatprep.subr.mxu0 0.0
    %2761 = vmatpush1.msra.mxu0 0.0
    %2762 = vmatprep.subr.mxu0 0.0
    %2763 = vmatpush1.msra.mxu0 0.0
    %2764 = vmatprep.subr.mxu0 0.0
    %2765 = vmatpush1.msra.mxu0 %v2664
    %2766 = vmatprep.subr.mxu0 0.0
    %2767 = vmatpush1.msra.mxu0 %v2661
    %2768 = vmatprep.subr.mxu0 0.0
    %2769 = vmatpush1.msra.mxu0 %v2658
    %2770 = vmatprep.subr.mxu0 0.0
    %2771 = vmatpush1.msra.mxu0 %v2655
    %2772 = vmatprep.subr.mxu0 0.0
    %2773 = vmatpush2.msra.mxu0 0.0
    %2774 = vmatprep.subr.mxu0 0.0
    %2775 = vmatpush2.msra.mxu0 0.0
    %2776 = vmatprep.subr.mxu0 0.0
    %2777 = vmatpush2.msra.mxu0 0.0
    %2778 = vmatprep.subr.mxu0 0.0
    %2779 = vmatpush2.msra.mxu0 0.0
    %2780 = vmatprep.subr.mxu0 0.0
    %2781 = vmatpush2.msra.mxu0 0.0
    %2782 = vmatprep.subr.mxu0 0.0
    %2783 = vmatpush2.msra.mxu0 0.0
    %2784 = vmatprep.subr.mxu0 0.0
    %2785 = vmatpush2.msra.mxu0 0.0
    %2786 = vmatprep.subr.mxu0 0.0
    %2787 = vmatpush2.msra.mxu0 0.0
    %2788 = vmatprep.subr.mxu0 0.0
    %2789 = vmatpush2.msra.mxu0 0.0
    %2790 = vmatprep.subr.mxu0 0.0
    %2791 = vmatpush2.msra.mxu0 0.0
    %2792 = vmatprep.subr.mxu0 0.0
    %2793 = vmatpush2.msra.mxu0 0.0
    %2794 = vmatprep.subr.mxu0 0.0
    %2795 = vmatpush2.msra.mxu0 0.0
    %2796 = vmatprep.subr.mxu0 0.0
    %2797 = vmatpush2.msra.mxu0 0.0
    %2798 = vmatprep.subr.mxu0 0.0
    %2799 = vmatpush2.msra.mxu0 0.0
    %2800 = vmatprep.subr.mxu0 0.0
    %2801 = vmatpush2.msra.mxu0 0.0
    %2802 = vmatprep.subr.mxu0 0.0
    %2803 = vmatpush2.msra.mxu0 0.0
    %2804 = vmatprep.mubr.f32.mxu0 0.0
    %2805 = vmatmul.mubr.f32.gmra.mxu0 %v2667
    %v2806 = vpop.f32.mrf.mxu0
    %v2807 = vadd.f32 %v562, %v2806
    %v2808 = vpop.f32.mrf.mxu0
    %2809 = vdwg.mxu0
    %v2810 = vadd.f32 %v2736, %v2485
    %v2811 = vxor.u32 %v2810, 2147483648
    %v2812 = vmul.f32 %v2811, 1.442695
    %v2813 = vpow.pop %v2812
    %v2814 = vadd.f32 %v2813, 1.0
    %v2815 = vrcp.pop %v2814
    %v2816 = vmul.f32 1.0, %v2815
    %v2817 = vadd.f32 %v2738, %v2554
    %v2818 = vxor.u32 %v2817, 2147483648
    %v2819 = vmul.f32 %v2818, 1.442695
    %v2820 = vpow.pop %v2819
    %v2821 = vadd.f32 %v2820, 1.0
    %v2822 = vrcp.pop %v2821
    %v2823 = vmul.f32 1.0, %v2822
    %v2824 = vmul.f32 %v2816, %v2556
    %v2825 = vadd.f32 %v2807, %v2824
    %v2826 = vtanh.pop %v2825
    %v2827 = vsub.f32 1.0, %v2823
    %v2828 = vmul.f32 %v2827, %v2826
    %v2829 = vmul.f32 %v2823, %v2305
    %v2830 = vadd.f32 %v2828, %v2829
    %v2831 = vld [vmem:[#allocation5 + $0x50] sm:$0xff]
    %v2832 = vld [vmem:[#allocation5 + $0xa8] sm:$0xff]
    %v2833 = vld [vmem:[#allocation5 + $0x100] sm:$0xff]
    %v2834 = vld [vmem:[#allocation5 + $0x158] sm:$0xff]
    %v2836 = vsel %vm95, %v2830, 0
    %2838 = vmatprep.subr.mxu0 0.0
    %2839 = vmatpush1.msra.mxu0 0.0
    %2840 = vmatprep.subr.mxu0 0.0
    %2841 = vmatpush1.msra.mxu0 0.0
    %2842 = vmatprep.subr.mxu0 0.0
    %2843 = vmatpush1.msra.mxu0 0.0
    %2844 = vmatprep.subr.mxu0 0.0
    %2845 = vmatpush1.msra.mxu0 0.0
    %2846 = vmatprep.subr.mxu0 0.0
    %2847 = vmatpush1.msra.mxu0 0.0
    %2848 = vmatprep.subr.mxu0 0.0
    %2849 = vmatpush1.msra.mxu0 0.0
    %2850 = vmatprep.subr.mxu0 0.0
    %2851 = vmatpush1.msra.mxu0 0.0
    %2852 = vmatprep.subr.mxu0 0.0
    %2853 = vmatpush1.msra.mxu0 0.0
    %2854 = vmatprep.subr.mxu0 0.0
    %2855 = vmatpush1.msra.mxu0 0.0
    %2856 = vmatprep.subr.mxu0 0.0
    %2857 = vmatpush1.msra.mxu0 0.0
    %2858 = vmatprep.subr.mxu0 0.0
    %2859 = vmatpush1.msra.mxu0 0.0
    %2860 = vmatprep.subr.mxu0 0.0
    %2861 = vmatpush1.msra.mxu0 0.0
    %2862 = vmatprep.subr.mxu0 0.0
    %2863 = vmatpush1.msra.mxu0 %v2834
    %2864 = vmatprep.subr.mxu0 0.0
    %2865 = vmatpush1.msra.mxu0 %v2833
    %2866 = vmatprep.subr.mxu0 0.0
    %2867 = vmatpush1.msra.mxu0 %v2832
    %2868 = vmatprep.subr.mxu0 0.0
    %2869 = vmatpush1.msra.mxu0 %v2831
    %2870 = vmatprep.subr.mxu0 0.0
    %2871 = vmatpush2.msra.mxu0 0.0
    %2872 = vmatprep.subr.mxu0 0.0
    %2873 = vmatpush2.msra.mxu0 0.0
    %2874 = vmatprep.subr.mxu0 0.0
    %2875 = vmatpush2.msra.mxu0 0.0
    %2876 = vmatprep.subr.mxu0 0.0
    %2877 = vmatpush2.msra.mxu0 0.0
    %2878 = vmatprep.subr.mxu0 0.0
    %2879 = vmatpush2.msra.mxu0 0.0
    %2880 = vmatprep.subr.mxu0 0.0
    %2881 = vmatpush2.msra.mxu0 0.0
    %2882 = vmatprep.subr.mxu0 0.0
    %2883 = vmatpush2.msra.mxu0 0.0
    %2884 = vmatprep.subr.mxu0 0.0
    %2885 = vmatpush2.msra.mxu0 0.0
    %2886 = vmatprep.subr.mxu0 0.0
    %2887 = vmatpush2.msra.mxu0 0.0
    %2888 = vmatprep.subr.mxu0 0.0
    %2889 = vmatpush2.msra.mxu0 0.0
    %2890 = vmatprep.subr.mxu0 0.0
    %2891 = vmatpush2.msra.mxu0 0.0
    %2892 = vmatprep.subr.mxu0 0.0
    %2893 = vmatpush2.msra.mxu0 0.0
    %2894 = vmatprep.subr.mxu0 0.0
    %2895 = vmatpush2.msra.mxu0 0.0
    %2896 = vmatprep.subr.mxu0 0.0
    %2897 = vmatpush2.msra.mxu0 0.0
    %2898 = vmatprep.subr.mxu0 0.0
    %2899 = vmatpush2.msra.mxu0 0.0
    %2900 = vmatprep.subr.mxu0 0.0
    %2901 = vmatpush2.msra.mxu0 0.0
    %2902 = vmatprep.mubr.f32.mxu0 0.0
    %2903 = vmatmul.mubr.f32.gmra.mxu0 %v2836
    %v2904 = vpop.f32.mrf.mxu0
    %v2905 = vadd.f32 %v261, %v2904
    %v2906 = vpop.f32.mrf.mxu0
    %2907 = vdwg.mxu0
    %v2908 = vsel %vm808, %v2905, -inf
    %2909 = vmax.xlane.f32.xlu0 %v2908
    %v2910 = vpop.xlane.xlu0 %2909
    %v2911 = vsub.f32 %v2905, %v2910
    %v2912 = vmul.f32 %v2911, 1.442695
    %v2913 = vpow.pop %v2912
    %v2914 = vsel %vm808, %v2913, 0.0
    %2915 = vadd.xlane.f32.xlu0 %v2914
    %v2916 = vpop.xlane.xlu0 %2915
    %v2917 = vlog2.pop %v2916
    %v2918 = vmul.f32 %v2917, 0.6931472
    %v2919 = vadd.f32 %v2918, %v2910
    %v2920 = vsub.f32 %v2905, %v2919
    %2921 = vst.msk [vmem:[%s6 + $0x4] sm:$0x1] %vm808, %v2920
    %2922 = vst.msk [vmem:[%s6 + $0xc] sm:$0x1] %vm44, %v2830
    %2924 = vst.msk [vmem:[%s6 + $0x14] sm:$0x1] %vm446, %v2575
    %v2925 = vld [vmem:[#allocation5 + $0x10] sm:$0xff]
    %v2926 = vld [vmem:[#allocation5 + $0x18] sm:$0xff]
    %v2927 = vld [vmem:[#allocation5 + $0x20] sm:$0xff]
    %v2928 = vld [vmem:[#allocation5 + $0x28] sm:$0xff]
    %v2929 = vld [vmem:[#allocation5 + $0x68] sm:$0xff]
    %v2930 = vld [vmem:[#allocation5 + $0x70] sm:$0xff]
    %v2931 = vld [vmem:[#allocation5 + $0x78] sm:$0xff]
    %v2932 = vld [vmem:[#allocation5 + $0x80] sm:$0xff]
    %v2933 = vld [vmem:[#allocation5 + $0xc0] sm:$0xff]
    %v2934 = vld [vmem:[#allocation5 + $0xc8] sm:$0xff]
    %v2935 = vld [vmem:[#allocation5 + $0xd0] sm:$0xff]
    %v2936 = vld [vmem:[#allocation5 + $0xd8] sm:$0xff]
    %v2937 = vld [vmem:[#allocation5 + $0x118] sm:$0xff]
    %v2938 = vld [vmem:[#allocation5 + $0x120] sm:$0xff]
    %v2939 = vld [vmem:[#allocation5 + $0x128] sm:$0xff]
    %v2940 = vld [vmem:[#allocation5 + $0x130] sm:$0xff]
    %2941 = vmatprep.subr.mxu0 0.0
    %2942 = vmatpush1.msra.mxu0 0.0
    %2943 = vmatprep.subr.mxu0 0.0
    %2944 = vmatpush1.msra.mxu0 0.0
    %2945 = vmatprep.subr.mxu0 0.0
    %2946 = vmatpush1.msra.mxu0 0.0
    %2947 = vmatprep.subr.mxu0 0.0
    %2948 = vmatpush1.msra.mxu0 0.0
    %2949 = vmatprep.subr.mxu0 0.0
    %2950 = vmatpush1.msra.mxu0 0.0
    %2951 = vmatprep.subr.mxu0 0.0
    %2952 = vmatpush1.msra.mxu0 0.0
    %2953 = vmatprep.subr.mxu0 0.0
    %2954 = vmatpush1.msra.mxu0 0.0
    %2955 = vmatprep.subr.mxu0 0.0
    %2956 = vmatpush1.msra.mxu0 0.0
    %2957 = vmatprep.subr.mxu0 0.0
    %2958 = vmatpush1.msra.mxu0 0.0
    %2959 = vmatprep.subr.mxu0 0.0
    %2960 = vmatpush1.msra.mxu0 0.0
    %2961 = vmatprep.subr.mxu0 0.0
    %2962 = vmatpush1.msra.mxu0 0.0
    %2963 = vmatprep.subr.mxu0 0.0
    %2964 = vmatpush1.msra.mxu0 0.0
    %2965 = vmatprep.subr.mxu0 %v2938
    %2966 = vmatpush1.msra.mxu0 %v2937
    %2967 = vmatprep.subr.mxu0 %v2934
    %2968 = vmatpush1.msra.mxu0 %v2933
    %2969 = vmatprep.subr.mxu0 %v2930
    %2970 = vmatpush1.msra.mxu0 %v2929
    %2971 = vmatprep.subr.mxu0 %v2926
    %2972 = vmatpush1.msra.mxu0 %v2925
    %2973 = vmatprep.subr.mxu0 0.0
    %2974 = vmatpush2.msra.mxu0 0.0
    %2975 = vmatprep.subr.mxu0 0.0
    %2976 = vmatpush2.msra.mxu0 0.0
    %2977 = vmatprep.subr.mxu0 0.0
    %2978 = vmatpush2.msra.mxu0 0.0
    %2979 = vmatprep.subr.mxu0 0.0
    %2980 = vmatpush2.msra.mxu0 0.0
    %2981 = vmatprep.subr.mxu0 0.0
    %2982 = vmatpush2.msra.mxu0 0.0
    %2983 = vmatprep.subr.mxu0 0.0
    %2984 = vmatpush2.msra.mxu0 0.0
    %2985 = vmatprep.subr.mxu0 0.0
    %2986 = vmatpush2.msra.mxu0 0.0
    %2987 = vmatprep.subr.mxu0 0.0
    %2988 = vmatpush2.msra.mxu0 0.0
    %2989 = vmatprep.subr.mxu0 0.0
    %2990 = vmatpush2.msra.mxu0 0.0
    %2991 = vmatprep.subr.mxu0 0.0
    %2992 = vmatpush2.msra.mxu0 0.0
    %2993 = vmatprep.subr.mxu0 0.0
    %2994 = vmatpush2.msra.mxu0 0.0
    %2995 = vmatprep.subr.mxu0 0.0
    %2996 = vmatpush2.msra.mxu0 0.0
    %2997 = vmatprep.subr.mxu0 0.0
    %2998 = vmatpush2.msra.mxu0 0.0
    %2999 = vmatprep.subr.mxu0 0.0
    %3000 = vmatpush2.msra.mxu0 0.0
    %3001 = vmatprep.subr.mxu0 0.0
    %3002 = vmatpush2.msra.mxu0 0.0
    %3003 = vmatprep.subr.mxu0 0.0
    %3004 = vmatpush2.msra.mxu0 0.0
    %3005 = vmatprep.mubr.f32.mxu0 0.0
    %3006 = vmatmul.mubr.f32.gmra.mxu0 %v2836
    %v3007 = vpop.f32.mrf.mxu0
    %v3008 = vadd.f32 %v283, %v3007
    %v3009 = vpop.f32.mrf.mxu0
    %v3010 = vadd.f32 %v287, %v3009
    %3011 = vdwg.mxu0
    %3012 = vmatprep.subr.mxu0 0.0
    %3013 = vmatpush1.msra.mxu0 0.0
    %3014 = vmatprep.subr.mxu0 0.0
    %3015 = vmatpush1.msra.mxu0 0.0
    %3016 = vmatprep.subr.mxu0 0.0
    %3017 = vmatpush1.msra.mxu0 0.0
    %3018 = vmatprep.subr.mxu0 0.0
    %3019 = vmatpush1.msra.mxu0 0.0
    %3020 = vmatprep.subr.mxu0 0.0
    %3021 = vmatpush1.msra.mxu0 0.0
    %3022 = vmatprep.subr.mxu0 0.0
    %3023 = vmatpush1.msra.mxu0 0.0
    %3024 = vmatprep.subr.mxu0 0.0
    %3025 = vmatpush1.msra.mxu0 0.0
    %3026 = vmatprep.subr.mxu0 0.0
    %3027 = vmatpush1.msra.mxu0 0.0
    %3028 = vmatprep.subr.mxu0 0.0
    %3029 = vmatpush1.msra.mxu0 0.0
    %3030 = vmatprep.subr.mxu0 0.0
    %3031 = vmatpush1.msra.mxu0 0.0
    %3032 = vmatprep.subr.mxu0 0.0
    %3033 = vmatpush1.msra.mxu0 0.0
    %3034 = vmatprep.subr.mxu0 0.0
    %3035 = vmatpush1.msra.mxu0 0.0
    %3036 = vmatprep.subr.mxu0 %v2940
    %3037 = vmatpush1.msra.mxu0 %v2939
    %3038 = vmatprep.subr.mxu0 %v2936
    %3039 = vmatpush1.msra.mxu0 %v2935
    %3040 = vmatprep.subr.mxu0 %v2932
    %3041 = vmatpush1.msra.mxu0 %v2931
    %3042 = vmatprep.subr.mxu0 %v2928
    %3043 = vmatpush1.msra.mxu0 %v2927
    %3044 = vmatprep.subr.mxu0 0.0
    %3045 = vmatpush2.msra.mxu0 0.0
    %3046 = vmatprep.subr.mxu0 0.0
    %3047 = vmatpush2.msra.mxu0 0.0
    %3048 = vmatprep.subr.mxu0 0.0
    %3049 = vmatpush2.msra.mxu0 0.0
    %3050 = vmatprep.subr.mxu0 0.0
    %3051 = vmatpush2.msra.mxu0 0.0
    %3052 = vmatprep.subr.mxu0 0.0
    %3053 = vmatpush2.msra.mxu0 0.0
    %3054 = vmatprep.subr.mxu0 0.0
    %3055 = vmatpush2.msra.mxu0 0.0
    %3056 = vmatprep.subr.mxu0 0.0
    %3057 = vmatpush2.msra.mxu0 0.0
    %3058 = vmatprep.subr.mxu0 0.0
    %3059 = vmatpush2.msra.mxu0 0.0
    %3060 = vmatprep.subr.mxu0 0.0
    %3061 = vmatpush2.msra.mxu0 0.0
    %3062 = vmatprep.subr.mxu0 0.0
    %3063 = vmatpush2.msra.mxu0 0.0
    %3064 = vmatprep.subr.mxu0 0.0
    %3065 = vmatpush2.msra.mxu0 0.0
    %3066 = vmatprep.subr.mxu0 0.0
    %3067 = vmatpush2.msra.mxu0 0.0
    %3068 = vmatprep.subr.mxu0 0.0
    %3069 = vmatpush2.msra.mxu0 0.0
    %3070 = vmatprep.subr.mxu0 0.0
    %3071 = vmatpush2.msra.mxu0 0.0
    %3072 = vmatprep.subr.mxu0 0.0
    %3073 = vmatpush2.msra.mxu0 0.0
    %3074 = vmatprep.subr.mxu0 0.0
    %3075 = vmatpush2.msra.mxu0 0.0
    %3076 = vmatprep.mubr.f32.mxu0 0.0
    %3077 = vmatmul.mubr.f32.gmra.mxu0 %v2836
    %v3078 = vpop.f32.mrf.mxu0
    %v3079 = vadd.f32 %v291, %v3078
    %v3080 = vpop.f32.mrf.mxu0
    %v3081 = vadd.f32 %v295, %v3080
    %3082 = vdwg.mxu0
    %v3084 = vrot.slane %v3008, 3
    %v3086 = vadd.f32 %v166, %v3084
    %vm3087 = vcmask 78853
    %v3088 = vsel %vm3087, %v3086, -inf
    %3089 = vmax.xlane.f32.xlu0 %v3088
    %v3090 = vpop.xlane.xlu0 %3089
    %v3091 = vsub.f32 %v3086, %v3090
    %v3092 = vmul.f32 %v3091, 1.442695
    %v3093 = vpow.pop %v3092
    %v3094 = vsel %vm3087, %v3093, 0.0
    %3095 = vadd.xlane.f32.xlu0 %v3094
    %v3096 = vpop.xlane.xlu0 %3095
    %v3097 = vrcp.pop %v3096
    %v3098 = vmul.f32 %v3093, %v3097
    %v3100 = vrot.slane %v3098, 5
    %v3101 = vsel %vm458, %v3100, 0
    %3103 = vmatprep.subr.mxu0 0.0
    %3104 = vmatpush1.msra.mxu0 0.0
    %3105 = vmatprep.subr.mxu0 0.0
    %3106 = vmatpush1.msra.mxu0 0.0
    %3107 = vmatprep.subr.mxu0 0.0
    %3108 = vmatpush1.msra.mxu0 0.0
    %3109 = vmatprep.subr.mxu0 0.0
    %3110 = vmatpush1.msra.mxu0 0.0
    %3111 = vmatprep.subr.mxu0 0.0
    %3112 = vmatpush1.msra.mxu0 0.0
    %3113 = vmatprep.subr.mxu0 0.0
    %3114 = vmatpush1.msra.mxu0 0.0
    %3115 = vmatprep.subr.mxu0 0.0
    %3116 = vmatpush1.msra.mxu0 0.0
    %3117 = vmatprep.subr.mxu0 0.0
    %3118 = vmatpush1.msra.mxu0 0.0
    %3119 = vmatprep.subr.mxu0 0.0
    %3120 = vmatpush1.msra.mxu0 0.0
    %3121 = vmatprep.subr.mxu0 0.0
    %3122 = vmatpush1.msra.mxu0 0.0
    %3123 = vmatprep.subr.mxu0 0.0
    %3124 = vmatpush1.msra.mxu0 0.0
    %3125 = vmatprep.subr.mxu0 0.0
    %3126 = vmatpush1.msra.mxu0 0.0
    %3127 = vmatprep.subr.mxu0 0.0
    %3128 = vmatpush1.msra.mxu0 0.0
    %3129 = vmatprep.subr.mxu0 0.0
    %3130 = vmatpush1.msra.mxu0 0.0
    %3131 = vmatprep.subr.mxu0 0.0
    %3132 = vmatpush1.msra.mxu0 %v464
    %3133 = vmatprep.subr.mxu0 0.0
    %3134 = vmatpush1.msra.mxu0 %v249
    %3135 = vmatprep.subr.mxu0 0.0
    %3136 = vmatpush2.msra.mxu0 0.0
    %3137 = vmatprep.subr.mxu0 0.0
    %3138 = vmatpush2.msra.mxu0 0.0
    %3139 = vmatprep.subr.mxu0 0.0
    %3140 = vmatpush2.msra.mxu0 0.0
    %3141 = vmatprep.subr.mxu0 0.0
    %3142 = vmatpush2.msra.mxu0 0.0
    %3143 = vmatprep.subr.mxu0 0.0
    %3144 = vmatpush2.msra.mxu0 0.0
    %3145 = vmatprep.subr.mxu0 0.0
    %3146 = vmatpush2.msra.mxu0 0.0
    %3147 = vmatprep.subr.mxu0 0.0
    %3148 = vmatpush2.msra.mxu0 0.0
    %3149 = vmatprep.subr.mxu0 0.0
    %3150 = vmatpush2.msra.mxu0 0.0
    %3151 = vmatprep.subr.mxu0 0.0
    %3152 = vmatpush2.msra.mxu0 0.0
    %3153 = vmatprep.subr.mxu0 0.0
    %3154 = vmatpush2.msra.mxu0 0.0
    %3155 = vmatprep.subr.mxu0 0.0
    %3156 = vmatpush2.msra.mxu0 0.0
    %3157 = vmatprep.subr.mxu0 0.0
    %3158 = vmatpush2.msra.mxu0 0.0
    %3159 = vmatprep.subr.mxu0 0.0
    %3160 = vmatpush2.msra.mxu0 0.0
    %3161 = vmatprep.subr.mxu0 0.0
    %3162 = vmatpush2.msra.mxu0 0.0
    %3163 = vmatprep.subr.mxu0 0.0
    %3164 = vmatpush2.msra.mxu0 0.0
    %3165 = vmatprep.subr.mxu0 0.0
    %3166 = vmatpush2.msra.mxu0 0.0
    %3167 = vmatprep.mubr.f32.mxu0 0.0
    %3168 = vmatmul.mubr.f32.gmra.mxu0 %v3101
    %v3169 = vpop.f32.mrf.mxu0
    %v3170 = vadd.f32 0.0, %v3169
    %v3171 = vpop.f32.mrf.mxu0
    %3172 = vdwg.mxu0
    %v3174 = vrot.slane %v3170, 3
    %v3176 = vadd.f32 %v168, %v3174
    %v3177 = vmax.f32 %v3176, 0.0
    %v3178 = vld [vmem:[#allocation5 + $0x30] sm:$0xff]
    %v3179 = vld [vmem:[#allocation5 + $0x38] sm:$0xff]
    %v3180 = vld [vmem:[#allocation5 + $0x40] sm:$0xff]
    %v3181 = vld [vmem:[#allocation5 + $0x88] sm:$0xff]
    %v3182 = vld [vmem:[#allocation5 + $0x90] sm:$0xff]
    %v3183 = vld [vmem:[#allocation5 + $0x98] sm:$0xff]
    %v3184 = vld [vmem:[#allocation5 + $0xe0] sm:$0xff]
    %v3185 = vld [vmem:[#allocation5 + $0xe8] sm:$0xff]
    %v3186 = vld [vmem:[#allocation5 + $0xf0] sm:$0xff]
    %v3187 = vld [vmem:[#allocation5 + $0x138] sm:$0xff]
    %v3188 = vld [vmem:[#allocation5 + $0x140] sm:$0xff]
    %v3189 = vld [vmem:[#allocation5 + $0x148] sm:$0xff]
    %v3191 = vrot.slane %v3177, 5
    %v3192 = vsel %vm95, %v3191, 0
    %3194 = vmatprep.subr.mxu0 0.0
    %3195 = vmatpush1.msra.mxu0 0.0
    %3196 = vmatprep.subr.mxu0 0.0
    %3197 = vmatpush1.msra.mxu0 0.0
    %3198 = vmatprep.subr.mxu0 0.0
    %3199 = vmatpush1.msra.mxu0 0.0
    %3200 = vmatprep.subr.mxu0 0.0
    %3201 = vmatpush1.msra.mxu0 0.0
    %3202 = vmatprep.subr.mxu0 0.0
    %3203 = vmatpush1.msra.mxu0 0.0
    %3204 = vmatprep.subr.mxu0 0.0
    %3205 = vmatpush1.msra.mxu0 0.0
    %3206 = vmatprep.subr.mxu0 0.0
    %3207 = vmatpush1.msra.mxu0 0.0
    %3208 = vmatprep.subr.mxu0 0.0
    %3209 = vmatpush1.msra.mxu0 0.0
    %3210 = vmatprep.subr.mxu0 0.0
    %3211 = vmatpush1.msra.mxu0 0.0
    %3212 = vmatprep.subr.mxu0 0.0
    %3213 = vmatpush1.msra.mxu0 0.0
    %3214 = vmatprep.subr.mxu0 0.0
    %3215 = vmatpush1.msra.mxu0 0.0
    %3216 = vmatprep.subr.mxu0 0.0
    %3217 = vmatpush1.msra.mxu0 0.0
    %3218 = vmatprep.subr.mxu0 %v3188
    %3219 = vmatpush1.msra.mxu0 %v3187
    %3220 = vmatprep.subr.mxu0 %v3185
    %3221 = vmatpush1.msra.mxu0 %v3184
    %3222 = vmatprep.subr.mxu0 %v3182
    %3223 = vmatpush1.msra.mxu0 %v3181
    %3224 = vmatprep.subr.mxu0 %v3179
    %3225 = vmatpush1.msra.mxu0 %v3178
    %3226 = vmatprep.subr.mxu0 0.0
    %3227 = vmatpush2.msra.mxu0 0.0
    %3228 = vmatprep.subr.mxu0 0.0
    %3229 = vmatpush2.msra.mxu0 0.0
    %3230 = vmatprep.subr.mxu0 0.0
    %3231 = vmatpush2.msra.mxu0 0.0
    %3232 = vmatprep.subr.mxu0 0.0
    %3233 = vmatpush2.msra.mxu0 0.0
    %3234 = vmatprep.subr.mxu0 0.0
    %3235 = vmatpush2.msra.mxu0 0.0
    %3236 = vmatprep.subr.mxu0 0.0
    %3237 = vmatpush2.msra.mxu0 0.0
    %3238 = vmatprep.subr.mxu0 0.0
    %3239 = vmatpush2.msra.mxu0 0.0
    %3240 = vmatprep.subr.mxu0 0.0
    %3241 = vmatpush2.msra.mxu0 0.0
    %3242 = vmatprep.subr.mxu0 0.0
    %3243 = vmatpush2.msra.mxu0 0.0
    %3244 = vmatprep.subr.mxu0 0.0
    %3245 = vmatpush2.msra.mxu0 0.0
    %3246 = vmatprep.subr.mxu0 0.0
    %3247 = vmatpush2.msra.mxu0 0.0
    %3248 = vmatprep.subr.mxu0 0.0
    %3249 = vmatpush2.msra.mxu0 0.0
    %3250 = vmatprep.subr.mxu0 0.0
    %3251 = vmatpush2.msra.mxu0 0.0
    %3252 = vmatprep.subr.mxu0 0.0
    %3253 = vmatpush2.msra.mxu0 0.0
    %3254 = vmatprep.subr.mxu0 0.0
    %3255 = vmatpush2.msra.mxu0 0.0
    %3256 = vmatprep.subr.mxu0 0.0
    %3257 = vmatpush2.msra.mxu0 0.0
    %3258 = vmatprep.mubr.f32.mxu0 0.0
    %3259 = vmatmul.mubr.f32.gmra.mxu0 %v3192
    %v3260 = vpop.f32.mrf.mxu0
    %v3261 = vadd.f32 %v554, %v3260
    %v3262 = vpop.f32.mrf.mxu0
    %v3263 = vadd.f32 %v558, %v3262
    %3264 = vdwg.mxu0
    %3265 = vmatprep.subr.mxu0 0.0
    %3266 = vmatpush1.msra.mxu0 0.0
    %3267 = vmatprep.subr.mxu0 0.0
    %3268 = vmatpush1.msra.mxu0 0.0
    %3269 = vmatprep.subr.mxu0 0.0
    %3270 = vmatpush1.msra.mxu0 0.0
    %3271 = vmatprep.subr.mxu0 0.0
    %3272 = vmatpush1.msra.mxu0 0.0
    %3273 = vmatprep.subr.mxu0 0.0
    %3274 = vmatpush1.msra.mxu0 0.0
    %3275 = vmatprep.subr.mxu0 0.0
    %3276 = vmatpush1.msra.mxu0 0.0
    %3277 = vmatprep.subr.mxu0 0.0
    %3278 = vmatpush1.msra.mxu0 0.0
    %3279 = vmatprep.subr.mxu0 0.0
    %3280 = vmatpush1.msra.mxu0 0.0
    %3281 = vmatprep.subr.mxu0 0.0
    %3282 = vmatpush1.msra.mxu0 0.0
    %3283 = vmatprep.subr.mxu0 0.0
    %3284 = vmatpush1.msra.mxu0 0.0
    %3285 = vmatprep.subr.mxu0 0.0
    %3286 = vmatpush1.msra.mxu0 0.0
    %3287 = vmatprep.subr.mxu0 0.0
    %3288 = vmatpush1.msra.mxu0 0.0
    %3289 = vmatprep.subr.mxu0 0.0
    %3290 = vmatpush1.msra.mxu0 %v3189
    %3291 = vmatprep.subr.mxu0 0.0
    %3292 = vmatpush1.msra.mxu0 %v3186
    %3293 = vmatprep.subr.mxu0 0.0
    %3294 = vmatpush1.msra.mxu0 %v3183
    %3295 = vmatprep.subr.mxu0 0.0
    %3296 = vmatpush1.msra.mxu0 %v3180
    %3297 = vmatprep.subr.mxu0 0.0
    %3298 = vmatpush2.msra.mxu0 0.0
    %3299 = vmatprep.subr.mxu0 0.0
    %3300 = vmatpush2.msra.mxu0 0.0
    %3301 = vmatprep.subr.mxu0 0.0
    %3302 = vmatpush2.msra.mxu0 0.0
    %3303 = vmatprep.subr.mxu0 0.0
    %3304 = vmatpush2.msra.mxu0 0.0
    %3305 = vmatprep.subr.mxu0 0.0
    %3306 = vmatpush2.msra.mxu0 0.0
    %3307 = vmatprep.subr.mxu0 0.0
    %3308 = vmatpush2.msra.mxu0 0.0
    %3309 = vmatprep.subr.mxu0 0.0
    %3310 = vmatpush2.msra.mxu0 0.0
    %3311 = vmatprep.subr.mxu0 0.0
    %3312 = vmatpush2.msra.mxu0 0.0
    %3313 = vmatprep.subr.mxu0 0.0
    %3314 = vmatpush2.msra.mxu0 0.0
    %3315 = vmatprep.subr.mxu0 0.0
    %3316 = vmatpush2.msra.mxu0 0.0
    %3317 = vmatprep.subr.mxu0 0.0
    %3318 = vmatpush2.msra.mxu0 0.0
    %3319 = vmatprep.subr.mxu0 0.0
    %3320 = vmatpush2.msra.mxu0 0.0
    %3321 = vmatprep.subr.mxu0 0.0
    %3322 = vmatpush2.msra.mxu0 0.0
    %3323 = vmatprep.subr.mxu0 0.0
    %3324 = vmatpush2.msra.mxu0 0.0
    %3325 = vmatprep.subr.mxu0 0.0
    %3326 = vmatpush2.msra.mxu0 0.0
    %3327 = vmatprep.subr.mxu0 0.0
    %3328 = vmatpush2.msra.mxu0 0.0
    %3329 = vmatprep.mubr.f32.mxu0 0.0
    %3330 = vmatmul.mubr.f32.gmra.mxu0 %v3192
    %v3331 = vpop.f32.mrf.mxu0
    %v3332 = vadd.f32 %v562, %v3331
    %v3333 = vpop.f32.mrf.mxu0
    %3334 = vdwg.mxu0
    %v3335 = vadd.f32 %v3261, %v3010
    %v3336 = vxor.u32 %v3335, 2147483648
    %v3337 = vmul.f32 %v3336, 1.442695
    %v3338 = vpow.pop %v3337
    %v3339 = vadd.f32 %v3338, 1.0
    %v3340 = vrcp.pop %v3339
    %v3341 = vmul.f32 1.0, %v3340
    %v3342 = vadd.f32 %v3263, %v3079
    %v3343 = vxor.u32 %v3342, 2147483648
    %v3344 = vmul.f32 %v3343, 1.442695
    %v3345 = vpow.pop %v3344
    %v3346 = vadd.f32 %v3345, 1.0
    %v3347 = vrcp.pop %v3346
    %v3348 = vmul.f32 1.0, %v3347
    %v3349 = vmul.f32 %v3341, %v3081
    %v3350 = vadd.f32 %v3332, %v3349
    %v3351 = vtanh.pop %v3350
    %v3352 = vsub.f32 1.0, %v3348
    %v3353 = vmul.f32 %v3352, %v3351
    %v3354 = vmul.f32 %v3348, %v2830
    %v3355 = vadd.f32 %v3353, %v3354
    %v3356 = vld [vmem:[#allocation5 + $0x50] sm:$0xff]
    %v3357 = vld [vmem:[#allocation5 + $0xa8] sm:$0xff]
    %v3358 = vld [vmem:[#allocation5 + $0x100] sm:$0xff]
    %v3359 = vld [vmem:[#allocation5 + $0x158] sm:$0xff]
    %v3361 = vsel %vm95, %v3355, 0
    %3363 = vmatprep.subr.mxu0 0.0
    %3364 = vmatpush1.msra.mxu0 0.0
    %3365 = vmatprep.subr.mxu0 0.0
    %3366 = vmatpush1.msra.mxu0 0.0
    %3367 = vmatprep.subr.mxu0 0.0
    %3368 = vmatpush1.msra.mxu0 0.0
    %3369 = vmatprep.subr.mxu0 0.0
    %3370 = vmatpush1.msra.mxu0 0.0
    %3371 = vmatprep.subr.mxu0 0.0
    %3372 = vmatpush1.msra.mxu0 0.0
    %3373 = vmatprep.subr.mxu0 0.0
    %3374 = vmatpush1.msra.mxu0 0.0
    %3375 = vmatprep.subr.mxu0 0.0
    %3376 = vmatpush1.msra.mxu0 0.0
    %3377 = vmatprep.subr.mxu0 0.0
    %3378 = vmatpush1.msra.mxu0 0.0
    %3379 = vmatprep.subr.mxu0 0.0
    %3380 = vmatpush1.msra.mxu0 0.0
    %3381 = vmatprep.subr.mxu0 0.0
    %3382 = vmatpush1.msra.mxu0 0.0
    %3383 = vmatprep.subr.mxu0 0.0
    %3384 = vmatpush1.msra.mxu0 0.0
    %3385 = vmatprep.subr.mxu0 0.0
    %3386 = vmatpush1.msra.mxu0 0.0
    %3387 = vmatprep.subr.mxu0 0.0
    %3388 = vmatpush1.msra.mxu0 %v3359
    %3389 = vmatprep.subr.mxu0 0.0
    %3390 = vmatpush1.msra.mxu0 %v3358
    %3391 = vmatprep.subr.mxu0 0.0
    %3392 = vmatpush1.msra.mxu0 %v3357
    %3393 = vmatprep.subr.mxu0 0.0
    %3394 = vmatpush1.msra.mxu0 %v3356
    %3395 = vmatprep.subr.mxu0 0.0
    %3396 = vmatpush2.msra.mxu0 0.0
    %3397 = vmatprep.subr.mxu0 0.0
    %3398 = vmatpush2.msra.mxu0 0.0
    %3399 = vmatprep.subr.mxu0 0.0
    %3400 = vmatpush2.msra.mxu0 0.0
    %3401 = vmatprep.subr.mxu0 0.0
    %3402 = vmatpush2.msra.mxu0 0.0
    %3403 = vmatprep.subr.mxu0 0.0
    %3404 = vmatpush2.msra.mxu0 0.0
    %3405 = vmatprep.subr.mxu0 0.0
    %3406 = vmatpush2.msra.mxu0 0.0
    %3407 = vmatprep.subr.mxu0 0.0
    %3408 = vmatpush2.msra.mxu0 0.0
    %3409 = vmatprep.subr.mxu0 0.0
    %3410 = vmatpush2.msra.mxu0 0.0
    %3411 = vmatprep.subr.mxu0 0.0
    %3412 = vmatpush2.msra.mxu0 0.0
    %3413 = vmatprep.subr.mxu0 0.0
    %3414 = vmatpush2.msra.mxu0 0.0
    %3415 = vmatprep.subr.mxu0 0.0
    %3416 = vmatpush2.msra.mxu0 0.0
    %3417 = vmatprep.subr.mxu0 0.0
    %3418 = vmatpush2.msra.mxu0 0.0
    %3419 = vmatprep.subr.mxu0 0.0
    %3420 = vmatpush2.msra.mxu0 0.0
    %3421 = vmatprep.subr.mxu0 0.0
    %3422 = vmatpush2.msra.mxu0 0.0
    %3423 = vmatprep.subr.mxu0 0.0
    %3424 = vmatpush2.msra.mxu0 0.0
    %3425 = vmatprep.subr.mxu0 0.0
    %3426 = vmatpush2.msra.mxu0 0.0
    %3427 = vmatprep.mubr.f32.mxu0 0.0
    %3428 = vmatmul.mubr.f32.gmra.mxu0 %v3361
    %v3429 = vpop.f32.mrf.mxu0
    %v3430 = vadd.f32 %v261, %v3429
    %v3431 = vpop.f32.mrf.mxu0
    %3432 = vdwg.mxu0
    %v3433 = vsel %vm808, %v3430, -inf
    %3434 = vmax.xlane.f32.xlu0 %v3433
    %v3435 = vpop.xlane.xlu0 %3434
    %v3436 = vsub.f32 %v3430, %v3435
    %v3437 = vmul.f32 %v3436, 1.442695
    %v3438 = vpow.pop %v3437
    %v3439 = vsel %vm808, %v3438, 0.0
    %3440 = vadd.xlane.f32.xlu0 %v3439
    %v3441 = vpop.xlane.xlu0 %3440
    %v3442 = vlog2.pop %v3441
    %v3443 = vmul.f32 %v3442, 0.6931472
    %v3444 = vadd.f32 %v3443, %v3435
    %v3445 = vsub.f32 %v3430, %v3444
    %3446 = vst.msk [vmem:[%s6 + $0x5] sm:$0x1] %vm808, %v3445
    %3447 = vst.msk [vmem:[%s6 + $0xd] sm:$0x1] %vm44, %v3355
    %3449 = vst.msk [vmem:[%s6 + $0x15] sm:$0x1] %vm446, %v3100
    %v3450 = vld [vmem:[#allocation5 + $0x10] sm:$0xff]
    %v3451 = vld [vmem:[#allocation5 + $0x18] sm:$0xff]
    %v3452 = vld [vmem:[#allocation5 + $0x20] sm:$0xff]
    %v3453 = vld [vmem:[#allocation5 + $0x28] sm:$0xff]
    %v3454 = vld [vmem:[#allocation5 + $0x68] sm:$0xff]
    %v3455 = vld [vmem:[#allocation5 + $0x70] sm:$0xff]
    %v3456 = vld [vmem:[#allocation5 + $0x78] sm:$0xff]
    %v3457 = vld [vmem:[#allocation5 + $0x80] sm:$0xff]
    %v3458 = vld [vmem:[#allocation5 + $0xc0] sm:$0xff]
    %v3459 = vld [vmem:[#allocation5 + $0xc8] sm:$0xff]
    %v3460 = vld [vmem:[#allocation5 + $0xd0] sm:$0xff]
    %v3461 = vld [vmem:[#allocation5 + $0xd8] sm:$0xff]
    %v3462 = vld [vmem:[#allocation5 + $0x118] sm:$0xff]
    %v3463 = vld [vmem:[#allocation5 + $0x120] sm:$0xff]
    %v3464 = vld [vmem:[#allocation5 + $0x128] sm:$0xff]
    %v3465 = vld [vmem:[#allocation5 + $0x130] sm:$0xff]
    %3466 = vmatprep.subr.mxu0 0.0
    %3467 = vmatpush1.msra.mxu0 0.0
    %3468 = vmatprep.subr.mxu0 0.0
    %3469 = vmatpush1.msra.mxu0 0.0
    %3470 = vmatprep.subr.mxu0 0.0
    %3471 = vmatpush1.msra.mxu0 0.0
    %3472 = vmatprep.subr.mxu0 0.0
    %3473 = vmatpush1.msra.mxu0 0.0
    %3474 = vmatprep.subr.mxu0 0.0
    %3475 = vmatpush1.msra.mxu0 0.0
    %3476 = vmatprep.subr.mxu0 0.0
    %3477 = vmatpush1.msra.mxu0 0.0
    %3478 = vmatprep.subr.mxu0 0.0
    %3479 = vmatpush1.msra.mxu0 0.0
    %3480 = vmatprep.subr.mxu0 0.0
    %3481 = vmatpush1.msra.mxu0 0.0
    %3482 = vmatprep.subr.mxu0 0.0
    %3483 = vmatpush1.msra.mxu0 0.0
    %3484 = vmatprep.subr.mxu0 0.0
    %3485 = vmatpush1.msra.mxu0 0.0
    %3486 = vmatprep.subr.mxu0 0.0
    %3487 = vmatpush1.msra.mxu0 0.0
    %3488 = vmatprep.subr.mxu0 0.0
    %3489 = vmatpush1.msra.mxu0 0.0
    %3490 = vmatprep.subr.mxu0 %v3463
    %3491 = vmatpush1.msra.mxu0 %v3462
    %3492 = vmatprep.subr.mxu0 %v3459
    %3493 = vmatpush1.msra.mxu0 %v3458
    %3494 = vmatprep.subr.mxu0 %v3455
    %3495 = vmatpush1.msra.mxu0 %v3454
    %3496 = vmatprep.subr.mxu0 %v3451
    %3497 = vmatpush1.msra.mxu0 %v3450
    %3498 = vmatprep.subr.mxu0 0.0
    %3499 = vmatpush2.msra.mxu0 0.0
    %3500 = vmatprep.subr.mxu0 0.0
    %3501 = vmatpush2.msra.mxu0 0.0
    %3502 = vmatprep.subr.mxu0 0.0
    %3503 = vmatpush2.msra.mxu0 0.0
    %3504 = vmatprep.subr.mxu0 0.0
    %3505 = vmatpush2.msra.mxu0 0.0
    %3506 = vmatprep.subr.mxu0 0.0
    %3507 = vmatpush2.msra.mxu0 0.0
    %3508 = vmatprep.subr.mxu0 0.0
    %3509 = vmatpush2.msra.mxu0 0.0
    %3510 = vmatprep.subr.mxu0 0.0
    %3511 = vmatpush2.msra.mxu0 0.0
    %3512 = vmatprep.subr.mxu0 0.0
    %3513 = vmatpush2.msra.mxu0 0.0
    %3514 = vmatprep.subr.mxu0 0.0
    %3515 = vmatpush2.msra.mxu0 0.0
    %3516 = vmatprep.subr.mxu0 0.0
    %3517 = vmatpush2.msra.mxu0 0.0
    %3518 = vmatprep.subr.mxu0 0.0
    %3519 = vmatpush2.msra.mxu0 0.0
    %3520 = vmatprep.subr.mxu0 0.0
    %3521 = vmatpush2.msra.mxu0 0.0
    %3522 = vmatprep.subr.mxu0 0.0
    %3523 = vmatpush2.msra.mxu0 0.0
    %3524 = vmatprep.subr.mxu0 0.0
    %3525 = vmatpush2.msra.mxu0 0.0
    %3526 = vmatprep.subr.mxu0 0.0
    %3527 = vmatpush2.msra.mxu0 0.0
    %3528 = vmatprep.subr.mxu0 0.0
    %3529 = vmatpush2.msra.mxu0 0.0
    %3530 = vmatprep.mubr.f32.mxu0 0.0
    %3531 = vmatmul.mubr.f32.gmra.mxu0 %v3361
    %v3532 = vpop.f32.mrf.mxu0
    %v3533 = vadd.f32 %v283, %v3532
    %v3534 = vpop.f32.mrf.mxu0
    %v3535 = vadd.f32 %v287, %v3534
    %3536 = vdwg.mxu0
    %3537 = vmatprep.subr.mxu0 0.0
    %3538 = vmatpush1.msra.mxu0 0.0
    %3539 = vmatprep.subr.mxu0 0.0
    %3540 = vmatpush1.msra.mxu0 0.0
    %3541 = vmatprep.subr.mxu0 0.0
    %3542 = vmatpush1.msra.mxu0 0.0
    %3543 = vmatprep.subr.mxu0 0.0
    %3544 = vmatpush1.msra.mxu0 0.0
    %3545 = vmatprep.subr.mxu0 0.0
    %3546 = vmatpush1.msra.mxu0 0.0
    %3547 = vmatprep.subr.mxu0 0.0
    %3548 = vmatpush1.msra.mxu0 0.0
    %3549 = vmatprep.subr.mxu0 0.0
    %3550 = vmatpush1.msra.mxu0 0.0
    %3551 = vmatprep.subr.mxu0 0.0
    %3552 = vmatpush1.msra.mxu0 0.0
    %3553 = vmatprep.subr.mxu0 0.0
    %3554 = vmatpush1.msra.mxu0 0.0
    %3555 = vmatprep.subr.mxu0 0.0
    %3556 = vmatpush1.msra.mxu0 0.0
    %3557 = vmatprep.subr.mxu0 0.0
    %3558 = vmatpush1.msra.mxu0 0.0
    %3559 = vmatprep.subr.mxu0 0.0
    %3560 = vmatpush1.msra.mxu0 0.0
    %3561 = vmatprep.subr.mxu0 %v3465
    %3562 = vmatpush1.msra.mxu0 %v3464
    %3563 = vmatprep.subr.mxu0 %v3461
    %3564 = vmatpush1.msra.mxu0 %v3460
    %3565 = vmatprep.subr.mxu0 %v3457
    %3566 = vmatpush1.msra.mxu0 %v3456
    %3567 = vmatprep.subr.mxu0 %v3453
    %3568 = vmatpush1.msra.mxu0 %v3452
    %3569 = vmatprep.subr.mxu0 0.0
    %3570 = vmatpush2.msra.mxu0 0.0
    %3571 = vmatprep.subr.mxu0 0.0
    %3572 = vmatpush2.msra.mxu0 0.0
    %3573 = vmatprep.subr.mxu0 0.0
    %3574 = vmatpush2.msra.mxu0 0.0
    %3575 = vmatprep.subr.mxu0 0.0
    %3576 = vmatpush2.msra.mxu0 0.0
    %3577 = vmatprep.subr.mxu0 0.0
    %3578 = vmatpush2.msra.mxu0 0.0
    %3579 = vmatprep.subr.mxu0 0.0
    %3580 = vmatpush2.msra.mxu0 0.0
    %3581 = vmatprep.subr.mxu0 0.0
    %3582 = vmatpush2.msra.mxu0 0.0
    %3583 = vmatprep.subr.mxu0 0.0
    %3584 = vmatpush2.msra.mxu0 0.0
    %3585 = vmatprep.subr.mxu0 0.0
    %3586 = vmatpush2.msra.mxu0 0.0
    %3587 = vmatprep.subr.mxu0 0.0
    %3588 = vmatpush2.msra.mxu0 0.0
    %3589 = vmatprep.subr.mxu0 0.0
    %3590 = vmatpush2.msra.mxu0 0.0
    %3591 = vmatprep.subr.mxu0 0.0
    %3592 = vmatpush2.msra.mxu0 0.0
    %3593 = vmatprep.subr.mxu0 0.0
    %3594 = vmatpush2.msra.mxu0 0.0
    %3595 = vmatprep.subr.mxu0 0.0
    %3596 = vmatpush2.msra.mxu0 0.0
    %3597 = vmatprep.subr.mxu0 0.0
    %3598 = vmatpush2.msra.mxu0 0.0
    %3599 = vmatprep.subr.mxu0 0.0
    %3600 = vmatpush2.msra.mxu0 0.0
    %3601 = vmatprep.mubr.f32.mxu0 0.0
    %3602 = vmatmul.mubr.f32.gmra.mxu0 %v3361
    %v3603 = vpop.f32.mrf.mxu0
    %v3604 = vadd.f32 %v291, %v3603
    %v3605 = vpop.f32.mrf.mxu0
    %v3606 = vadd.f32 %v295, %v3605
    %3607 = vdwg.mxu0
    %v3609 = vrot.slane %v3533, 2
    %v3611 = vadd.f32 %v166, %v3609
    %vm3612 = vcmask 79878
    %v3613 = vsel %vm3612, %v3611, -inf
    %3614 = vmax.xlane.f32.xlu0 %v3613
    %v3615 = vpop.xlane.xlu0 %3614
    %v3616 = vsub.f32 %v3611, %v3615
    %v3617 = vmul.f32 %v3616, 1.442695
    %v3618 = vpow.pop %v3617
    %v3619 = vsel %vm3612, %v3618, 0.0
    %3620 = vadd.xlane.f32.xlu0 %v3619
    %v3621 = vpop.xlane.xlu0 %3620
    %v3622 = vrcp.pop %v3621
    %v3623 = vmul.f32 %v3618, %v3622
    %v3625 = vrot.slane %v3623, 6
    %v3626 = vsel %vm458, %v3625, 0
    %3628 = vmatprep.subr.mxu0 0.0
    %3629 = vmatpush1.msra.mxu0 0.0
    %3630 = vmatprep.subr.mxu0 0.0
    %3631 = vmatpush1.msra.mxu0 0.0
    %3632 = vmatprep.subr.mxu0 0.0
    %3633 = vmatpush1.msra.mxu0 0.0
    %3634 = vmatprep.subr.mxu0 0.0
    %3635 = vmatpush1.msra.mxu0 0.0
    %3636 = vmatprep.subr.mxu0 0.0
    %3637 = vmatpush1.msra.mxu0 0.0
    %3638 = vmatprep.subr.mxu0 0.0
    %3639 = vmatpush1.msra.mxu0 0.0
    %3640 = vmatprep.subr.mxu0 0.0
    %3641 = vmatpush1.msra.mxu0 0.0
    %3642 = vmatprep.subr.mxu0 0.0
    %3643 = vmatpush1.msra.mxu0 0.0
    %3644 = vmatprep.subr.mxu0 0.0
    %3645 = vmatpush1.msra.mxu0 0.0
    %3646 = vmatprep.subr.mxu0 0.0
    %3647 = vmatpush1.msra.mxu0 0.0
    %3648 = vmatprep.subr.mxu0 0.0
    %3649 = vmatpush1.msra.mxu0 0.0
    %3650 = vmatprep.subr.mxu0 0.0
    %3651 = vmatpush1.msra.mxu0 0.0
    %3652 = vmatprep.subr.mxu0 0.0
    %3653 = vmatpush1.msra.mxu0 0.0
    %3654 = vmatprep.subr.mxu0 0.0
    %3655 = vmatpush1.msra.mxu0 0.0
    %3656 = vmatprep.subr.mxu0 0.0
    %3657 = vmatpush1.msra.mxu0 %v464
    %3658 = vmatprep.subr.mxu0 0.0
    %3659 = vmatpush1.msra.mxu0 %v249
    %3660 = vmatprep.subr.mxu0 0.0
    %3661 = vmatpush2.msra.mxu0 0.0
    %3662 = vmatprep.subr.mxu0 0.0
    %3663 = vmatpush2.msra.mxu0 0.0
    %3664 = vmatprep.subr.mxu0 0.0
    %3665 = vmatpush2.msra.mxu0 0.0
    %3666 = vmatprep.subr.mxu0 0.0
    %3667 = vmatpush2.msra.mxu0 0.0
    %3668 = vmatprep.subr.mxu0 0.0
    %3669 = vmatpush2.msra.mxu0 0.0
    %3670 = vmatprep.subr.mxu0 0.0
    %3671 = vmatpush2.msra.mxu0 0.0
    %3672 = vmatprep.subr.mxu0 0.0
    %3673 = vmatpush2.msra.mxu0 0.0
    %3674 = vmatprep.subr.mxu0 0.0
    %3675 = vmatpush2.msra.mxu0 0.0
    %3676 = vmatprep.subr.mxu0 0.0
    %3677 = vmatpush2.msra.mxu0 0.0
    %3678 = vmatprep.subr.mxu0 0.0
    %3679 = vmatpush2.msra.mxu0 0.0
    %3680 = vmatprep.subr.mxu0 0.0
    %3681 = vmatpush2.msra.mxu0 0.0
    %3682 = vmatprep.subr.mxu0 0.0
    %3683 = vmatpush2.msra.mxu0 0.0
    %3684 = vmatprep.subr.mxu0 0.0
    %3685 = vmatpush2.msra.mxu0 0.0
    %3686 = vmatprep.subr.mxu0 0.0
    %3687 = vmatpush2.msra.mxu0 0.0
    %3688 = vmatprep.subr.mxu0 0.0
    %3689 = vmatpush2.msra.mxu0 0.0
    %3690 = vmatprep.subr.mxu0 0.0
    %3691 = vmatpush2.msra.mxu0 0.0
    %3692 = vmatprep.mubr.f32.mxu0 0.0
    %3693 = vmatmul.mubr.f32.gmra.mxu0 %v3626
    %v3694 = vpop.f32.mrf.mxu0
    %v3695 = vadd.f32 0.0, %v3694
    %v3696 = vpop.f32.mrf.mxu0
    %3697 = vdwg.mxu0
    %v3699 = vrot.slane %v3695, 2
    %v3701 = vadd.f32 %v168, %v3699
    %v3702 = vmax.f32 %v3701, 0.0
    %v3703 = vld [vmem:[#allocation5 + $0x30] sm:$0xff]
    %v3704 = vld [vmem:[#allocation5 + $0x38] sm:$0xff]
    %v3705 = vld [vmem:[#allocation5 + $0x40] sm:$0xff]
    %v3706 = vld [vmem:[#allocation5 + $0x88] sm:$0xff]
    %v3707 = vld [vmem:[#allocation5 + $0x90] sm:$0xff]
    %v3708 = vld [vmem:[#allocation5 + $0x98] sm:$0xff]
    %v3709 = vld [vmem:[#allocation5 + $0xe0] sm:$0xff]
    %v3710 = vld [vmem:[#allocation5 + $0xe8] sm:$0xff]
    %v3711 = vld [vmem:[#allocation5 + $0xf0] sm:$0xff]
    %v3712 = vld [vmem:[#allocation5 + $0x138] sm:$0xff]
    %v3713 = vld [vmem:[#allocation5 + $0x140] sm:$0xff]
    %v3714 = vld [vmem:[#allocation5 + $0x148] sm:$0xff]
    %v3716 = vrot.slane %v3702, 6
    %v3717 = vsel %vm95, %v3716, 0
    %3719 = vmatprep.subr.mxu0 0.0
    %3720 = vmatpush1.msra.mxu0 0.0
    %3721 = vmatprep.subr.mxu0 0.0
    %3722 = vmatpush1.msra.mxu0 0.0
    %3723 = vmatprep.subr.mxu0 0.0
    %3724 = vmatpush1.msra.mxu0 0.0
    %3725 = vmatprep.subr.mxu0 0.0
    %3726 = vmatpush1.msra.mxu0 0.0
    %3727 = vmatprep.subr.mxu0 0.0
    %3728 = vmatpush1.msra.mxu0 0.0
    %3729 = vmatprep.subr.mxu0 0.0
    %3730 = vmatpush1.msra.mxu0 0.0
    %3731 = vmatprep.subr.mxu0 0.0
    %3732 = vmatpush1.msra.mxu0 0.0
    %3733 = vmatprep.subr.mxu0 0.0
    %3734 = vmatpush1.msra.mxu0 0.0
    %3735 = vmatprep.subr.mxu0 0.0
    %3736 = vmatpush1.msra.mxu0 0.0
    %3737 = vmatprep.subr.mxu0 0.0
    %3738 = vmatpush1.msra.mxu0 0.0
    %3739 = vmatprep.subr.mxu0 0.0
    %3740 = vmatpush1.msra.mxu0 0.0
    %3741 = vmatprep.subr.mxu0 0.0
    %3742 = vmatpush1.msra.mxu0 0.0
    %3743 = vmatprep.subr.mxu0 %v3713
    %3744 = vmatpush1.msra.mxu0 %v3712
    %3745 = vmatprep.subr.mxu0 %v3710
    %3746 = vmatpush1.msra.mxu0 %v3709
    %3747 = vmatprep.subr.mxu0 %v3707
    %3748 = vmatpush1.msra.mxu0 %v3706
    %3749 = vmatprep.subr.mxu0 %v3704
    %3750 = vmatpush1.msra.mxu0 %v3703
    %3751 = vmatprep.subr.mxu0 0.0
    %3752 = vmatpush2.msra.mxu0 0.0
    %3753 = vmatprep.subr.mxu0 0.0
    %3754 = vmatpush2.msra.mxu0 0.0
    %3755 = vmatprep.subr.mxu0 0.0
    %3756 = vmatpush2.msra.mxu0 0.0
    %3757 = vmatprep.subr.mxu0 0.0
    %3758 = vmatpush2.msra.mxu0 0.0
    %3759 = vmatprep.subr.mxu0 0.0
    %3760 = vmatpush2.msra.mxu0 0.0
    %3761 = vmatprep.subr.mxu0 0.0
    %3762 = vmatpush2.msra.mxu0 0.0
    %3763 = vmatprep.subr.mxu0 0.0
    %3764 = vmatpush2.msra.mxu0 0.0
    %3765 = vmatprep.subr.mxu0 0.0
    %3766 = vmatpush2.msra.mxu0 0.0
    %3767 = vmatprep.subr.mxu0 0.0
    %3768 = vmatpush2.msra.mxu0 0.0
    %3769 = vmatprep.subr.mxu0 0.0
    %3770 = vmatpush2.msra.mxu0 0.0
    %3771 = vmatprep.subr.mxu0 0.0
    %3772 = vmatpush2.msra.mxu0 0.0
    %3773 = vmatprep.subr.mxu0 0.0
    %3774 = vmatpush2.msra.mxu0 0.0
    %3775 = vmatprep.subr.mxu0 0.0
    %3776 = vmatpush2.msra.mxu0 0.0
    %3777 = vmatprep.subr.mxu0 0.0
    %3778 = vmatpush2.msra.mxu0 0.0
    %3779 = vmatprep.subr.mxu0 0.0
    %3780 = vmatpush2.msra.mxu0 0.0
    %3781 = vmatprep.subr.mxu0 0.0
    %3782 = vmatpush2.msra.mxu0 0.0
    %3783 = vmatprep.mubr.f32.mxu0 0.0
    %3784 = vmatmul.mubr.f32.gmra.mxu0 %v3717
    %v3785 = vpop.f32.mrf.mxu0
    %v3786 = vadd.f32 %v554, %v3785
    %v3787 = vpop.f32.mrf.mxu0
    %v3788 = vadd.f32 %v558, %v3787
    %3789 = vdwg.mxu0
    %3790 = vmatprep.subr.mxu0 0.0
    %3791 = vmatpush1.msra.mxu0 0.0
    %3792 = vmatprep.subr.mxu0 0.0
    %3793 = vmatpush1.msra.mxu0 0.0
    %3794 = vmatprep.subr.mxu0 0.0
    %3795 = vmatpush1.msra.mxu0 0.0
    %3796 = vmatprep.subr.mxu0 0.0
    %3797 = vmatpush1.msra.mxu0 0.0
    %3798 = vmatprep.subr.mxu0 0.0
    %3799 = vmatpush1.msra.mxu0 0.0
    %3800 = vmatprep.subr.mxu0 0.0
    %3801 = vmatpush1.msra.mxu0 0.0
    %3802 = vmatprep.subr.mxu0 0.0
    %3803 = vmatpush1.msra.mxu0 0.0
    %3804 = vmatprep.subr.mxu0 0.0
    %3805 = vmatpush1.msra.mxu0 0.0
    %3806 = vmatprep.subr.mxu0 0.0
    %3807 = vmatpush1.msra.mxu0 0.0
    %3808 = vmatprep.subr.mxu0 0.0
    %3809 = vmatpush1.msra.mxu0 0.0
    %3810 = vmatprep.subr.mxu0 0.0
    %3811 = vmatpush1.msra.mxu0 0.0
    %3812 = vmatprep.subr.mxu0 0.0
    %3813 = vmatpush1.msra.mxu0 0.0
    %3814 = vmatprep.subr.mxu0 0.0
    %3815 = vmatpush1.msra.mxu0 %v3714
    %3816 = vmatprep.subr.mxu0 0.0
    %3817 = vmatpush1.msra.mxu0 %v3711
    %3818 = vmatprep.subr.mxu0 0.0
    %3819 = vmatpush1.msra.mxu0 %v3708
    %3820 = vmatprep.subr.mxu0 0.0
    %3821 = vmatpush1.msra.mxu0 %v3705
    %3822 = vmatprep.subr.mxu0 0.0
    %3823 = vmatpush2.msra.mxu0 0.0
    %3824 = vmatprep.subr.mxu0 0.0
    %3825 = vmatpush2.msra.mxu0 0.0
    %3826 = vmatprep.subr.mxu0 0.0
    %3827 = vmatpush2.msra.mxu0 0.0
    %3828 = vmatprep.subr.mxu0 0.0
    %3829 = vmatpush2.msra.mxu0 0.0
    %3830 = vmatprep.subr.mxu0 0.0
    %3831 = vmatpush2.msra.mxu0 0.0
    %3832 = vmatprep.subr.mxu0 0.0
    %3833 = vmatpush2.msra.mxu0 0.0
    %3834 = vmatprep.subr.mxu0 0.0
    %3835 = vmatpush2.msra.mxu0 0.0
    %3836 = vmatprep.subr.mxu0 0.0
    %3837 = vmatpush2.msra.mxu0 0.0
    %3838 = vmatprep.subr.mxu0 0.0
    %3839 = vmatpush2.msra.mxu0 0.0
    %3840 = vmatprep.subr.mxu0 0.0
    %3841 = vmatpush2.msra.mxu0 0.0
    %3842 = vmatprep.subr.mxu0 0.0
    %3843 = vmatpush2.msra.mxu0 0.0
    %3844 = vmatprep.subr.mxu0 0.0
    %3845 = vmatpush2.msra.mxu0 0.0
    %3846 = vmatprep.subr.mxu0 0.0
    %3847 = vmatpush2.msra.mxu0 0.0
    %3848 = vmatprep.subr.mxu0 0.0
    %3849 = vmatpush2.msra.mxu0 0.0
    %3850 = vmatprep.subr.mxu0 0.0
    %3851 = vmatpush2.msra.mxu0 0.0
    %3852 = vmatprep.subr.mxu0 0.0
    %3853 = vmatpush2.msra.mxu0 0.0
    %3854 = vmatprep.mubr.f32.mxu0 0.0
    %3855 = vmatmul.mubr.f32.gmra.mxu0 %v3717
    %v3856 = vpop.f32.mrf.mxu0
    %v3857 = vadd.f32 %v562, %v3856
    %v3858 = vpop.f32.mrf.mxu0
    %3859 = vdwg.mxu0
    %v3860 = vadd.f32 %v3786, %v3535
    %v3861 = vxor.u32 %v3860, 2147483648
    %v3862 = vmul.f32 %v3861, 1.442695
    %v3863 = vpow.pop %v3862
    %v3864 = vadd.f32 %v3863, 1.0
    %v3865 = vrcp.pop %v3864
    %v3866 = vmul.f32 1.0, %v3865
    %v3867 = vadd.f32 %v3788, %v3604
    %v3868 = vxor.u32 %v3867, 2147483648
    %v3869 = vmul.f32 %v3868, 1.442695
    %v3870 = vpow.pop %v3869
    %v3871 = vadd.f32 %v3870, 1.0
    %v3872 = vrcp.pop %v3871
    %v3873 = vmul.f32 1.0, %v3872
    %v3874 = vmul.f32 %v3866, %v3606
    %v3875 = vadd.f32 %v3857, %v3874
    %v3876 = vtanh.pop %v3875
    %v3877 = vsub.f32 1.0, %v3873
    %v3878 = vmul.f32 %v3877, %v3876
    %v3879 = vmul.f32 %v3873, %v3355
    %v3880 = vadd.f32 %v3878, %v3879
    %v3881 = vld [vmem:[#allocation5 + $0x50] sm:$0xff]
    %v3882 = vld [vmem:[#allocation5 + $0xa8] sm:$0xff]
    %v3883 = vld [vmem:[#allocation5 + $0x100] sm:$0xff]
    %v3884 = vld [vmem:[#allocation5 + $0x158] sm:$0xff]
    %v3886 = vsel %vm95, %v3880, 0
    %3888 = vmatprep.subr.mxu0 0.0
    %3889 = vmatpush1.msra.mxu0 0.0
    %3890 = vmatprep.subr.mxu0 0.0
    %3891 = vmatpush1.msra.mxu0 0.0
    %3892 = vmatprep.subr.mxu0 0.0
    %3893 = vmatpush1.msra.mxu0 0.0
    %3894 = vmatprep.subr.mxu0 0.0
    %3895 = vmatpush1.msra.mxu0 0.0
    %3896 = vmatprep.subr.mxu0 0.0
    %3897 = vmatpush1.msra.mxu0 0.0
    %3898 = vmatprep.subr.mxu0 0.0
    %3899 = vmatpush1.msra.mxu0 0.0
    %3900 = vmatprep.subr.mxu0 0.0
    %3901 = vmatpush1.msra.mxu0 0.0
    %3902 = vmatprep.subr.mxu0 0.0
    %3903 = vmatpush1.msra.mxu0 0.0
    %3904 = vmatprep.subr.mxu0 0.0
    %3905 = vmatpush1.msra.mxu0 0.0
    %3906 = vmatprep.subr.mxu0 0.0
    %3907 = vmatpush1.msra.mxu0 0.0
    %3908 = vmatprep.subr.mxu0 0.0
    %3909 = vmatpush1.msra.mxu0 0.0
    %3910 = vmatprep.subr.mxu0 0.0
    %3911 = vmatpush1.msra.mxu0 0.0
    %3912 = vmatprep.subr.mxu0 0.0
    %3913 = vmatpush1.msra.mxu0 %v3884
    %3914 = vmatprep.subr.mxu0 0.0
    %3915 = vmatpush1.msra.mxu0 %v3883
    %3916 = vmatprep.subr.mxu0 0.0
    %3917 = vmatpush1.msra.mxu0 %v3882
    %3918 = vmatprep.subr.mxu0 0.0
    %3919 = vmatpush1.msra.mxu0 %v3881
    %3920 = vmatprep.subr.mxu0 0.0
    %3921 = vmatpush2.msra.mxu0 0.0
    %3922 = vmatprep.subr.mxu0 0.0
    %3923 = vmatpush2.msra.mxu0 0.0
    %3924 = vmatprep.subr.mxu0 0.0
    %3925 = vmatpush2.msra.mxu0 0.0
    %3926 = vmatprep.subr.mxu0 0.0
    %3927 = vmatpush2.msra.mxu0 0.0
    %3928 = vmatprep.subr.mxu0 0.0
    %3929 = vmatpush2.msra.mxu0 0.0
    %3930 = vmatprep.subr.mxu0 0.0
    %3931 = vmatpush2.msra.mxu0 0.0
    %3932 = vmatprep.subr.mxu0 0.0
    %3933 = vmatpush2.msra.mxu0 0.0
    %3934 = vmatprep.subr.mxu0 0.0
    %3935 = vmatpush2.msra.mxu0 0.0
    %3936 = vmatprep.subr.mxu0 0.0
    %3937 = vmatpush2.msra.mxu0 0.0
    %3938 = vmatprep.subr.mxu0 0.0
    %3939 = vmatpush2.msra.mxu0 0.0
    %3940 = vmatprep.subr.mxu0 0.0
    %3941 = vmatpush2.msra.mxu0 0.0
    %3942 = vmatprep.subr.mxu0 0.0
    %3943 = vmatpush2.msra.mxu0 0.0
    %3944 = vmatprep.subr.mxu0 0.0
    %3945 = vmatpush2.msra.mxu0 0.0
    %3946 = vmatprep.subr.mxu0 0.0
    %3947 = vmatpush2.msra.mxu0 0.0
    %3948 = vmatprep.subr.mxu0 0.0
    %3949 = vmatpush2.msra.mxu0 0.0
    %3950 = vmatprep.subr.mxu0 0.0
    %3951 = vmatpush2.msra.mxu0 0.0
    %3952 = vmatprep.mubr.f32.mxu0 0.0
    %3953 = vmatmul.mubr.f32.gmra.mxu0 %v3886
    %v3954 = vpop.f32.mrf.mxu0
    %v3955 = vadd.f32 %v261, %v3954
    %v3956 = vpop.f32.mrf.mxu0
    %3957 = vdwg.mxu0
    %v3958 = vsel %vm808, %v3955, -inf
    %3959 = vmax.xlane.f32.xlu0 %v3958
    %v3960 = vpop.xlane.xlu0 %3959
    %v3961 = vsub.f32 %v3955, %v3960
    %v3962 = vmul.f32 %v3961, 1.442695
    %v3963 = vpow.pop %v3962
    %v3964 = vsel %vm808, %v3963, 0.0
    %3965 = vadd.xlane.f32.xlu0 %v3964
    %v3966 = vpop.xlane.xlu0 %3965
    %v3967 = vlog2.pop %v3966
    %v3968 = vmul.f32 %v3967, 0.6931472
    %v3969 = vadd.f32 %v3968, %v3960
    %v3970 = vsub.f32 %v3955, %v3969
    %3971 = vst.msk [vmem:[%s6 + $0x6] sm:$0x1] %vm808, %v3970
    %3972 = vst.msk [vmem:[%s6 + $0xe] sm:$0x1] %vm44, %v3880
    %3974 = vst.msk [vmem:[%s6 + $0x16] sm:$0x1] %vm446, %v3625
    %v3975 = vld [vmem:[#allocation5 + $0x10] sm:$0xff]
    %v3976 = vld [vmem:[#allocation5 + $0x18] sm:$0xff]
    %v3977 = vld [vmem:[#allocation5 + $0x20] sm:$0xff]
    %v3978 = vld [vmem:[#allocation5 + $0x28] sm:$0xff]
    %v3979 = vld [vmem:[#allocation5 + $0x68] sm:$0xff]
    %v3980 = vld [vmem:[#allocation5 + $0x70] sm:$0xff]
    %v3981 = vld [vmem:[#allocation5 + $0x78] sm:$0xff]
    %v3982 = vld [vmem:[#allocation5 + $0x80] sm:$0xff]
    %v3983 = vld [vmem:[#allocation5 + $0xc0] sm:$0xff]
    %v3984 = vld [vmem:[#allocation5 + $0xc8] sm:$0xff]
    %v3985 = vld [vmem:[#allocation5 + $0xd0] sm:$0xff]
    %v3986 = vld [vmem:[#allocation5 + $0xd8] sm:$0xff]
    %v3987 = vld [vmem:[#allocation5 + $0x118] sm:$0xff]
    %v3988 = vld [vmem:[#allocation5 + $0x120] sm:$0xff]
    %v3989 = vld [vmem:[#allocation5 + $0x128] sm:$0xff]
    %v3990 = vld [vmem:[#allocation5 + $0x130] sm:$0xff]
    %3991 = vmatprep.subr.mxu0 0.0
    %3992 = vmatpush1.msra.mxu0 0.0
    %3993 = vmatprep.subr.mxu0 0.0
    %3994 = vmatpush1.msra.mxu0 0.0
    %3995 = vmatprep.subr.mxu0 0.0
    %3996 = vmatpush1.msra.mxu0 0.0
    %3997 = vmatprep.subr.mxu0 0.0
    %3998 = vmatpush1.msra.mxu0 0.0
    %3999 = vmatprep.subr.mxu0 0.0
    %4000 = vmatpush1.msra.mxu0 0.0
    %4001 = vmatprep.subr.mxu0 0.0
    %4002 = vmatpush1.msra.mxu0 0.0
    %4003 = vmatprep.subr.mxu0 0.0
    %4004 = vmatpush1.msra.mxu0 0.0
    %4005 = vmatprep.subr.mxu0 0.0
    %4006 = vmatpush1.msra.mxu0 0.0
    %4007 = vmatprep.subr.mxu0 0.0
    %4008 = vmatpush1.msra.mxu0 0.0
    %4009 = vmatprep.subr.mxu0 0.0
    %4010 = vmatpush1.msra.mxu0 0.0
    %4011 = vmatprep.subr.mxu0 0.0
    %4012 = vmatpush1.msra.mxu0 0.0
    %4013 = vmatprep.subr.mxu0 0.0
    %4014 = vmatpush1.msra.mxu0 0.0
    %4015 = vmatprep.subr.mxu0 %v3988
    %4016 = vmatpush1.msra.mxu0 %v3987
    %4017 = vmatprep.subr.mxu0 %v3984
    %4018 = vmatpush1.msra.mxu0 %v3983
    %4019 = vmatprep.subr.mxu0 %v3980
    %4020 = vmatpush1.msra.mxu0 %v3979
    %4021 = vmatprep.subr.mxu0 %v3976
    %4022 = vmatpush1.msra.mxu0 %v3975
    %4023 = vmatprep.subr.mxu0 0.0
    %4024 = vmatpush2.msra.mxu0 0.0
    %4025 = vmatprep.subr.mxu0 0.0
    %4026 = vmatpush2.msra.mxu0 0.0
    %4027 = vmatprep.subr.mxu0 0.0
    %4028 = vmatpush2.msra.mxu0 0.0
    %4029 = vmatprep.subr.mxu0 0.0
    %4030 = vmatpush2.msra.mxu0 0.0
    %4031 = vmatprep.subr.mxu0 0.0
    %4032 = vmatpush2.msra.mxu0 0.0
    %4033 = vmatprep.subr.mxu0 0.0
    %4034 = vmatpush2.msra.mxu0 0.0
    %4035 = vmatprep.subr.mxu0 0.0
    %4036 = vmatpush2.msra.mxu0 0.0
    %4037 = vmatprep.subr.mxu0 0.0
    %4038 = vmatpush2.msra.mxu0 0.0
    %4039 = vmatprep.subr.mxu0 0.0
    %4040 = vmatpush2.msra.mxu0 0.0
    %4041 = vmatprep.subr.mxu0 0.0
    %4042 = vmatpush2.msra.mxu0 0.0
    %4043 = vmatprep.subr.mxu0 0.0
    %4044 = vmatpush2.msra.mxu0 0.0
    %4045 = vmatprep.subr.mxu0 0.0
    %4046 = vmatpush2.msra.mxu0 0.0
    %4047 = vmatprep.subr.mxu0 0.0
    %4048 = vmatpush2.msra.mxu0 0.0
    %4049 = vmatprep.subr.mxu0 0.0
    %4050 = vmatpush2.msra.mxu0 0.0
    %4051 = vmatprep.subr.mxu0 0.0
    %4052 = vmatpush2.msra.mxu0 0.0
    %4053 = vmatprep.subr.mxu0 0.0
    %4054 = vmatpush2.msra.mxu0 0.0
    %4055 = vmatprep.mubr.f32.mxu0 0.0
    %4056 = vmatmul.mubr.f32.gmra.mxu0 %v3886
    %v4057 = vpop.f32.mrf.mxu0
    %v4058 = vadd.f32 %v283, %v4057
    %v4059 = vpop.f32.mrf.mxu0
    %v4060 = vadd.f32 %v287, %v4059
    %4061 = vdwg.mxu0
    %4062 = vmatprep.subr.mxu0 0.0
    %4063 = vmatpush1.msra.mxu0 0.0
    %4064 = vmatprep.subr.mxu0 0.0
    %4065 = vmatpush1.msra.mxu0 0.0
    %4066 = vmatprep.subr.mxu0 0.0
    %4067 = vmatpush1.msra.mxu0 0.0
    %4068 = vmatprep.subr.mxu0 0.0
    %4069 = vmatpush1.msra.mxu0 0.0
    %4070 = vmatprep.subr.mxu0 0.0
    %4071 = vmatpush1.msra.mxu0 0.0
    %4072 = vmatprep.subr.mxu0 0.0
    %4073 = vmatpush1.msra.mxu0 0.0
    %4074 = vmatprep.subr.mxu0 0.0
    %4075 = vmatpush1.msra.mxu0 0.0
    %4076 = vmatprep.subr.mxu0 0.0
    %4077 = vmatpush1.msra.mxu0 0.0
    %4078 = vmatprep.subr.mxu0 0.0
    %4079 = vmatpush1.msra.mxu0 0.0
    %4080 = vmatprep.subr.mxu0 0.0
    %4081 = vmatpush1.msra.mxu0 0.0
    %4082 = vmatprep.subr.mxu0 0.0
    %4083 = vmatpush1.msra.mxu0 0.0
    %4084 = vmatprep.subr.mxu0 0.0
    %4085 = vmatpush1.msra.mxu0 0.0
    %4086 = vmatprep.subr.mxu0 %v3990
    %4087 = vmatpush1.msra.mxu0 %v3989
    %4088 = vmatprep.subr.mxu0 %v3986
    %4089 = vmatpush1.msra.mxu0 %v3985
    %4090 = vmatprep.subr.mxu0 %v3982
    %4091 = vmatpush1.msra.mxu0 %v3981
    %4092 = vmatprep.subr.mxu0 %v3978
    %4093 = vmatpush1.msra.mxu0 %v3977
    %4094 = vmatprep.subr.mxu0 0.0
    %4095 = vmatpush2.msra.mxu0 0.0
    %4096 = vmatprep.subr.mxu0 0.0
    %4097 = vmatpush2.msra.mxu0 0.0
    %4098 = vmatprep.subr.mxu0 0.0
    %4099 = vmatpush2.msra.mxu0 0.0
    %4100 = vmatprep.subr.mxu0 0.0
    %4101 = vmatpush2.msra.mxu0 0.0
    %4102 = vmatprep.subr.mxu0 0.0
    %4103 = vmatpush2.msra.mxu0 0.0
    %4104 = vmatprep.subr.mxu0 0.0
    %4105 = vmatpush2.msra.mxu0 0.0
    %4106 = vmatprep.subr.mxu0 0.0
    %4107 = vmatpush2.msra.mxu0 0.0
    %4108 = vmatprep.subr.mxu0 0.0
    %4109 = vmatpush2.msra.mxu0 0.0
    %4110 = vmatprep.subr.mxu0 0.0
    %4111 = vmatpush2.msra.mxu0 0.0
    %4112 = vmatprep.subr.mxu0 0.0
    %4113 = vmatpush2.msra.mxu0 0.0
    %4114 = vmatprep.subr.mxu0 0.0
    %4115 = vmatpush2.msra.mxu0 0.0
    %4116 = vmatprep.subr.mxu0 0.0
    %4117 = vmatpush2.msra.mxu0 0.0
    %4118 = vmatprep.subr.mxu0 0.0
    %4119 = vmatpush2.msra.mxu0 0.0
    %4120 = vmatprep.subr.mxu0 0.0
    %4121 = vmatpush2.msra.mxu0 0.0
    %4122 = vmatprep.subr.mxu0 0.0
    %4123 = vmatpush2.msra.mxu0 0.0
    %4124 = vmatprep.subr.mxu0 0.0
    %4125 = vmatpush2.msra.mxu0 0.0
    %4126 = vmatprep.mubr.f32.mxu0 0.0
    %4127 = vmatmul.mubr.f32.gmra.mxu0 %v3886
    %v4128 = vpop.f32.mrf.mxu0
    %v4129 = vadd.f32 %v291, %v4128
    %v4130 = vpop.f32.mrf.mxu0
    %v4131 = vadd.f32 %v295, %v4130
    %4132 = vdwg.mxu0
    %v4134 = vrot.slane %v4058, 1
    %v4136 = vadd.f32 %v166, %v4134
    %vm4137 = vcmask 80903
    %v4138 = vsel %vm4137, %v4136, -inf
    %4139 = vmax.xlane.f32.xlu0 %v4138
    %v4140 = vpop.xlane.xlu0 %4139
    %v4141 = vsub.f32 %v4136, %v4140
    %v4142 = vmul.f32 %v4141, 1.442695
    %v4143 = vpow.pop %v4142
    %v4144 = vsel %vm4137, %v4143, 0.0
    %4145 = vadd.xlane.f32.xlu0 %v4144
    %v4146 = vpop.xlane.xlu0 %4145
    %v4147 = vrcp.pop %v4146
    %v4148 = vmul.f32 %v4143, %v4147
    %v4150 = vrot.slane %v4148, 7
    %v4151 = vsel %vm458, %v4150, 0
    %4153 = vmatprep.subr.mxu0 0.0
    %4154 = vmatpush1.msra.mxu0 0.0
    %4155 = vmatprep.subr.mxu0 0.0
    %4156 = vmatpush1.msra.mxu0 0.0
    %4157 = vmatprep.subr.mxu0 0.0
    %4158 = vmatpush1.msra.mxu0 0.0
    %4159 = vmatprep.subr.mxu0 0.0
    %4160 = vmatpush1.msra.mxu0 0.0
    %4161 = vmatprep.subr.mxu0 0.0
    %4162 = vmatpush1.msra.mxu0 0.0
    %4163 = vmatprep.subr.mxu0 0.0
    %4164 = vmatpush1.msra.mxu0 0.0
    %4165 = vmatprep.subr.mxu0 0.0
    %4166 = vmatpush1.msra.mxu0 0.0
    %4167 = vmatprep.subr.mxu0 0.0
    %4168 = vmatpush1.msra.mxu0 0.0
    %4169 = vmatprep.subr.mxu0 0.0
    %4170 = vmatpush1.msra.mxu0 0.0
    %4171 = vmatprep.subr.mxu0 0.0
    %4172 = vmatpush1.msra.mxu0 0.0
    %4173 = vmatprep.subr.mxu0 0.0
    %4174 = vmatpush1.msra.mxu0 0.0
    %4175 = vmatprep.subr.mxu0 0.0
    %4176 = vmatpush1.msra.mxu0 0.0
    %4177 = vmatprep.subr.mxu0 0.0
    %4178 = vmatpush1.msra.mxu0 0.0
    %4179 = vmatprep.subr.mxu0 0.0
    %4180 = vmatpush1.msra.mxu0 0.0
    %4181 = vmatprep.subr.mxu0 0.0
    %4182 = vmatpush1.msra.mxu0 %v464
    %4183 = vmatprep.subr.mxu0 0.0
    %4184 = vmatpush1.msra.mxu0 %v249
    %4185 = vmatprep.subr.mxu0 0.0
    %4186 = vmatpush2.msra.mxu0 0.0
    %4187 = vmatprep.subr.mxu0 0.0
    %4188 = vmatpush2.msra.mxu0 0.0
    %4189 = vmatprep.subr.mxu0 0.0
    %4190 = vmatpush2.msra.mxu0 0.0
    %4191 = vmatprep.subr.mxu0 0.0
    %4192 = vmatpush2.msra.mxu0 0.0
    %4193 = vmatprep.subr.mxu0 0.0
    %4194 = vmatpush2.msra.mxu0 0.0
    %4195 = vmatprep.subr.mxu0 0.0
    %4196 = vmatpush2.msra.mxu0 0.0
    %4197 = vmatprep.subr.mxu0 0.0
    %4198 = vmatpush2.msra.mxu0 0.0
    %4199 = vmatprep.subr.mxu0 0.0
    %4200 = vmatpush2.msra.mxu0 0.0
    %4201 = vmatprep.subr.mxu0 0.0
    %4202 = vmatpush2.msra.mxu0 0.0
    %4203 = vmatprep.subr.mxu0 0.0
    %4204 = vmatpush2.msra.mxu0 0.0
    %4205 = vmatprep.subr.mxu0 0.0
    %4206 = vmatpush2.msra.mxu0 0.0
    %4207 = vmatprep.subr.mxu0 0.0
    %4208 = vmatpush2.msra.mxu0 0.0
    %4209 = vmatprep.subr.mxu0 0.0
    %4210 = vmatpush2.msra.mxu0 0.0
    %4211 = vmatprep.subr.mxu0 0.0
    %4212 = vmatpush2.msra.mxu0 0.0
    %4213 = vmatprep.subr.mxu0 0.0
    %4214 = vmatpush2.msra.mxu0 0.0
    %4215 = vmatprep.subr.mxu0 0.0
    %4216 = vmatpush2.msra.mxu0 0.0
    %4217 = vmatprep.mubr.f32.mxu0 0.0
    %4218 = vmatmul.mubr.f32.gmra.mxu0 %v4151
    %v4219 = vpop.f32.mrf.mxu0
    %v4220 = vadd.f32 0.0, %v4219
    %v4221 = vpop.f32.mrf.mxu0
    %4222 = vdwg.mxu0
    %v4224 = vrot.slane %v4220, 1
    %v4226 = vadd.f32 %v168, %v4224
    %v4227 = vmax.f32 %v4226, 0.0
    %v4228 = vld [vmem:[#allocation5 + $0x30] sm:$0xff]
    %v4229 = vld [vmem:[#allocation5 + $0x38] sm:$0xff]
    %v4230 = vld [vmem:[#allocation5 + $0x40] sm:$0xff]
    %v4231 = vld [vmem:[#allocation5 + $0x88] sm:$0xff]
    %v4232 = vld [vmem:[#allocation5 + $0x90] sm:$0xff]
    %v4233 = vld [vmem:[#allocation5 + $0x98] sm:$0xff]
    %v4234 = vld [vmem:[#allocation5 + $0xe0] sm:$0xff]
    %v4235 = vld [vmem:[#allocation5 + $0xe8] sm:$0xff]
    %v4236 = vld [vmem:[#allocation5 + $0xf0] sm:$0xff]
    %v4237 = vld [vmem:[#allocation5 + $0x138] sm:$0xff]
    %v4238 = vld [vmem:[#allocation5 + $0x140] sm:$0xff]
    %v4239 = vld [vmem:[#allocation5 + $0x148] sm:$0xff]
    %v4241 = vrot.slane %v4227, 7
    %v4242 = vsel %vm95, %v4241, 0
    %4244 = vmatprep.subr.mxu0 0.0
    %4245 = vmatpush1.msra.mxu0 0.0
    %4246 = vmatprep.subr.mxu0 0.0
    %4247 = vmatpush1.msra.mxu0 0.0
    %4248 = vmatprep.subr.mxu0 0.0
    %4249 = vmatpush1.msra.mxu0 0.0
    %4250 = vmatprep.subr.mxu0 0.0
    %4251 = vmatpush1.msra.mxu0 0.0
    %4252 = vmatprep.subr.mxu0 0.0
    %4253 = vmatpush1.msra.mxu0 0.0
    %4254 = vmatprep.subr.mxu0 0.0
    %4255 = vmatpush1.msra.mxu0 0.0
    %4256 = vmatprep.subr.mxu0 0.0
    %4257 = vmatpush1.msra.mxu0 0.0
    %4258 = vmatprep.subr.mxu0 0.0
    %4259 = vmatpush1.msra.mxu0 0.0
    %4260 = vmatprep.subr.mxu0 0.0
    %4261 = vmatpush1.msra.mxu0 0.0
    %4262 = vmatprep.subr.mxu0 0.0
    %4263 = vmatpush1.msra.mxu0 0.0
    %4264 = vmatprep.subr.mxu0 0.0
    %4265 = vmatpush1.msra.mxu0 0.0
    %4266 = vmatprep.subr.mxu0 0.0
    %4267 = vmatpush1.msra.mxu0 0.0
    %4268 = vmatprep.subr.mxu0 %v4238
    %4269 = vmatpush1.msra.mxu0 %v4237
    %4270 = vmatprep.subr.mxu0 %v4235
    %4271 = vmatpush1.msra.mxu0 %v4234
    %4272 = vmatprep.subr.mxu0 %v4232
    %4273 = vmatpush1.msra.mxu0 %v4231
    %4274 = vmatprep.subr.mxu0 %v4229
    %4275 = vmatpush1.msra.mxu0 %v4228
    %4276 = vmatprep.subr.mxu0 0.0
    %4277 = vmatpush2.msra.mxu0 0.0
    %4278 = vmatprep.subr.mxu0 0.0
    %4279 = vmatpush2.msra.mxu0 0.0
    %4280 = vmatprep.subr.mxu0 0.0
    %4281 = vmatpush2.msra.mxu0 0.0
    %4282 = vmatprep.subr.mxu0 0.0
    %4283 = vmatpush2.msra.mxu0 0.0
    %4284 = vmatprep.subr.mxu0 0.0
    %4285 = vmatpush2.msra.mxu0 0.0
    %4286 = vmatprep.subr.mxu0 0.0
    %4287 = vmatpush2.msra.mxu0 0.0
    %4288 = vmatprep.subr.mxu0 0.0
    %4289 = vmatpush2.msra.mxu0 0.0
    %4290 = vmatprep.subr.mxu0 0.0
    %4291 = vmatpush2.msra.mxu0 0.0
    %4292 = vmatprep.subr.mxu0 0.0
    %4293 = vmatpush2.msra.mxu0 0.0
    %4294 = vmatprep.subr.mxu0 0.0
    %4295 = vmatpush2.msra.mxu0 0.0
    %4296 = vmatprep.subr.mxu0 0.0
    %4297 = vmatpush2.msra.mxu0 0.0
    %4298 = vmatprep.subr.mxu0 0.0
    %4299 = vmatpush2.msra.mxu0 0.0
    %4300 = vmatprep.subr.mxu0 0.0
    %4301 = vmatpush2.msra.mxu0 0.0
    %4302 = vmatprep.subr.mxu0 0.0
    %4303 = vmatpush2.msra.mxu0 0.0
    %4304 = vmatprep.subr.mxu0 0.0
    %4305 = vmatpush2.msra.mxu0 0.0
    %4306 = vmatprep.subr.mxu0 0.0
    %4307 = vmatpush2.msra.mxu0 0.0
    %4308 = vmatprep.mubr.f32.mxu0 0.0
    %4309 = vmatmul.mubr.f32.gmra.mxu0 %v4242
    %v4310 = vpop.f32.mrf.mxu0
    %v4311 = vadd.f32 %v554, %v4310
    %v4312 = vpop.f32.mrf.mxu0
    %v4313 = vadd.f32 %v558, %v4312
    %4314 = vdwg.mxu0
    %4315 = vmatprep.subr.mxu0 0.0
    %4316 = vmatpush1.msra.mxu0 0.0
    %4317 = vmatprep.subr.mxu0 0.0
    %4318 = vmatpush1.msra.mxu0 0.0
    %4319 = vmatprep.subr.mxu0 0.0
    %4320 = vmatpush1.msra.mxu0 0.0
    %4321 = vmatprep.subr.mxu0 0.0
    %4322 = vmatpush1.msra.mxu0 0.0
    %4323 = vmatprep.subr.mxu0 0.0
    %4324 = vmatpush1.msra.mxu0 0.0
    %4325 = vmatprep.subr.mxu0 0.0
    %4326 = vmatpush1.msra.mxu0 0.0
    %4327 = vmatprep.subr.mxu0 0.0
    %4328 = vmatpush1.msra.mxu0 0.0
    %4329 = vmatprep.subr.mxu0 0.0
    %4330 = vmatpush1.msra.mxu0 0.0
    %4331 = vmatprep.subr.mxu0 0.0
    %4332 = vmatpush1.msra.mxu0 0.0
    %4333 = vmatprep.subr.mxu0 0.0
    %4334 = vmatpush1.msra.mxu0 0.0
    %4335 = vmatprep.subr.mxu0 0.0
    %4336 = vmatpush1.msra.mxu0 0.0
    %4337 = vmatprep.subr.mxu0 0.0
    %4338 = vmatpush1.msra.mxu0 0.0
    %4339 = vmatprep.subr.mxu0 0.0
    %4340 = vmatpush1.msra.mxu0 %v4239
    %4341 = vmatprep.subr.mxu0 0.0
    %4342 = vmatpush1.msra.mxu0 %v4236
    %4343 = vmatprep.subr.mxu0 0.0
    %4344 = vmatpush1.msra.mxu0 %v4233
    %4345 = vmatprep.subr.mxu0 0.0
    %4346 = vmatpush1.msra.mxu0 %v4230
    %4347 = vmatprep.subr.mxu0 0.0
    %4348 = vmatpush2.msra.mxu0 0.0
    %4349 = vmatprep.subr.mxu0 0.0
    %4350 = vmatpush2.msra.mxu0 0.0
    %4351 = vmatprep.subr.mxu0 0.0
    %4352 = vmatpush2.msra.mxu0 0.0
    %4353 = vmatprep.subr.mxu0 0.0
    %4354 = vmatpush2.msra.mxu0 0.0
    %4355 = vmatprep.subr.mxu0 0.0
    %4356 = vmatpush2.msra.mxu0 0.0
    %4357 = vmatprep.subr.mxu0 0.0
    %4358 = vmatpush2.msra.mxu0 0.0
    %4359 = vmatprep.subr.mxu0 0.0
    %4360 = vmatpush2.msra.mxu0 0.0
    %4361 = vmatprep.subr.mxu0 0.0
    %4362 = vmatpush2.msra.mxu0 0.0
    %4363 = vmatprep.subr.mxu0 0.0
    %4364 = vmatpush2.msra.mxu0 0.0
    %4365 = vmatprep.subr.mxu0 0.0
    %4366 = vmatpush2.msra.mxu0 0.0
    %4367 = vmatprep.subr.mxu0 0.0
    %4368 = vmatpush2.msra.mxu0 0.0
    %4369 = vmatprep.subr.mxu0 0.0
    %4370 = vmatpush2.msra.mxu0 0.0
    %4371 = vmatprep.subr.mxu0 0.0
    %4372 = vmatpush2.msra.mxu0 0.0
    %4373 = vmatprep.subr.mxu0 0.0
    %4374 = vmatpush2.msra.mxu0 0.0
    %4375 = vmatprep.subr.mxu0 0.0
    %4376 = vmatpush2.msra.mxu0 0.0
    %4377 = vmatprep.subr.mxu0 0.0
    %4378 = vmatpush2.msra.mxu0 0.0
    %4379 = vmatprep.mubr.f32.mxu0 0.0
    %4380 = vmatmul.mubr.f32.gmra.mxu0 %v4242
    %v4381 = vpop.f32.mrf.mxu0
    %v4382 = vadd.f32 %v562, %v4381
    %v4383 = vpop.f32.mrf.mxu0
    %4384 = vdwg.mxu0
    %v4385 = vadd.f32 %v4311, %v4060
    %v4386 = vxor.u32 %v4385, 2147483648
    %v4387 = vmul.f32 %v4386, 1.442695
    %v4388 = vpow.pop %v4387
    %v4389 = vadd.f32 %v4388, 1.0
    %v4390 = vrcp.pop %v4389
    %v4391 = vmul.f32 1.0, %v4390
    %v4392 = vadd.f32 %v4313, %v4129
    %v4393 = vxor.u32 %v4392, 2147483648
    %v4394 = vmul.f32 %v4393, 1.442695
    %v4395 = vpow.pop %v4394
    %v4396 = vadd.f32 %v4395, 1.0
    %v4397 = vrcp.pop %v4396
    %v4398 = vmul.f32 1.0, %v4397
    %v4399 = vmul.f32 %v4391, %v4131
    %v4400 = vadd.f32 %v4382, %v4399
    %v4401 = vtanh.pop %v4400
    %v4402 = vsub.f32 1.0, %v4398
    %v4403 = vmul.f32 %v4402, %v4401
    %v4404 = vmul.f32 %v4398, %v3880
    %v4405 = vadd.f32 %v4403, %v4404
    %v4406 = vld [vmem:[#allocation5 + $0x50] sm:$0xff]
    %v4407 = vld [vmem:[#allocation5 + $0xa8] sm:$0xff]
    %v4408 = vld [vmem:[#allocation5 + $0x100] sm:$0xff]
    %v4409 = vld [vmem:[#allocation5 + $0x158] sm:$0xff]
    %v4411 = vsel %vm95, %v4405, 0
    %4413 = vmatprep.subr.mxu0 0.0
    %4414 = vmatpush1.msra.mxu0 0.0
    %4415 = vmatprep.subr.mxu0 0.0
    %4416 = vmatpush1.msra.mxu0 0.0
    %4417 = vmatprep.subr.mxu0 0.0
    %4418 = vmatpush1.msra.mxu0 0.0
    %4419 = vmatprep.subr.mxu0 0.0
    %4420 = vmatpush1.msra.mxu0 0.0
    %4421 = vmatprep.subr.mxu0 0.0
    %4422 = vmatpush1.msra.mxu0 0.0
    %4423 = vmatprep.subr.mxu0 0.0
    %4424 = vmatpush1.msra.mxu0 0.0
    %4425 = vmatprep.subr.mxu0 0.0
    %4426 = vmatpush1.msra.mxu0 0.0
    %4427 = vmatprep.subr.mxu0 0.0
    %4428 = vmatpush1.msra.mxu0 0.0
    %4429 = vmatprep.subr.mxu0 0.0
    %4430 = vmatpush1.msra.mxu0 0.0
    %4431 = vmatprep.subr.mxu0 0.0
    %4432 = vmatpush1.msra.mxu0 0.0
    %4433 = vmatprep.subr.mxu0 0.0
    %4434 = vmatpush1.msra.mxu0 0.0
    %4435 = vmatprep.subr.mxu0 0.0
    %4436 = vmatpush1.msra.mxu0 0.0
    %4437 = vmatprep.subr.mxu0 0.0
    %4438 = vmatpush1.msra.mxu0 %v4409
    %4439 = vmatprep.subr.mxu0 0.0
    %4440 = vmatpush1.msra.mxu0 %v4408
    %4441 = vmatprep.subr.mxu0 0.0
    %4442 = vmatpush1.msra.mxu0 %v4407
    %4443 = vmatprep.subr.mxu0 0.0
    %4444 = vmatpush1.msra.mxu0 %v4406
    %4445 = vmatprep.subr.mxu0 0.0
    %4446 = vmatpush2.msra.mxu0 0.0
    %4447 = vmatprep.subr.mxu0 0.0
    %4448 = vmatpush2.msra.mxu0 0.0
    %4449 = vmatprep.subr.mxu0 0.0
    %4450 = vmatpush2.msra.mxu0 0.0
    %4451 = vmatprep.subr.mxu0 0.0
    %4452 = vmatpush2.msra.mxu0 0.0
    %4453 = vmatprep.subr.mxu0 0.0
    %4454 = vmatpush2.msra.mxu0 0.0
    %4455 = vmatprep.subr.mxu0 0.0
    %4456 = vmatpush2.msra.mxu0 0.0
    %4457 = vmatprep.subr.mxu0 0.0
    %4458 = vmatpush2.msra.mxu0 0.0
    %4459 = vmatprep.subr.mxu0 0.0
    %4460 = vmatpush2.msra.mxu0 0.0
    %4461 = vmatprep.subr.mxu0 0.0
    %4462 = vmatpush2.msra.mxu0 0.0
    %4463 = vmatprep.subr.mxu0 0.0
    %4464 = vmatpush2.msra.mxu0 0.0
    %4465 = vmatprep.subr.mxu0 0.0
    %4466 = vmatpush2.msra.mxu0 0.0
    %4467 = vmatprep.subr.mxu0 0.0
    %4468 = vmatpush2.msra.mxu0 0.0
    %4469 = vmatprep.subr.mxu0 0.0
    %4470 = vmatpush2.msra.mxu0 0.0
    %4471 = vmatprep.subr.mxu0 0.0
    %4472 = vmatpush2.msra.mxu0 0.0
    %4473 = vmatprep.subr.mxu0 0.0
    %4474 = vmatpush2.msra.mxu0 0.0
    %4475 = vmatprep.subr.mxu0 0.0
    %4476 = vmatpush2.msra.mxu0 0.0
    %4477 = vmatprep.mubr.f32.mxu0 0.0
    %4478 = vmatmul.mubr.f32.gmra.mxu0 %v4411
    %v4479 = vpop.f32.mrf.mxu0
    %v4480 = vadd.f32 %v261, %v4479
    %v4481 = vpop.f32.mrf.mxu0
    %4482 = vdwg.mxu0
    %v4483 = vsel %vm808, %v4480, -inf
    %4484 = vmax.xlane.f32.xlu0 %v4483
    %v4485 = vpop.xlane.xlu0 %4484
    %v4486 = vsub.f32 %v4480, %v4485
    %v4487 = vmul.f32 %v4486, 1.442695
    %v4488 = vpow.pop %v4487
    %v4489 = vsel %vm808, %v4488, 0.0
    %4490 = vadd.xlane.f32.xlu0 %v4489
    %v4491 = vpop.xlane.xlu0 %4490
    %v4492 = vlog2.pop %v4491
    %v4493 = vmul.f32 %v4492, 0.6931472
    %v4494 = vadd.f32 %v4493, %v4485
    %v4495 = vsub.f32 %v4480, %v4494
    %4496 = vst.msk [vmem:[%s6 + $0x7] sm:$0x1] %vm808, %v4495
    %4497 = vst.msk [vmem:[%s6 + $0xf] sm:$0x1] %vm44, %v4405
    %4499 = vst.msk [vmem:[%s6 + $0x17] sm:$0x1] %vm446, %v4150
    // Predicated region
    $region26: #{attn_decoder_decode.1} parent=1 // pred_check
      _
    $region27: #{attn_decoder_decode.1} parent=1 // pred_check_branch
      %4501 = sbr.rel (0) target = $region29
    $region28: #{attn_decoder_decode.1} parent=1 // pred_region
      _
    $region29: #{attn_decoder_decode.1} parent=1 // pred_fallthru
      _
    // Predicated region
    $region30: #{attn_decoder_decode.1} parent=1 // pred_check
      _
    $region31: #{attn_decoder_decode.1} parent=1 // pred_check_branch
      %4503 = sbr.rel (0) target = $region33
    $region32: #{attn_decoder_decode.1} parent=1 // pred_region
      _
    $region33: #{attn_decoder_decode.1} parent=1 // pred_fallthru
      _
    %4504 = vsyncpa [#allocation6], 1

</llo_original>
